<compile_context>
chip_gen: v7x
topology: tpu7x:2x2x1
jax: 0.10.0
libtpu: 0.0.40
codegen_flags: <defaults>
</compile_context>

<pallas_src>
import jax
import jax.numpy as jnp
from jax import lax
from jax.experimental import pallas as pl
from jax.experimental.pallas import tpu as pltpu

# ----------------- small synthetic config -----------------
B = 2    # batch size
N = 16   # graph nodes per example (padded)
E = 32   # emb_size
H = 32   # decoder_hidden_size
L = 2    # num_layers
T = 8    # decoded steps (tgt has T+1 tokens; decoder consumes tgt[:, :-1])
V = 64   # vocab_size


# ----------------- the fused forward kernel -----------------
def fused_forward_kernel(ids_ref, title_ref, adj_ref, mask_ref,
                         emb_ref, w_enc_ref, b_enc_ref, w_wh_ref, b_wh_ref,
                         wih0_ref, wihL_ref, whh_ref, bih_ref, bhh_ref,
                         wout_ref, bout_ref, out_ref):
    f32 = jnp.float32
    n_ids = B * N + T * B

    # ---- merged embedding lookup: ONE one-hot + ONE (n_ids,V)@(V,E) matmul ----
    ids_oh = (ids_ref[...] ==
              lax.broadcasted_iota(jnp.int32, (n_ids, V), 1)).astype(f32)
    all_emb = jnp.dot(ids_oh, emb_ref[...], preferred_element_type=f32)    # (n_ids, E)
    x_nodes = all_emb[:B * N, :]                                           # (B*N, E) src nodes
    x_tgt = all_emb[B * N:, :]                                             # (T*B, E) time-major

    # ---- graph-encoder surrogate: title-node row via batched masked reductions ----
    h_nodes = (jnp.dot(x_nodes, w_enc_ref[...], preferred_element_type=f32)
               + b_enc_ref[...]).reshape(B, N, H)                          # (B, N, H)
    title_oh = (title_ref[...] ==
                lax.broadcasted_iota(jnp.int32, (B, N), 1)).astype(f32)    # (B, N)
    mask_title = jnp.sum(title_oh * mask_ref[...], axis=1, keepdims=True)  # (B, 1)
    adj_row = jnp.sum(title_oh[:, :, None] * adj_ref[...], axis=1)         # (B, N) = adj[b, t_b, :]
    state = jnp.tanh(jnp.sum(adj_row[:, :, None] * h_nodes, axis=1)) * mask_title  # (B, H)

    # ---- build_init_state: one fused (B,H)@(H,L*H) matmul, lane-sliced per layer ----
    h0_all = jnp.tanh(jnp.dot(state, w_wh_ref[...], preferred_element_type=f32)
                      + b_wh_ref[...])                                     # (B, L*H)
    hs = [h0_all[:, l * H:(l + 1) * H] for l in range(L)]

    # ---- hoist layer-0 input->hidden over all timesteps (bias folded in once) ----
    gi0 = jnp.dot(x_tgt, wih0_ref[...], preferred_element_type=f32) + bih_ref[0]  # (T*B, 3H)

    # ---- hoist loop-invariant weights / pre-broadcast biases ----
    bhh_b = [jnp.broadcast_to(bhh_ref[l], (B, 3 * H)) for l in range(L)]
    bih_b = [jnp.broadcast_to(bih_ref[l], (B, 3 * H)) for l in range(1, L)]
    whh = [whh_ref[l] for l in range(L)]
    wihL = [wihL_ref[l] for l in range(L - 1)]

    # ---- GRU recurrence (serial in t; static unroll is fine at T=8) ----
    # TODO(synk): switch to lax.fori_loop with VMEM scratch carries if T grows past ~16.
    h_top = []
    for t in range(T):
        layer_in = None
        for l in range(L):
            h_prev = hs[l]
            if l == 0:
                gi = gi0[t * B:(t + 1) * B, :]                             # (B, 3H)
            else:
                gi = (jnp.dot(layer_in, wihL[l - 1], preferred_element_type=f32)
                      + bih_b[l - 1])                                      # (B, 3H)
            gh = jnp.dot(h_prev, whh[l], preferred_element_type=f32) + bhh_b[l]  # (B, 3H)
            r = jax.nn.sigmoid(gi[:, 0:H] + gh[:, 0:H])
            z = jax.nn.sigmoid(gi[:, H:2 * H] + gh[:, H:2 * H])
            n = jnp.tanh(gi[:, 2 * H:3 * H] + r * gh[:, 2 * H:3 * H])
            h_new = (1.0 - z) * n + z * h_prev
            hs[l] = h_new
            layer_in = h_new
        h_top.append(layer_in)

    # ---- deferred vocab projection + softmax: one matmul, one softmax, one store ----
    h_all = jnp.concatenate(h_top, axis=0)                                 # (T*B, H)
    logits = (jnp.dot(h_all, wout_ref[...], preferred_element_type=f32)
              + bout_ref[...])                                             # (T*B, V)
    m = jnp.max(logits, axis=-1, keepdims=True)
    p = jnp.exp(logits - m)
    probs = p / jnp.sum(p, axis=-1, keepdims=True)                         # exact normalization
    out_ref[...] = probs                                                   # single slab store


# ----------------- wrapper: one gridless pallas_call, tiny integer prep only -----------------
def forward(params, src, adj, src_mask, title_index, tgt):
    # The only XLA "glue": concatenating/reshaping a few dozen int32 ids and the final
    # (T*B, V) -> (B, T, V) relayout of the output slab.
    src_ids = src.astype(jnp.int32).reshape(B * N)
    tgt_ids = jnp.transpose(tgt[:, :-1].astype(jnp.int32), (1, 0)).reshape(T * B)
    all_ids = jnp.concatenate([src_ids, tgt_ids], axis=0).reshape(B * N + T * B, 1)
    title_ids = title_index.astype(jnp.int32).reshape(B, 1)

    vmem = pl.BlockSpec(memory_space=pltpu.MemorySpace.VMEM)
    out_flat = pl.pallas_call(
        fused_forward_kernel,
        out_shape=jax.ShapeDtypeStruct((T * B, V), jnp.float32),
        in_specs=[vmem] * 16,
        out_specs=vmem,
    )(all_ids, title_ids, adj.astype(jnp.float32), src_mask.astype(jnp.float32),
      params["embedding"], params["w_enc"], params["b_enc"],
      params["w_wh"], params["b_wh"],
      params["wih0"], params["wihL"], params["whh"],
      params["bih"], params["bhh"],
      params["wout"], params["bout"])

    return jnp.transpose(out_flat.reshape(T, B, V), (1, 0, 2))             # (B, T, V)


# ----------------- pure-JAX reference for correctness checking -----------------
def forward_ref(params, src, adj, src_mask, title_index, tgt):
    emb = params["embedding"]
    x_nodes = emb[src]                                                     # (B, N, E)
    h_nodes = x_nodes @ params["w_enc"] + params["b_enc"]                  # (B, N, H)
    ctx = jnp.tanh(jnp.einsum("bnm,bmh->bnh", adj, h_nodes)) * src_mask[..., None]
    state = ctx[jnp.arange(B), title_index]                                # (B, H)

    h0_all = jnp.tanh(state @ params["w_wh"] + params["b_wh"])             # (B, L*H)
    hs = [h0_all[:, l * H:(l + 1) * H] for l in range(L)]

    x_t = emb[tgt[:, :-1]]                                                 # (B, T, E)
    outs = []
    for t in range(T):
        layer_in = x_t[:, t, :]
        for l in range(L):
            h_prev = hs[l]
            if l == 0:
                gi = layer_in @ params["wih0"] + params["bih"][0]
            else:
                gi = layer_in @ params["wihL"][l - 1] + params["bih"][l]
            gh = h_prev @ params["whh"][l] + params["bhh"][l]
            r = jax.nn.sigmoid(gi[:, 0:H] + gh[:, 0:H])
            z = jax.nn.sigmoid(gi[:, H:2 * H] + gh[:, H:2 * H])
            n = jnp.tanh(gi[:, 2 * H:3 * H] + r * gh[:, 2 * H:3 * H])
            h_new = (1.0 - z) * n + z * h_prev
            hs[l] = h_new
            layer_in = h_new
        logits = layer_in @ params["wout"] + params["bout"]
        outs.append(jax.nn.softmax(logits, axis=-1))
    return jnp.stack(outs, axis=1)                                         # (B, T, V)


if __name__ == "__main__":
    key = jax.random.PRNGKey(0)
    ks = jax.random.split(key, 20)

    # deterministic synthetic parameters (shapes from module __init__; GRU gates fused
    # along the last dim in PyTorch order (r, z, n), weights stored transposed)
    params = {
        "embedding": 0.1 * jax.random.normal(ks[0], (V, E), jnp.float32),
        "w_enc": 0.1 * jax.random.normal(ks[1], (E, H), jnp.float32),
        "b_enc": 0.1 * jax.random.normal(ks[2], (1, H), jnp.float32),
        "w_wh": 0.1 * jax.random.normal(ks[3], (H, L * H), jnp.float32),       # state_wh (fused)
        "b_wh": 0.1 * jax.random.normal(ks[4], (1, L * H), jnp.float32),
        "wih0": 0.1 * jax.random.normal(ks[5], (E, 3 * H), jnp.float32),       # layer-0 W_ih^T (r|z|n)
        "wihL": 0.1 * jax.random.normal(ks[6], (L - 1, H, 3 * H), jnp.float32),  # layers>0 W_ih^T
        "whh": 0.1 * jax.random.normal(ks[7], (L, H, 3 * H), jnp.float32),     # W_hh^T per layer
        "bih": 0.1 * jax.random.normal(ks[8], (L, 1, 3 * H), jnp.float32),
        "bhh": 0.1 * jax.random.normal(ks[9], (L, 1, 3 * H), jnp.float32),
        "wout": 0.1 * jax.random.normal(ks[10], (H, V), jnp.float32),          # vocab projection
        "bout": 0.1 * jax.random.normal(ks[11], (1, V), jnp.float32),
    }

    # deterministic synthetic batch
    src = jax.random.randint(ks[12], (B, N), 0, V)                         # node token ids
    adj = (jax.random.uniform(ks[13], (B, N, N)) < 0.3).astype(jnp.float32)
    adj = adj + jnp.eye(N, dtype=jnp.float32)[None]                        # self loops
    lengths = jnp.array([N, N // 2], dtype=jnp.int32)
    src_mask = (jnp.arange(N)[None, :] < lengths[:, None]).astype(jnp.float32)
    title_index = jax.random.randint(ks[14], (B,), 0, N)
    tgt = jax.random.randint(ks[15], (B, T + 1), 0, V)

    outputs = jax.jit(forward)(params, src, adj, src_mask, title_index, tgt)
    outputs = jax.block_until_ready(outputs)

    assert outputs.shape == (B, T, V)
    assert bool(jnp.all(jnp.isfinite(outputs)))
    # exact softmax normalization: rows sum to 1 to fp32 accuracy
    assert bool(jnp.allclose(jnp.sum(outputs, axis=-1), 1.0, atol=1e-5))
    # match the pure-JAX reference of the same forward
    ref = forward_ref(params, src, adj, src_mask, title_index, tgt)
    assert bool(jnp.allclose(outputs, ref, atol=1e-4))

    print("KERNEL_OK")
</pallas_src>

<mosaic_0001>
module attributes {stable_mosaic.version = 11 : i64} {
  func.func @fused_forward_kernel(%arg0: memref<48x1xi32, #tpu.memory_space<vmem>>, %arg1: memref<2x1xi32, #tpu.memory_space<vmem>>, %arg2: memref<2x16x16xf32, #tpu.memory_space<vmem>>, %arg3: memref<2x16xf32, #tpu.memory_space<vmem>>, %arg4: memref<64x32xf32, #tpu.memory_space<vmem>>, %arg5: memref<32x32xf32, #tpu.memory_space<vmem>>, %arg6: memref<1x32xf32, #tpu.memory_space<vmem>>, %arg7: memref<32x64xf32, #tpu.memory_space<vmem>>, %arg8: memref<1x64xf32, #tpu.memory_space<vmem>>, %arg9: memref<32x96xf32, #tpu.memory_space<vmem>>, %arg10: memref<1x32x96xf32, #tpu.memory_space<vmem>>, %arg11: memref<2x32x96xf32, #tpu.memory_space<vmem>>, %arg12: memref<2x1x96xf32, #tpu.memory_space<vmem>>, %arg13: memref<2x1x96xf32, #tpu.memory_space<vmem>>, %arg14: memref<32x64xf32, #tpu.memory_space<vmem>>, %arg15: memref<1x64xf32, #tpu.memory_space<vmem>>, %arg16: memref<16x64xf32, #tpu.memory_space<vmem>>) attributes {dimension_semantics = [], scalar_prefetch = 0 : i64, scratch_operands = 0 : i64, tpu.core_type = #tpu.core_type<tc>} {
    %c0 = arith.constant 0 : index
    %c0_0 = arith.constant 0 : index
    %0 = vector.load %arg0[%c0, %c0_0] : memref<48x1xi32, #tpu.memory_space<vmem>>, vector<48x1xi32>
    %1 = tpu.iota {dimensions = array<i32: 1>} : vector<48x64xi32>
    %2 = vector.broadcast %0 : vector<48x1xi32> to vector<48x64xi32>
    %3 = arith.cmpi eq, %2, %1 : vector<48x64xi32>
    %4 = arith.extui %3 : vector<48x64xi1> to vector<48x64xi32>
    %5 = arith.sitofp %4 : vector<48x64xi32> to vector<48x64xf32>
    %c0_1 = arith.constant 0 : index
    %c0_2 = arith.constant 0 : index
    %6 = vector.load %arg4[%c0_1, %c0_2] : memref<64x32xf32, #tpu.memory_space<vmem>>, vector<64x32xf32>
    %cst = arith.constant dense<0.000000e+00> : vector<48x32xf32>
    %7 = tpu.matmul %5, %6, %cst {dimension_numbers = #tpu.dot_dimension_numbers<[1], [0], [0], [1], [0, 0, 1, 1], [], []>} : vector<48x64xf32>, vector<64x32xf32>, vector<48x32xf32> -> vector<48x32xf32>
    %8 = vector.extract_strided_slice %7 {offsets = [0, 0], sizes = [32, 32], strides = [1, 1]} : vector<48x32xf32> to vector<32x32xf32>
    %9 = vector.extract_strided_slice %7 {offsets = [32, 0], sizes = [16, 32], strides = [1, 1]} : vector<48x32xf32> to vector<16x32xf32>
    %c0_3 = arith.constant 0 : index
    %c0_4 = arith.constant 0 : index
    %10 = vector.load %arg5[%c0_3, %c0_4] : memref<32x32xf32, #tpu.memory_space<vmem>>, vector<32x32xf32>
    %cst_5 = arith.constant dense<0.000000e+00> : vector<32x32xf32>
    %11 = tpu.matmul %8, %10, %cst_5 {dimension_numbers = #tpu.dot_dimension_numbers<[1], [0], [0], [1], [0, 0, 1, 1], [], []>} : vector<32x32xf32>, vector<32x32xf32>, vector<32x32xf32> -> vector<32x32xf32>
    %c0_6 = arith.constant 0 : index
    %c0_7 = arith.constant 0 : index
    %12 = vector.load %arg6[%c0_6, %c0_7] : memref<1x32xf32, #tpu.memory_space<vmem>>, vector<1x32xf32>
    %13 = vector.broadcast %12 : vector<1x32xf32> to vector<32x32xf32>
    %14 = arith.addf %11, %13 : vector<32x32xf32>
    %15 = vector.shape_cast %14 : vector<32x32xf32> to vector<2x16x32xf32>
    %c0_8 = arith.constant 0 : index
    %c0_9 = arith.constant 0 : index
    %16 = vector.load %arg1[%c0_8, %c0_9] : memref<2x1xi32, #tpu.memory_space<vmem>>, vector<2x1xi32>
    %17 = tpu.iota {dimensions = array<i32: 1>} : vector<2x16xi32>
    %18 = vector.broadcast %16 : vector<2x1xi32> to vector<2x16xi32>
    %19 = arith.cmpi eq, %18, %17 : vector<2x16xi32>
    %20 = arith.extui %19 : vector<2x16xi1> to vector<2x16xi32>
    %21 = arith.sitofp %20 : vector<2x16xi32> to vector<2x16xf32>
    %c0_10 = arith.constant 0 : index
    %c0_11 = arith.constant 0 : index
    %22 = vector.load %arg3[%c0_10, %c0_11] : memref<2x16xf32, #tpu.memory_space<vmem>>, vector<2x16xf32>
    %23 = arith.mulf %21, %22 : vector<2x16xf32>
    %cst_12 = arith.constant dense<0.000000e+00> : vector<2xf32>
    %24 = vector.multi_reduction <add>, %23, %cst_12 [1] : vector<2x16xf32> to vector<2xf32>
    %25 = vector.shape_cast %24 : vector<2xf32> to vector<2x1xf32>
    %26 = vector.shape_cast %21 : vector<2x16xf32> to vector<2x16x1xf32>
    %c0_13 = arith.constant 0 : index
    %c0_14 = arith.constant 0 : index
    %c0_15 = arith.constant 0 : index
    %27 = vector.load %arg2[%c0_13, %c0_14, %c0_15] : memref<2x16x16xf32, #tpu.memory_space<vmem>>, vector<2x16x16xf32>
    %28 = vector.broadcast %26 : vector<2x16x1xf32> to vector<2x16x16xf32>
    %29 = arith.mulf %28, %27 : vector<2x16x16xf32>
    %cst_16 = arith.constant dense<0.000000e+00> : vector<2x16xf32>
    %30 = vector.multi_reduction <add>, %29, %cst_16 [1] : vector<2x16x16xf32> to vector<2x16xf32>
    %31 = vector.shape_cast %30 : vector<2x16xf32> to vector<2x16x1xf32>
    %32 = vector.broadcast %31 : vector<2x16x1xf32> to vector<2x16x32xf32>
    %33 = arith.mulf %32, %15 : vector<2x16x32xf32>
    %cst_17 = arith.constant dense<0.000000e+00> : vector<2x32xf32>
    %34 = vector.multi_reduction <add>, %33, %cst_17 [1] : vector<2x16x32xf32> to vector<2x32xf32>
    %35 = math.tanh %34 : vector<2x32xf32>
    %36 = vector.broadcast %25 : vector<2x1xf32> to vector<2x32xf32>
    %37 = arith.mulf %35, %36 : vector<2x32xf32>
    %c0_18 = arith.constant 0 : index
    %c0_19 = arith.constant 0 : index
    %38 = vector.load %arg7[%c0_18, %c0_19] : memref<32x64xf32, #tpu.memory_space<vmem>>, vector<32x64xf32>
    %cst_20 = arith.constant dense<0.000000e+00> : vector<2x64xf32>
    %39 = tpu.matmul %37, %38, %cst_20 {dimension_numbers = #tpu.dot_dimension_numbers<[1], [0], [0], [1], [0, 0, 1, 1], [], []>} : vector<2x32xf32>, vector<32x64xf32>, vector<2x64xf32> -> vector<2x64xf32>
    %c0_21 = arith.constant 0 : index
    %c0_22 = arith.constant 0 : index
    %40 = vector.load %arg8[%c0_21, %c0_22] : memref<1x64xf32, #tpu.memory_space<vmem>>, vector<1x64xf32>
    %41 = vector.broadcast %40 : vector<1x64xf32> to vector<2x64xf32>
    %42 = arith.addf %39, %41 : vector<2x64xf32>
    %43 = math.tanh %42 : vector<2x64xf32>
    %44 = vector.extract_strided_slice %43 {offsets = [0, 0], sizes = [2, 32], strides = [1, 1]} : vector<2x64xf32> to vector<2x32xf32>
    %45 = vector.extract_strided_slice %43 {offsets = [0, 32], sizes = [2, 32], strides = [1, 1]} : vector<2x64xf32> to vector<2x32xf32>
    %c0_23 = arith.constant 0 : index
    %c0_24 = arith.constant 0 : index
    %46 = vector.load %arg9[%c0_23, %c0_24] : memref<32x96xf32, #tpu.memory_space<vmem>>, vector<32x96xf32>
    %cst_25 = arith.constant dense<0.000000e+00> : vector<16x96xf32>
    %47 = tpu.matmul %9, %46, %cst_25 {dimension_numbers = #tpu.dot_dimension_numbers<[1], [0], [0], [1], [0, 0, 1, 1], [], []>} : vector<16x32xf32>, vector<32x96xf32>, vector<16x96xf32> -> vector<16x96xf32>
    %c0_26 = arith.constant 0 : index
    %c0_27 = arith.constant 0 : index
    %c0_28 = arith.constant 0 : index
    %48 = vector.load %arg12[%c0_26, %c0_27, %c0_28] : memref<2x1x96xf32, #tpu.memory_space<vmem>>, vector<1x1x96xf32>
    %49 = vector.shape_cast %48 : vector<1x1x96xf32> to vector<1x96xf32>
    %50 = vector.broadcast %49 : vector<1x96xf32> to vector<16x96xf32>
    %51 = arith.addf %47, %50 : vector<16x96xf32>
    %c0_29 = arith.constant 0 : index
    %c0_30 = arith.constant 0 : index
    %c0_31 = arith.constant 0 : index
    %52 = vector.load %arg13[%c0_29, %c0_30, %c0_31] : memref<2x1x96xf32, #tpu.memory_space<vmem>>, vector<1x1x96xf32>
    %53 = vector.shape_cast %52 : vector<1x1x96xf32> to vector<1x96xf32>
    %54 = vector.shape_cast %53 : vector<1x96xf32> to vector<1x96xf32>
    %55 = vector.broadcast %54 : vector<1x96xf32> to vector<2x96xf32>
    %c1 = arith.constant 1 : index
    %c0_32 = arith.constant 0 : index
    %c0_33 = arith.constant 0 : index
    %56 = vector.load %arg13[%c1, %c0_32, %c0_33] : memref<2x1x96xf32, #tpu.memory_space<vmem>>, vector<1x1x96xf32>
    %57 = vector.shape_cast %56 : vector<1x1x96xf32> to vector<1x96xf32>
    %58 = vector.shape_cast %57 : vector<1x96xf32> to vector<1x96xf32>
    %59 = vector.broadcast %58 : vector<1x96xf32> to vector<2x96xf32>
    %c1_34 = arith.constant 1 : index
    %c0_35 = arith.constant 0 : index
    %c0_36 = arith.constant 0 : index
    %60 = vector.load %arg12[%c1_34, %c0_35, %c0_36] : memref<2x1x96xf32, #tpu.memory_space<vmem>>, vector<1x1x96xf32>
    %61 = vector.shape_cast %60 : vector<1x1x96xf32> to vector<1x96xf32>
    %62 = vector.shape_cast %61 : vector<1x96xf32> to vector<1x96xf32>
    %63 = vector.broadcast %62 : vector<1x96xf32> to vector<2x96xf32>
    %c0_37 = arith.constant 0 : index
    %c0_38 = arith.constant 0 : index
    %c0_39 = arith.constant 0 : index
    %64 = vector.load %arg11[%c0_37, %c0_38, %c0_39] : memref<2x32x96xf32, #tpu.memory_space<vmem>>, vector<1x32x96xf32>
    %65 = vector.shape_cast %64 : vector<1x32x96xf32> to vector<32x96xf32>
    %c1_40 = arith.constant 1 : index
    %c0_41 = arith.constant 0 : index
    %c0_42 = arith.constant 0 : index
    %66 = vector.load %arg11[%c1_40, %c0_41, %c0_42] : memref<2x32x96xf32, #tpu.memory_space<vmem>>, vector<1x32x96xf32>
    %67 = vector.shape_cast %66 : vector<1x32x96xf32> to vector<32x96xf32>
    %c0_43 = arith.constant 0 : index
    %c0_44 = arith.constant 0 : index
    %c0_45 = arith.constant 0 : index
    %68 = vector.load %arg10[%c0_43, %c0_44, %c0_45] : memref<1x32x96xf32, #tpu.memory_space<vmem>>, vector<1x32x96xf32>
    %69 = vector.shape_cast %68 : vector<1x32x96xf32> to vector<32x96xf32>
    %70 = vector.extract_strided_slice %51 {offsets = [0, 0], sizes = [2, 96], strides = [1, 1]} : vector<16x96xf32> to vector<2x96xf32>
    %cst_46 = arith.constant dense<0.000000e+00> : vector<2x96xf32>
    %71 = tpu.matmul %44, %65, %cst_46 {dimension_numbers = #tpu.dot_dimension_numbers<[1], [0], [0], [1], [0, 0, 1, 1], [], []>} : vector<2x32xf32>, vector<32x96xf32>, vector<2x96xf32> -> vector<2x96xf32>
    %72 = arith.addf %71, %55 : vector<2x96xf32>
    %73 = vector.extract_strided_slice %70 {offsets = [0, 0], sizes = [2, 32], strides = [1, 1]} : vector<2x96xf32> to vector<2x32xf32>
    %74 = vector.extract_strided_slice %72 {offsets = [0, 0], sizes = [2, 32], strides = [1, 1]} : vector<2x96xf32> to vector<2x32xf32>
    %75 = arith.addf %73, %74 : vector<2x32xf32>
    %76 = arith.negf %75 : vector<2x32xf32>
    %77 = math.exp %76 : vector<2x32xf32>
    %cst_47 = arith.constant 1.000000e+00 : f32
    %78 = vector.broadcast %cst_47 : f32 to vector<2x32xf32>
    %79 = arith.addf %78, %77 : vector<2x32xf32>
    %80 = arith.divf %78, %79 : vector<2x32xf32>
    %81 = vector.extract_strided_slice %70 {offsets = [0, 32], sizes = [2, 32], strides = [1, 1]} : vector<2x96xf32> to vector<2x32xf32>
    %82 = vector.extract_strided_slice %72 {offsets = [0, 32], sizes = [2, 32], strides = [1, 1]} : vector<2x96xf32> to vector<2x32xf32>
    %83 = arith.addf %81, %82 : vector<2x32xf32>
    %84 = arith.negf %83 : vector<2x32xf32>
    %85 = math.exp %84 : vector<2x32xf32>
    %cst_48 = arith.constant 1.000000e+00 : f32
    %86 = vector.broadcast %cst_48 : f32 to vector<2x32xf32>
    %87 = arith.addf %86, %85 : vector<2x32xf32>
    %88 = arith.divf %86, %87 : vector<2x32xf32>
    %89 = vector.extract_strided_slice %70 {offsets = [0, 64], sizes = [2, 32], strides = [1, 1]} : vector<2x96xf32> to vector<2x32xf32>
    %90 = vector.extract_strided_slice %72 {offsets = [0, 64], sizes = [2, 32], strides = [1, 1]} : vector<2x96xf32> to vector<2x32xf32>
    %91 = arith.mulf %80, %90 : vector<2x32xf32>
    %92 = arith.addf %89, %91 : vector<2x32xf32>
    %93 = math.tanh %92 : vector<2x32xf32>
    %cst_49 = arith.constant 1.000000e+00 : f32
    %94 = vector.broadcast %cst_49 : f32 to vector<2x32xf32>
    %95 = arith.subf %94, %88 : vector<2x32xf32>
    %96 = arith.mulf %95, %93 : vector<2x32xf32>
    %97 = arith.mulf %88, %44 : vector<2x32xf32>
    %98 = arith.addf %96, %97 : vector<2x32xf32>
    %cst_50 = arith.constant dense<0.000000e+00> : vector<2x96xf32>
    %99 = tpu.matmul %98, %69, %cst_50 {dimension_numbers = #tpu.dot_dimension_numbers<[1], [0], [0], [1], [0, 0, 1, 1], [], []>} : vector<2x32xf32>, vector<32x96xf32>, vector<2x96xf32> -> vector<2x96xf32>
    %100 = arith.addf %99, %63 : vector<2x96xf32>
    %cst_51 = arith.constant dense<0.000000e+00> : vector<2x96xf32>
    %101 = tpu.matmul %45, %67, %cst_51 {dimension_numbers = #tpu.dot_dimension_numbers<[1], [0], [0], [1], [0, 0, 1, 1], [], []>} : vector<2x32xf32>, vector<32x96xf32>, vector<2x96xf32> -> vector<2x96xf32>
    %102 = arith.addf %101, %59 : vector<2x96xf32>
    %103 = vector.extract_strided_slice %100 {offsets = [0, 0], sizes = [2, 32], strides = [1, 1]} : vector<2x96xf32> to vector<2x32xf32>
    %104 = vector.extract_strided_slice %102 {offsets = [0, 0], sizes = [2, 32], strides = [1, 1]} : vector<2x96xf32> to vector<2x32xf32>
    %105 = arith.addf %103, %104 : vector<2x32xf32>
    %106 = arith.negf %105 : vector<2x32xf32>
    %107 = math.exp %106 : vector<2x32xf32>
    %cst_52 = arith.constant 1.000000e+00 : f32
    %108 = vector.broadcast %cst_52 : f32 to vector<2x32xf32>
    %109 = arith.addf %108, %107 : vector<2x32xf32>
    %110 = arith.divf %108, %109 : vector<2x32xf32>
    %111 = vector.extract_strided_slice %100 {offsets = [0, 32], sizes = [2, 32], strides = [1, 1]} : vector<2x96xf32> to vector<2x32xf32>
    %112 = vector.extract_strided_slice %102 {offsets = [0, 32], sizes = [2, 32], strides = [1, 1]} : vector<2x96xf32> to vector<2x32xf32>
    %113 = arith.addf %111, %112 : vector<2x32xf32>
    %114 = arith.negf %113 : vector<2x32xf32>
    %115 = math.exp %114 : vector<2x32xf32>
    %cst_53 = arith.constant 1.000000e+00 : f32
    %116 = vector.broadcast %cst_53 : f32 to vector<2x32xf32>
    %117 = arith.addf %116, %115 : vector<2x32xf32>
    %118 = arith.divf %116, %117 : vector<2x32xf32>
    %119 = vector.extract_strided_slice %100 {offsets = [0, 64], sizes = [2, 32], strides = [1, 1]} : vector<2x96xf32> to vector<2x32xf32>
    %120 = vector.extract_strided_slice %102 {offsets = [0, 64], sizes = [2, 32], strides = [1, 1]} : vector<2x96xf32> to vector<2x32xf32>
    %121 = arith.mulf %110, %120 : vector<2x32xf32>
    %122 = arith.addf %119, %121 : vector<2x32xf32>
    %123 = math.tanh %122 : vector<2x32xf32>
    %cst_54 = arith.constant 1.000000e+00 : f32
    %124 = vector.broadcast %cst_54 : f32 to vector<2x32xf32>
    %125 = arith.subf %124, %118 : vector<2x32xf32>
    %126 = arith.mulf %125, %123 : vector<2x32xf32>
    %127 = arith.mulf %118, %45 : vector<2x32xf32>
    %128 = arith.addf %126, %127 : vector<2x32xf32>
    %129 = vector.extract_strided_slice %51 {offsets = [2, 0], sizes = [2, 96], strides = [1, 1]} : vector<16x96xf32> to vector<2x96xf32>
    %cst_55 = arith.constant dense<0.000000e+00> : vector<2x96xf32>
    %130 = tpu.matmul %98, %65, %cst_55 {dimension_numbers = #tpu.dot_dimension_numbers<[1], [0], [0], [1], [0, 0, 1, 1], [], []>} : vector<2x32xf32>, vector<32x96xf32>, vector<2x96xf32> -> vector<2x96xf32>
    %131 = arith.addf %130, %55 : vector<2x96xf32>
    %132 = vector.extract_strided_slice %129 {offsets = [0, 0], sizes = [2, 32], strides = [1, 1]} : vector<2x96xf32> to vector<2x32xf32>
    %133 = vector.extract_strided_slice %131 {offsets = [0, 0], sizes = [2, 32], strides = [1, 1]} : vector<2x96xf32> to vector<2x32xf32>
    %134 = arith.addf %132, %133 : vector<2x32xf32>
    %135 = arith.negf %134 : vector<2x32xf32>
    %136 = math.exp %135 : vector<2x32xf32>
    %cst_56 = arith.constant 1.000000e+00 : f32
    %137 = vector.broadcast %cst_56 : f32 to vector<2x32xf32>
    %138 = arith.addf %137, %136 : vector<2x32xf32>
    %139 = arith.divf %137, %138 : vector<2x32xf32>
    %140 = vector.extract_strided_slice %129 {offsets = [0, 32], sizes = [2, 32], strides = [1, 1]} : vector<2x96xf32> to vector<2x32xf32>
    %141 = vector.extract_strided_slice %131 {offsets = [0, 32], sizes = [2, 32], strides = [1, 1]} : vector<2x96xf32> to vector<2x32xf32>
    %142 = arith.addf %140, %141 : vector<2x32xf32>
    %143 = arith.negf %142 : vector<2x32xf32>
    %144 = math.exp %143 : vector<2x32xf32>
    %cst_57 = arith.constant 1.000000e+00 : f32
    %145 = vector.broadcast %cst_57 : f32 to vector<2x32xf32>
    %146 = arith.addf %145, %144 : vector<2x32xf32>
    %147 = arith.divf %145, %146 : vector<2x32xf32>
    %148 = vector.extract_strided_slice %129 {offsets = [0, 64], sizes = [2, 32], strides = [1, 1]} : vector<2x96xf32> to vector<2x32xf32>
    %149 = vector.extract_strided_slice %131 {offsets = [0, 64], sizes = [2, 32], strides = [1, 1]} : vector<2x96xf32> to vector<2x32xf32>
    %150 = arith.mulf %139, %149 : vector<2x32xf32>
    %151 = arith.addf %148, %150 : vector<2x32xf32>
    %152 = math.tanh %151 : vector<2x32xf32>
    %cst_58 = arith.constant 1.000000e+00 : f32
    %153 = vector.broadcast %cst_58 : f32 to vector<2x32xf32>
    %154 = arith.subf %153, %147 : vector<2x32xf32>
    %155 = arith.mulf %154, %152 : vector<2x32xf32>
    %156 = arith.mulf %147, %98 : vector<2x32xf32>
    %157 = arith.addf %155, %156 : vector<2x32xf32>
    %cst_59 = arith.constant dense<0.000000e+00> : vector<2x96xf32>
    %158 = tpu.matmul %157, %69, %cst_59 {dimension_numbers = #tpu.dot_dimension_numbers<[1], [0], [0], [1], [0, 0, 1, 1], [], []>} : vector<2x32xf32>, vector<32x96xf32>, vector<2x96xf32> -> vector<2x96xf32>
    %159 = arith.addf %158, %63 : vector<2x96xf32>
    %cst_60 = arith.constant dense<0.000000e+00> : vector<2x96xf32>
    %160 = tpu.matmul %128, %67, %cst_60 {dimension_numbers = #tpu.dot_dimension_numbers<[1], [0], [0], [1], [0, 0, 1, 1], [], []>} : vector<2x32xf32>, vector<32x96xf32>, vector<2x96xf32> -> vector<2x96xf32>
    %161 = arith.addf %160, %59 : vector<2x96xf32>
    %162 = vector.extract_strided_slice %159 {offsets = [0, 0], sizes = [2, 32], strides = [1, 1]} : vector<2x96xf32> to vector<2x32xf32>
    %163 = vector.extract_strided_slice %161 {offsets = [0, 0], sizes = [2, 32], strides = [1, 1]} : vector<2x96xf32> to vector<2x32xf32>
    %164 = arith.addf %162, %163 : vector<2x32xf32>
    %165 = arith.negf %164 : vector<2x32xf32>
    %166 = math.exp %165 : vector<2x32xf32>
    %cst_61 = arith.constant 1.000000e+00 : f32
    %167 = vector.broadcast %cst_61 : f32 to vector<2x32xf32>
    %168 = arith.addf %167, %166 : vector<2x32xf32>
    %169 = arith.divf %167, %168 : vector<2x32xf32>
    %170 = vector.extract_strided_slice %159 {offsets = [0, 32], sizes = [2, 32], strides = [1, 1]} : vector<2x96xf32> to vector<2x32xf32>
    %171 = vector.extract_strided_slice %161 {offsets = [0, 32], sizes = [2, 32], strides = [1, 1]} : vector<2x96xf32> to vector<2x32xf32>
    %172 = arith.addf %170, %171 : vector<2x32xf32>
    %173 = arith.negf %172 : vector<2x32xf32>
    %174 = math.exp %173 : vector<2x32xf32>
    %cst_62 = arith.constant 1.000000e+00 : f32
    %175 = vector.broadcast %cst_62 : f32 to vector<2x32xf32>
    %176 = arith.addf %175, %174 : vector<2x32xf32>
    %177 = arith.divf %175, %176 : vector<2x32xf32>
    %178 = vector.extract_strided_slice %159 {offsets = [0, 64], sizes = [2, 32], strides = [1, 1]} : vector<2x96xf32> to vector<2x32xf32>
    %179 = vector.extract_strided_slice %161 {offsets = [0, 64], sizes = [2, 32], strides = [1, 1]} : vector<2x96xf32> to vector<2x32xf32>
    %180 = arith.mulf %169, %179 : vector<2x32xf32>
    %181 = arith.addf %178, %180 : vector<2x32xf32>
    %182 = math.tanh %181 : vector<2x32xf32>
    %cst_63 = arith.constant 1.000000e+00 : f32
    %183 = vector.broadcast %cst_63 : f32 to vector<2x32xf32>
    %184 = arith.subf %183, %177 : vector<2x32xf32>
    %185 = arith.mulf %184, %182 : vector<2x32xf32>
    %186 = arith.mulf %177, %128 : vector<2x32xf32>
    %187 = arith.addf %185, %186 : vector<2x32xf32>
    %188 = vector.extract_strided_slice %51 {offsets = [4, 0], sizes = [2, 96], strides = [1, 1]} : vector<16x96xf32> to vector<2x96xf32>
    %cst_64 = arith.constant dense<0.000000e+00> : vector<2x96xf32>
    %189 = tpu.matmul %157, %65, %cst_64 {dimension_numbers = #tpu.dot_dimension_numbers<[1], [0], [0], [1], [0, 0, 1, 1], [], []>} : vector<2x32xf32>, vector<32x96xf32>, vector<2x96xf32> -> vector<2x96xf32>
    %190 = arith.addf %189, %55 : vector<2x96xf32>
    %191 = vector.extract_strided_slice %188 {offsets = [0, 0], sizes = [2, 32], strides = [1, 1]} : vector<2x96xf32> to vector<2x32xf32>
    %192 = vector.extract_strided_slice %190 {offsets = [0, 0], sizes = [2, 32], strides = [1, 1]} : vector<2x96xf32> to vector<2x32xf32>
    %193 = arith.addf %191, %192 : vector<2x32xf32>
    %194 = arith.negf %193 : vector<2x32xf32>
    %195 = math.exp %194 : vector<2x32xf32>
    %cst_65 = arith.constant 1.000000e+00 : f32
    %196 = vector.broadcast %cst_65 : f32 to vector<2x32xf32>
    %197 = arith.addf %196, %195 : vector<2x32xf32>
    %198 = arith.divf %196, %197 : vector<2x32xf32>
    %199 = vector.extract_strided_slice %188 {offsets = [0, 32], sizes = [2, 32], strides = [1, 1]} : vector<2x96xf32> to vector<2x32xf32>
    %200 = vector.extract_strided_slice %190 {offsets = [0, 32], sizes = [2, 32], strides = [1, 1]} : vector<2x96xf32> to vector<2x32xf32>
    %201 = arith.addf %199, %200 : vector<2x32xf32>
    %202 = arith.negf %201 : vector<2x32xf32>
    %203 = math.exp %202 : vector<2x32xf32>
    %cst_66 = arith.constant 1.000000e+00 : f32
    %204 = vector.broadcast %cst_66 : f32 to vector<2x32xf32>
    %205 = arith.addf %204, %203 : vector<2x32xf32>
    %206 = arith.divf %204, %205 : vector<2x32xf32>
    %207 = vector.extract_strided_slice %188 {offsets = [0, 64], sizes = [2, 32], strides = [1, 1]} : vector<2x96xf32> to vector<2x32xf32>
    %208 = vector.extract_strided_slice %190 {offsets = [0, 64], sizes = [2, 32], strides = [1, 1]} : vector<2x96xf32> to vector<2x32xf32>
    %209 = arith.mulf %198, %208 : vector<2x32xf32>
    %210 = arith.addf %207, %209 : vector<2x32xf32>
    %211 = math.tanh %210 : vector<2x32xf32>
    %cst_67 = arith.constant 1.000000e+00 : f32
    %212 = vector.broadcast %cst_67 : f32 to vector<2x32xf32>
    %213 = arith.subf %212, %206 : vector<2x32xf32>
    %214 = arith.mulf %213, %211 : vector<2x32xf32>
    %215 = arith.mulf %206, %157 : vector<2x32xf32>
    %216 = arith.addf %214, %215 : vector<2x32xf32>
    %cst_68 = arith.constant dense<0.000000e+00> : vector<2x96xf32>
    %217 = tpu.matmul %216, %69, %cst_68 {dimension_numbers = #tpu.dot_dimension_numbers<[1], [0], [0], [1], [0, 0, 1, 1], [], []>} : vector<2x32xf32>, vector<32x96xf32>, vector<2x96xf32> -> vector<2x96xf32>
    %218 = arith.addf %217, %63 : vector<2x96xf32>
    %cst_69 = arith.constant dense<0.000000e+00> : vector<2x96xf32>
    %219 = tpu.matmul %187, %67, %cst_69 {dimension_numbers = #tpu.dot_dimension_numbers<[1], [0], [0], [1], [0, 0, 1, 1], [], []>} : vector<2x32xf32>, vector<32x96xf32>, vector<2x96xf32> -> vector<2x96xf32>
    %220 = arith.addf %219, %59 : vector<2x96xf32>
    %221 = vector.extract_strided_slice %218 {offsets = [0, 0], sizes = [2, 32], strides = [1, 1]} : vector<2x96xf32> to vector<2x32xf32>
    %222 = vector.extract_strided_slice %220 {offsets = [0, 0], sizes = [2, 32], strides = [1, 1]} : vector<2x96xf32> to vector<2x32xf32>
    %223 = arith.addf %221, %222 : vector<2x32xf32>
    %224 = arith.negf %223 : vector<2x32xf32>
    %225 = math.exp %224 : vector<2x32xf32>
    %cst_70 = arith.constant 1.000000e+00 : f32
    %226 = vector.broadcast %cst_70 : f32 to vector<2x32xf32>
    %227 = arith.addf %226, %225 : vector<2x32xf32>
    %228 = arith.divf %226, %227 : vector<2x32xf32>
    %229 = vector.extract_strided_slice %218 {offsets = [0, 32], sizes = [2, 32], strides = [1, 1]} : vector<2x96xf32> to vector<2x32xf32>
    %230 = vector.extract_strided_slice %220 {offsets = [0, 32], sizes = [2, 32], strides = [1, 1]} : vector<2x96xf32> to vector<2x32xf32>
    %231 = arith.addf %229, %230 : vector<2x32xf32>
    %232 = arith.negf %231 : vector<2x32xf32>
    %233 = math.exp %232 : vector<2x32xf32>
    %cst_71 = arith.constant 1.000000e+00 : f32
    %234 = vector.broadcast %cst_71 : f32 to vector<2x32xf32>
    %235 = arith.addf %234, %233 : vector<2x32xf32>
    %236 = arith.divf %234, %235 : vector<2x32xf32>
    %237 = vector.extract_strided_slice %218 {offsets = [0, 64], sizes = [2, 32], strides = [1, 1]} : vector<2x96xf32> to vector<2x32xf32>
    %238 = vector.extract_strided_slice %220 {offsets = [0, 64], sizes = [2, 32], strides = [1, 1]} : vector<2x96xf32> to vector<2x32xf32>
    %239 = arith.mulf %228, %238 : vector<2x32xf32>
    %240 = arith.addf %237, %239 : vector<2x32xf32>
    %241 = math.tanh %240 : vector<2x32xf32>
    %cst_72 = arith.constant 1.000000e+00 : f32
    %242 = vector.broadcast %cst_72 : f32 to vector<2x32xf32>
    %243 = arith.subf %242, %236 : vector<2x32xf32>
    %244 = arith.mulf %243, %241 : vector<2x32xf32>
    %245 = arith.mulf %236, %187 : vector<2x32xf32>
    %246 = arith.addf %244, %245 : vector<2x32xf32>
    %247 = vector.extract_strided_slice %51 {offsets = [6, 0], sizes = [2, 96], strides = [1, 1]} : vector<16x96xf32> to vector<2x96xf32>
    %cst_73 = arith.constant dense<0.000000e+00> : vector<2x96xf32>
    %248 = tpu.matmul %216, %65, %cst_73 {dimension_numbers = #tpu.dot_dimension_numbers<[1], [0], [0], [1], [0, 0, 1, 1], [], []>} : vector<2x32xf32>, vector<32x96xf32>, vector<2x96xf32> -> vector<2x96xf32>
    %249 = arith.addf %248, %55 : vector<2x96xf32>
    %250 = vector.extract_strided_slice %247 {offsets = [0, 0], sizes = [2, 32], strides = [1, 1]} : vector<2x96xf32> to vector<2x32xf32>
    %251 = vector.extract_strided_slice %249 {offsets = [0, 0], sizes = [2, 32], strides = [1, 1]} : vector<2x96xf32> to vector<2x32xf32>
    %252 = arith.addf %250, %251 : vector<2x32xf32>
    %253 = arith.negf %252 : vector<2x32xf32>
    %254 = math.exp %253 : vector<2x32xf32>
    %cst_74 = arith.constant 1.000000e+00 : f32
    %255 = vector.broadcast %cst_74 : f32 to vector<2x32xf32>
    %256 = arith.addf %255, %254 : vector<2x32xf32>
    %257 = arith.divf %255, %256 : vector<2x32xf32>
    %258 = vector.extract_strided_slice %247 {offsets = [0, 32], sizes = [2, 32], strides = [1, 1]} : vector<2x96xf32> to vector<2x32xf32>
    %259 = vector.extract_strided_slice %249 {offsets = [0, 32], sizes = [2, 32], strides = [1, 1]} : vector<2x96xf32> to vector<2x32xf32>
    %260 = arith.addf %258, %259 : vector<2x32xf32>
    %261 = arith.negf %260 : vector<2x32xf32>
    %262 = math.exp %261 : vector<2x32xf32>
    %cst_75 = arith.constant 1.000000e+00 : f32
    %263 = vector.broadcast %cst_75 : f32 to vector<2x32xf32>
    %264 = arith.addf %263, %262 : vector<2x32xf32>
    %265 = arith.divf %263, %264 : vector<2x32xf32>
    %266 = vector.extract_strided_slice %247 {offsets = [0, 64], sizes = [2, 32], strides = [1, 1]} : vector<2x96xf32> to vector<2x32xf32>
    %267 = vector.extract_strided_slice %249 {offsets = [0, 64], sizes = [2, 32], strides = [1, 1]} : vector<2x96xf32> to vector<2x32xf32>
    %268 = arith.mulf %257, %267 : vector<2x32xf32>
    %269 = arith.addf %266, %268 : vector<2x32xf32>
    %270 = math.tanh %269 : vector<2x32xf32>
    %cst_76 = arith.constant 1.000000e+00 : f32
    %271 = vector.broadcast %cst_76 : f32 to vector<2x32xf32>
    %272 = arith.subf %271, %265 : vector<2x32xf32>
    %273 = arith.mulf %272, %270 : vector<2x32xf32>
    %274 = arith.mulf %265, %216 : vector<2x32xf32>
    %275 = arith.addf %273, %274 : vector<2x32xf32>
    %cst_77 = arith.constant dense<0.000000e+00> : vector<2x96xf32>
    %276 = tpu.matmul %275, %69, %cst_77 {dimension_numbers = #tpu.dot_dimension_numbers<[1], [0], [0], [1], [0, 0, 1, 1], [], []>} : vector<2x32xf32>, vector<32x96xf32>, vector<2x96xf32> -> vector<2x96xf32>
    %277 = arith.addf %276, %63 : vector<2x96xf32>
    %cst_78 = arith.constant dense<0.000000e+00> : vector<2x96xf32>
    %278 = tpu.matmul %246, %67, %cst_78 {dimension_numbers = #tpu.dot_dimension_numbers<[1], [0], [0], [1], [0, 0, 1, 1], [], []>} : vector<2x32xf32>, vector<32x96xf32>, vector<2x96xf32> -> vector<2x96xf32>
    %279 = arith.addf %278, %59 : vector<2x96xf32>
    %280 = vector.extract_strided_slice %277 {offsets = [0, 0], sizes = [2, 32], strides = [1, 1]} : vector<2x96xf32> to vector<2x32xf32>
    %281 = vector.extract_strided_slice %279 {offsets = [0, 0], sizes = [2, 32], strides = [1, 1]} : vector<2x96xf32> to vector<2x32xf32>
    %282 = arith.addf %280, %281 : vector<2x32xf32>
    %283 = arith.negf %282 : vector<2x32xf32>
    %284 = math.exp %283 : vector<2x32xf32>
    %cst_79 = arith.constant 1.000000e+00 : f32
    %285 = vector.broadcast %cst_79 : f32 to vector<2x32xf32>
    %286 = arith.addf %285, %284 : vector<2x32xf32>
    %287 = arith.divf %285, %286 : vector<2x32xf32>
    %288 = vector.extract_strided_slice %277 {offsets = [0, 32], sizes = [2, 32], strides = [1, 1]} : vector<2x96xf32> to vector<2x32xf32>
    %289 = vector.extract_strided_slice %279 {offsets = [0, 32], sizes = [2, 32], strides = [1, 1]} : vector<2x96xf32> to vector<2x32xf32>
    %290 = arith.addf %288, %289 : vector<2x32xf32>
    %291 = arith.negf %290 : vector<2x32xf32>
    %292 = math.exp %291 : vector<2x32xf32>
    %cst_80 = arith.constant 1.000000e+00 : f32
    %293 = vector.broadcast %cst_80 : f32 to vector<2x32xf32>
    %294 = arith.addf %293, %292 : vector<2x32xf32>
    %295 = arith.divf %293, %294 : vector<2x32xf32>
    %296 = vector.extract_strided_slice %277 {offsets = [0, 64], sizes = [2, 32], strides = [1, 1]} : vector<2x96xf32> to vector<2x32xf32>
    %297 = vector.extract_strided_slice %279 {offsets = [0, 64], sizes = [2, 32], strides = [1, 1]} : vector<2x96xf32> to vector<2x32xf32>
    %298 = arith.mulf %287, %297 : vector<2x32xf32>
    %299 = arith.addf %296, %298 : vector<2x32xf32>
    %300 = math.tanh %299 : vector<2x32xf32>
    %cst_81 = arith.constant 1.000000e+00 : f32
    %301 = vector.broadcast %cst_81 : f32 to vector<2x32xf32>
    %302 = arith.subf %301, %295 : vector<2x32xf32>
    %303 = arith.mulf %302, %300 : vector<2x32xf32>
    %304 = arith.mulf %295, %246 : vector<2x32xf32>
    %305 = arith.addf %303, %304 : vector<2x32xf32>
    %306 = vector.extract_strided_slice %51 {offsets = [8, 0], sizes = [2, 96], strides = [1, 1]} : vector<16x96xf32> to vector<2x96xf32>
    %cst_82 = arith.constant dense<0.000000e+00> : vector<2x96xf32>
    %307 = tpu.matmul %275, %65, %cst_82 {dimension_numbers = #tpu.dot_dimension_numbers<[1], [0], [0], [1], [0, 0, 1, 1], [], []>} : vector<2x32xf32>, vector<32x96xf32>, vector<2x96xf32> -> vector<2x96xf32>
    %308 = arith.addf %307, %55 : vector<2x96xf32>
    %309 = vector.extract_strided_slice %306 {offsets = [0, 0], sizes = [2, 32], strides = [1, 1]} : vector<2x96xf32> to vector<2x32xf32>
    %310 = vector.extract_strided_slice %308 {offsets = [0, 0], sizes = [2, 32], strides = [1, 1]} : vector<2x96xf32> to vector<2x32xf32>
    %311 = arith.addf %309, %310 : vector<2x32xf32>
    %312 = arith.negf %311 : vector<2x32xf32>
    %313 = math.exp %312 : vector<2x32xf32>
    %cst_83 = arith.constant 1.000000e+00 : f32
    %314 = vector.broadcast %cst_83 : f32 to vector<2x32xf32>
    %315 = arith.addf %314, %313 : vector<2x32xf32>
    %316 = arith.divf %314, %315 : vector<2x32xf32>
    %317 = vector.extract_strided_slice %306 {offsets = [0, 32], sizes = [2, 32], strides = [1, 1]} : vector<2x96xf32> to vector<2x32xf32>
    %318 = vector.extract_strided_slice %308 {offsets = [0, 32], sizes = [2, 32], strides = [1, 1]} : vector<2x96xf32> to vector<2x32xf32>
    %319 = arith.addf %317, %318 : vector<2x32xf32>
    %320 = arith.negf %319 : vector<2x32xf32>
    %321 = math.exp %320 : vector<2x32xf32>
    %cst_84 = arith.constant 1.000000e+00 : f32
    %322 = vector.broadcast %cst_84 : f32 to vector<2x32xf32>
    %323 = arith.addf %322, %321 : vector<2x32xf32>
    %324 = arith.divf %322, %323 : vector<2x32xf32>
    %325 = vector.extract_strided_slice %306 {offsets = [0, 64], sizes = [2, 32], strides = [1, 1]} : vector<2x96xf32> to vector<2x32xf32>
    %326 = vector.extract_strided_slice %308 {offsets = [0, 64], sizes = [2, 32], strides = [1, 1]} : vector<2x96xf32> to vector<2x32xf32>
    %327 = arith.mulf %316, %326 : vector<2x32xf32>
    %328 = arith.addf %325, %327 : vector<2x32xf32>
    %329 = math.tanh %328 : vector<2x32xf32>
    %cst_85 = arith.constant 1.000000e+00 : f32
    %330 = vector.broadcast %cst_85 : f32 to vector<2x32xf32>
    %331 = arith.subf %330, %324 : vector<2x32xf32>
    %332 = arith.mulf %331, %329 : vector<2x32xf32>
    %333 = arith.mulf %324, %275 : vector<2x32xf32>
    %334 = arith.addf %332, %333 : vector<2x32xf32>
    %cst_86 = arith.constant dense<0.000000e+00> : vector<2x96xf32>
    %335 = tpu.matmul %334, %69, %cst_86 {dimension_numbers = #tpu.dot_dimension_numbers<[1], [0], [0], [1], [0, 0, 1, 1], [], []>} : vector<2x32xf32>, vector<32x96xf32>, vector<2x96xf32> -> vector<2x96xf32>
    %336 = arith.addf %335, %63 : vector<2x96xf32>
    %cst_87 = arith.constant dense<0.000000e+00> : vector<2x96xf32>
    %337 = tpu.matmul %305, %67, %cst_87 {dimension_numbers = #tpu.dot_dimension_numbers<[1], [0], [0], [1], [0, 0, 1, 1], [], []>} : vector<2x32xf32>, vector<32x96xf32>, vector<2x96xf32> -> vector<2x96xf32>
    %338 = arith.addf %337, %59 : vector<2x96xf32>
    %339 = vector.extract_strided_slice %336 {offsets = [0, 0], sizes = [2, 32], strides = [1, 1]} : vector<2x96xf32> to vector<2x32xf32>
    %340 = vector.extract_strided_slice %338 {offsets = [0, 0], sizes = [2, 32], strides = [1, 1]} : vector<2x96xf32> to vector<2x32xf32>
    %341 = arith.addf %339, %340 : vector<2x32xf32>
    %342 = arith.negf %341 : vector<2x32xf32>
    %343 = math.exp %342 : vector<2x32xf32>
    %cst_88 = arith.constant 1.000000e+00 : f32
    %344 = vector.broadcast %cst_88 : f32 to vector<2x32xf32>
    %345 = arith.addf %344, %343 : vector<2x32xf32>
    %346 = arith.divf %344, %345 : vector<2x32xf32>
    %347 = vector.extract_strided_slice %336 {offsets = [0, 32], sizes = [2, 32], strides = [1, 1]} : vector<2x96xf32> to vector<2x32xf32>
    %348 = vector.extract_strided_slice %338 {offsets = [0, 32], sizes = [2, 32], strides = [1, 1]} : vector<2x96xf32> to vector<2x32xf32>
    %349 = arith.addf %347, %348 : vector<2x32xf32>
    %350 = arith.negf %349 : vector<2x32xf32>
    %351 = math.exp %350 : vector<2x32xf32>
    %cst_89 = arith.constant 1.000000e+00 : f32
    %352 = vector.broadcast %cst_89 : f32 to vector<2x32xf32>
    %353 = arith.addf %352, %351 : vector<2x32xf32>
    %354 = arith.divf %352, %353 : vector<2x32xf32>
    %355 = vector.extract_strided_slice %336 {offsets = [0, 64], sizes = [2, 32], strides = [1, 1]} : vector<2x96xf32> to vector<2x32xf32>
    %356 = vector.extract_strided_slice %338 {offsets = [0, 64], sizes = [2, 32], strides = [1, 1]} : vector<2x96xf32> to vector<2x32xf32>
    %357 = arith.mulf %346, %356 : vector<2x32xf32>
    %358 = arith.addf %355, %357 : vector<2x32xf32>
    %359 = math.tanh %358 : vector<2x32xf32>
    %cst_90 = arith.constant 1.000000e+00 : f32
    %360 = vector.broadcast %cst_90 : f32 to vector<2x32xf32>
    %361 = arith.subf %360, %354 : vector<2x32xf32>
    %362 = arith.mulf %361, %359 : vector<2x32xf32>
    %363 = arith.mulf %354, %305 : vector<2x32xf32>
    %364 = arith.addf %362, %363 : vector<2x32xf32>
    %365 = vector.extract_strided_slice %51 {offsets = [10, 0], sizes = [2, 96], strides = [1, 1]} : vector<16x96xf32> to vector<2x96xf32>
    %cst_91 = arith.constant dense<0.000000e+00> : vector<2x96xf32>
    %366 = tpu.matmul %334, %65, %cst_91 {dimension_numbers = #tpu.dot_dimension_numbers<[1], [0], [0], [1], [0, 0, 1, 1], [], []>} : vector<2x32xf32>, vector<32x96xf32>, vector<2x96xf32> -> vector<2x96xf32>
    %367 = arith.addf %366, %55 : vector<2x96xf32>
    %368 = vector.extract_strided_slice %365 {offsets = [0, 0], sizes = [2, 32], strides = [1, 1]} : vector<2x96xf32> to vector<2x32xf32>
    %369 = vector.extract_strided_slice %367 {offsets = [0, 0], sizes = [2, 32], strides = [1, 1]} : vector<2x96xf32> to vector<2x32xf32>
    %370 = arith.addf %368, %369 : vector<2x32xf32>
    %371 = arith.negf %370 : vector<2x32xf32>
    %372 = math.exp %371 : vector<2x32xf32>
    %cst_92 = arith.constant 1.000000e+00 : f32
    %373 = vector.broadcast %cst_92 : f32 to vector<2x32xf32>
    %374 = arith.addf %373, %372 : vector<2x32xf32>
    %375 = arith.divf %373, %374 : vector<2x32xf32>
    %376 = vector.extract_strided_slice %365 {offsets = [0, 32], sizes = [2, 32], strides = [1, 1]} : vector<2x96xf32> to vector<2x32xf32>
    %377 = vector.extract_strided_slice %367 {offsets = [0, 32], sizes = [2, 32], strides = [1, 1]} : vector<2x96xf32> to vector<2x32xf32>
    %378 = arith.addf %376, %377 : vector<2x32xf32>
    %379 = arith.negf %378 : vector<2x32xf32>
    %380 = math.exp %379 : vector<2x32xf32>
    %cst_93 = arith.constant 1.000000e+00 : f32
    %381 = vector.broadcast %cst_93 : f32 to vector<2x32xf32>
    %382 = arith.addf %381, %380 : vector<2x32xf32>
    %383 = arith.divf %381, %382 : vector<2x32xf32>
    %384 = vector.extract_strided_slice %365 {offsets = [0, 64], sizes = [2, 32], strides = [1, 1]} : vector<2x96xf32> to vector<2x32xf32>
    %385 = vector.extract_strided_slice %367 {offsets = [0, 64], sizes = [2, 32], strides = [1, 1]} : vector<2x96xf32> to vector<2x32xf32>
    %386 = arith.mulf %375, %385 : vector<2x32xf32>
    %387 = arith.addf %384, %386 : vector<2x32xf32>
    %388 = math.tanh %387 : vector<2x32xf32>
    %cst_94 = arith.constant 1.000000e+00 : f32
    %389 = vector.broadcast %cst_94 : f32 to vector<2x32xf32>
    %390 = arith.subf %389, %383 : vector<2x32xf32>
    %391 = arith.mulf %390, %388 : vector<2x32xf32>
    %392 = arith.mulf %383, %334 : vector<2x32xf32>
    %393 = arith.addf %391, %392 : vector<2x32xf32>
    %cst_95 = arith.constant dense<0.000000e+00> : vector<2x96xf32>
    %394 = tpu.matmul %393, %69, %cst_95 {dimension_numbers = #tpu.dot_dimension_numbers<[1], [0], [0], [1], [0, 0, 1, 1], [], []>} : vector<2x32xf32>, vector<32x96xf32>, vector<2x96xf32> -> vector<2x96xf32>
    %395 = arith.addf %394, %63 : vector<2x96xf32>
    %cst_96 = arith.constant dense<0.000000e+00> : vector<2x96xf32>
    %396 = tpu.matmul %364, %67, %cst_96 {dimension_numbers = #tpu.dot_dimension_numbers<[1], [0], [0], [1], [0, 0, 1, 1], [], []>} : vector<2x32xf32>, vector<32x96xf32>, vector<2x96xf32> -> vector<2x96xf32>
    %397 = arith.addf %396, %59 : vector<2x96xf32>
    %398 = vector.extract_strided_slice %395 {offsets = [0, 0], sizes = [2, 32], strides = [1, 1]} : vector<2x96xf32> to vector<2x32xf32>
    %399 = vector.extract_strided_slice %397 {offsets = [0, 0], sizes = [2, 32], strides = [1, 1]} : vector<2x96xf32> to vector<2x32xf32>
    %400 = arith.addf %398, %399 : vector<2x32xf32>
    %401 = arith.negf %400 : vector<2x32xf32>
    %402 = math.exp %401 : vector<2x32xf32>
    %cst_97 = arith.constant 1.000000e+00 : f32
    %403 = vector.broadcast %cst_97 : f32 to vector<2x32xf32>
    %404 = arith.addf %403, %402 : vector<2x32xf32>
    %405 = arith.divf %403, %404 : vector<2x32xf32>
    %406 = vector.extract_strided_slice %395 {offsets = [0, 32], sizes = [2, 32], strides = [1, 1]} : vector<2x96xf32> to vector<2x32xf32>
    %407 = vector.extract_strided_slice %397 {offsets = [0, 32], sizes = [2, 32], strides = [1, 1]} : vector<2x96xf32> to vector<2x32xf32>
    %408 = arith.addf %406, %407 : vector<2x32xf32>
    %409 = arith.negf %408 : vector<2x32xf32>
    %410 = math.exp %409 : vector<2x32xf32>
    %cst_98 = arith.constant 1.000000e+00 : f32
    %411 = vector.broadcast %cst_98 : f32 to vector<2x32xf32>
    %412 = arith.addf %411, %410 : vector<2x32xf32>
    %413 = arith.divf %411, %412 : vector<2x32xf32>
    %414 = vector.extract_strided_slice %395 {offsets = [0, 64], sizes = [2, 32], strides = [1, 1]} : vector<2x96xf32> to vector<2x32xf32>
    %415 = vector.extract_strided_slice %397 {offsets = [0, 64], sizes = [2, 32], strides = [1, 1]} : vector<2x96xf32> to vector<2x32xf32>
    %416 = arith.mulf %405, %415 : vector<2x32xf32>
    %417 = arith.addf %414, %416 : vector<2x32xf32>
    %418 = math.tanh %417 : vector<2x32xf32>
    %cst_99 = arith.constant 1.000000e+00 : f32
    %419 = vector.broadcast %cst_99 : f32 to vector<2x32xf32>
    %420 = arith.subf %419, %413 : vector<2x32xf32>
    %421 = arith.mulf %420, %418 : vector<2x32xf32>
    %422 = arith.mulf %413, %364 : vector<2x32xf32>
    %423 = arith.addf %421, %422 : vector<2x32xf32>
    %424 = vector.extract_strided_slice %51 {offsets = [12, 0], sizes = [2, 96], strides = [1, 1]} : vector<16x96xf32> to vector<2x96xf32>
    %cst_100 = arith.constant dense<0.000000e+00> : vector<2x96xf32>
    %425 = tpu.matmul %393, %65, %cst_100 {dimension_numbers = #tpu.dot_dimension_numbers<[1], [0], [0], [1], [0, 0, 1, 1], [], []>} : vector<2x32xf32>, vector<32x96xf32>, vector<2x96xf32> -> vector<2x96xf32>
    %426 = arith.addf %425, %55 : vector<2x96xf32>
    %427 = vector.extract_strided_slice %424 {offsets = [0, 0], sizes = [2, 32], strides = [1, 1]} : vector<2x96xf32> to vector<2x32xf32>
    %428 = vector.extract_strided_slice %426 {offsets = [0, 0], sizes = [2, 32], strides = [1, 1]} : vector<2x96xf32> to vector<2x32xf32>
    %429 = arith.addf %427, %428 : vector<2x32xf32>
    %430 = arith.negf %429 : vector<2x32xf32>
    %431 = math.exp %430 : vector<2x32xf32>
    %cst_101 = arith.constant 1.000000e+00 : f32
    %432 = vector.broadcast %cst_101 : f32 to vector<2x32xf32>
    %433 = arith.addf %432, %431 : vector<2x32xf32>
    %434 = arith.divf %432, %433 : vector<2x32xf32>
    %435 = vector.extract_strided_slice %424 {offsets = [0, 32], sizes = [2, 32], strides = [1, 1]} : vector<2x96xf32> to vector<2x32xf32>
    %436 = vector.extract_strided_slice %426 {offsets = [0, 32], sizes = [2, 32], strides = [1, 1]} : vector<2x96xf32> to vector<2x32xf32>
    %437 = arith.addf %435, %436 : vector<2x32xf32>
    %438 = arith.negf %437 : vector<2x32xf32>
    %439 = math.exp %438 : vector<2x32xf32>
    %cst_102 = arith.constant 1.000000e+00 : f32
    %440 = vector.broadcast %cst_102 : f32 to vector<2x32xf32>
    %441 = arith.addf %440, %439 : vector<2x32xf32>
    %442 = arith.divf %440, %441 : vector<2x32xf32>
    %443 = vector.extract_strided_slice %424 {offsets = [0, 64], sizes = [2, 32], strides = [1, 1]} : vector<2x96xf32> to vector<2x32xf32>
    %444 = vector.extract_strided_slice %426 {offsets = [0, 64], sizes = [2, 32], strides = [1, 1]} : vector<2x96xf32> to vector<2x32xf32>
    %445 = arith.mulf %434, %444 : vector<2x32xf32>
    %446 = arith.addf %443, %445 : vector<2x32xf32>
    %447 = math.tanh %446 : vector<2x32xf32>
    %cst_103 = arith.constant 1.000000e+00 : f32
    %448 = vector.broadcast %cst_103 : f32 to vector<2x32xf32>
    %449 = arith.subf %448, %442 : vector<2x32xf32>
    %450 = arith.mulf %449, %447 : vector<2x32xf32>
    %451 = arith.mulf %442, %393 : vector<2x32xf32>
    %452 = arith.addf %450, %451 : vector<2x32xf32>
    %cst_104 = arith.constant dense<0.000000e+00> : vector<2x96xf32>
    %453 = tpu.matmul %452, %69, %cst_104 {dimension_numbers = #tpu.dot_dimension_numbers<[1], [0], [0], [1], [0, 0, 1, 1], [], []>} : vector<2x32xf32>, vector<32x96xf32>, vector<2x96xf32> -> vector<2x96xf32>
    %454 = arith.addf %453, %63 : vector<2x96xf32>
    %cst_105 = arith.constant dense<0.000000e+00> : vector<2x96xf32>
    %455 = tpu.matmul %423, %67, %cst_105 {dimension_numbers = #tpu.dot_dimension_numbers<[1], [0], [0], [1], [0, 0, 1, 1], [], []>} : vector<2x32xf32>, vector<32x96xf32>, vector<2x96xf32> -> vector<2x96xf32>
    %456 = arith.addf %455, %59 : vector<2x96xf32>
    %457 = vector.extract_strided_slice %454 {offsets = [0, 0], sizes = [2, 32], strides = [1, 1]} : vector<2x96xf32> to vector<2x32xf32>
    %458 = vector.extract_strided_slice %456 {offsets = [0, 0], sizes = [2, 32], strides = [1, 1]} : vector<2x96xf32> to vector<2x32xf32>
    %459 = arith.addf %457, %458 : vector<2x32xf32>
    %460 = arith.negf %459 : vector<2x32xf32>
    %461 = math.exp %460 : vector<2x32xf32>
    %cst_106 = arith.constant 1.000000e+00 : f32
    %462 = vector.broadcast %cst_106 : f32 to vector<2x32xf32>
    %463 = arith.addf %462, %461 : vector<2x32xf32>
    %464 = arith.divf %462, %463 : vector<2x32xf32>
    %465 = vector.extract_strided_slice %454 {offsets = [0, 32], sizes = [2, 32], strides = [1, 1]} : vector<2x96xf32> to vector<2x32xf32>
    %466 = vector.extract_strided_slice %456 {offsets = [0, 32], sizes = [2, 32], strides = [1, 1]} : vector<2x96xf32> to vector<2x32xf32>
    %467 = arith.addf %465, %466 : vector<2x32xf32>
    %468 = arith.negf %467 : vector<2x32xf32>
    %469 = math.exp %468 : vector<2x32xf32>
    %cst_107 = arith.constant 1.000000e+00 : f32
    %470 = vector.broadcast %cst_107 : f32 to vector<2x32xf32>
    %471 = arith.addf %470, %469 : vector<2x32xf32>
    %472 = arith.divf %470, %471 : vector<2x32xf32>
    %473 = vector.extract_strided_slice %454 {offsets = [0, 64], sizes = [2, 32], strides = [1, 1]} : vector<2x96xf32> to vector<2x32xf32>
    %474 = vector.extract_strided_slice %456 {offsets = [0, 64], sizes = [2, 32], strides = [1, 1]} : vector<2x96xf32> to vector<2x32xf32>
    %475 = arith.mulf %464, %474 : vector<2x32xf32>
    %476 = arith.addf %473, %475 : vector<2x32xf32>
    %477 = math.tanh %476 : vector<2x32xf32>
    %cst_108 = arith.constant 1.000000e+00 : f32
    %478 = vector.broadcast %cst_108 : f32 to vector<2x32xf32>
    %479 = arith.subf %478, %472 : vector<2x32xf32>
    %480 = arith.mulf %479, %477 : vector<2x32xf32>
    %481 = arith.mulf %472, %423 : vector<2x32xf32>
    %482 = arith.addf %480, %481 : vector<2x32xf32>
    %483 = vector.extract_strided_slice %51 {offsets = [14, 0], sizes = [2, 96], strides = [1, 1]} : vector<16x96xf32> to vector<2x96xf32>
    %cst_109 = arith.constant dense<0.000000e+00> : vector<2x96xf32>
    %484 = tpu.matmul %452, %65, %cst_109 {dimension_numbers = #tpu.dot_dimension_numbers<[1], [0], [0], [1], [0, 0, 1, 1], [], []>} : vector<2x32xf32>, vector<32x96xf32>, vector<2x96xf32> -> vector<2x96xf32>
    %485 = arith.addf %484, %55 : vector<2x96xf32>
    %486 = vector.extract_strided_slice %483 {offsets = [0, 0], sizes = [2, 32], strides = [1, 1]} : vector<2x96xf32> to vector<2x32xf32>
    %487 = vector.extract_strided_slice %485 {offsets = [0, 0], sizes = [2, 32], strides = [1, 1]} : vector<2x96xf32> to vector<2x32xf32>
    %488 = arith.addf %486, %487 : vector<2x32xf32>
    %489 = arith.negf %488 : vector<2x32xf32>
    %490 = math.exp %489 : vector<2x32xf32>
    %cst_110 = arith.constant 1.000000e+00 : f32
    %491 = vector.broadcast %cst_110 : f32 to vector<2x32xf32>
    %492 = arith.addf %491, %490 : vector<2x32xf32>
    %493 = arith.divf %491, %492 : vector<2x32xf32>
    %494 = vector.extract_strided_slice %483 {offsets = [0, 32], sizes = [2, 32], strides = [1, 1]} : vector<2x96xf32> to vector<2x32xf32>
    %495 = vector.extract_strided_slice %485 {offsets = [0, 32], sizes = [2, 32], strides = [1, 1]} : vector<2x96xf32> to vector<2x32xf32>
    %496 = arith.addf %494, %495 : vector<2x32xf32>
    %497 = arith.negf %496 : vector<2x32xf32>
    %498 = math.exp %497 : vector<2x32xf32>
    %cst_111 = arith.constant 1.000000e+00 : f32
    %499 = vector.broadcast %cst_111 : f32 to vector<2x32xf32>
    %500 = arith.addf %499, %498 : vector<2x32xf32>
    %501 = arith.divf %499, %500 : vector<2x32xf32>
    %502 = vector.extract_strided_slice %483 {offsets = [0, 64], sizes = [2, 32], strides = [1, 1]} : vector<2x96xf32> to vector<2x32xf32>
    %503 = vector.extract_strided_slice %485 {offsets = [0, 64], sizes = [2, 32], strides = [1, 1]} : vector<2x96xf32> to vector<2x32xf32>
    %504 = arith.mulf %493, %503 : vector<2x32xf32>
    %505 = arith.addf %502, %504 : vector<2x32xf32>
    %506 = math.tanh %505 : vector<2x32xf32>
    %cst_112 = arith.constant 1.000000e+00 : f32
    %507 = vector.broadcast %cst_112 : f32 to vector<2x32xf32>
    %508 = arith.subf %507, %501 : vector<2x32xf32>
    %509 = arith.mulf %508, %506 : vector<2x32xf32>
    %510 = arith.mulf %501, %452 : vector<2x32xf32>
    %511 = arith.addf %509, %510 : vector<2x32xf32>
    %cst_113 = arith.constant dense<0.000000e+00> : vector<2x96xf32>
    %512 = tpu.matmul %511, %69, %cst_113 {dimension_numbers = #tpu.dot_dimension_numbers<[1], [0], [0], [1], [0, 0, 1, 1], [], []>} : vector<2x32xf32>, vector<32x96xf32>, vector<2x96xf32> -> vector<2x96xf32>
    %513 = arith.addf %512, %63 : vector<2x96xf32>
    %cst_114 = arith.constant dense<0.000000e+00> : vector<2x96xf32>
    %514 = tpu.matmul %482, %67, %cst_114 {dimension_numbers = #tpu.dot_dimension_numbers<[1], [0], [0], [1], [0, 0, 1, 1], [], []>} : vector<2x32xf32>, vector<32x96xf32>, vector<2x96xf32> -> vector<2x96xf32>
    %515 = arith.addf %514, %59 : vector<2x96xf32>
    %516 = vector.extract_strided_slice %513 {offsets = [0, 0], sizes = [2, 32], strides = [1, 1]} : vector<2x96xf32> to vector<2x32xf32>
    %517 = vector.extract_strided_slice %515 {offsets = [0, 0], sizes = [2, 32], strides = [1, 1]} : vector<2x96xf32> to vector<2x32xf32>
    %518 = arith.addf %516, %517 : vector<2x32xf32>
    %519 = arith.negf %518 : vector<2x32xf32>
    %520 = math.exp %519 : vector<2x32xf32>
    %cst_115 = arith.constant 1.000000e+00 : f32
    %521 = vector.broadcast %cst_115 : f32 to vector<2x32xf32>
    %522 = arith.addf %521, %520 : vector<2x32xf32>
    %523 = arith.divf %521, %522 : vector<2x32xf32>
    %524 = vector.extract_strided_slice %513 {offsets = [0, 32], sizes = [2, 32], strides = [1, 1]} : vector<2x96xf32> to vector<2x32xf32>
    %525 = vector.extract_strided_slice %515 {offsets = [0, 32], sizes = [2, 32], strides = [1, 1]} : vector<2x96xf32> to vector<2x32xf32>
    %526 = arith.addf %524, %525 : vector<2x32xf32>
    %527 = arith.negf %526 : vector<2x32xf32>
    %528 = math.exp %527 : vector<2x32xf32>
    %cst_116 = arith.constant 1.000000e+00 : f32
    %529 = vector.broadcast %cst_116 : f32 to vector<2x32xf32>
    %530 = arith.addf %529, %528 : vector<2x32xf32>
    %531 = arith.divf %529, %530 : vector<2x32xf32>
    %532 = vector.extract_strided_slice %513 {offsets = [0, 64], sizes = [2, 32], strides = [1, 1]} : vector<2x96xf32> to vector<2x32xf32>
    %533 = vector.extract_strided_slice %515 {offsets = [0, 64], sizes = [2, 32], strides = [1, 1]} : vector<2x96xf32> to vector<2x32xf32>
    %534 = arith.mulf %523, %533 : vector<2x32xf32>
    %535 = arith.addf %532, %534 : vector<2x32xf32>
    %536 = math.tanh %535 : vector<2x32xf32>
    %cst_117 = arith.constant 1.000000e+00 : f32
    %537 = vector.broadcast %cst_117 : f32 to vector<2x32xf32>
    %538 = arith.subf %537, %531 : vector<2x32xf32>
    %539 = arith.mulf %538, %536 : vector<2x32xf32>
    %540 = arith.mulf %531, %482 : vector<2x32xf32>
    %541 = arith.addf %539, %540 : vector<2x32xf32>
    %542 = tpu.concatenate %128, %187, %246, %305, %364, %423, %482, %541 in 0 : vector<2x32xf32>, vector<2x32xf32>, vector<2x32xf32>, vector<2x32xf32>, vector<2x32xf32>, vector<2x32xf32>, vector<2x32xf32>, vector<2x32xf32> -> vector<16x32xf32>
    %c0_118 = arith.constant 0 : index
    %c0_119 = arith.constant 0 : index
    %543 = vector.load %arg14[%c0_118, %c0_119] : memref<32x64xf32, #tpu.memory_space<vmem>>, vector<32x64xf32>
    %cst_120 = arith.constant dense<0.000000e+00> : vector<16x64xf32>
    %544 = tpu.matmul %542, %543, %cst_120 {dimension_numbers = #tpu.dot_dimension_numbers<[1], [0], [0], [1], [0, 0, 1, 1], [], []>} : vector<16x32xf32>, vector<32x64xf32>, vector<16x64xf32> -> vector<16x64xf32>
    %c0_121 = arith.constant 0 : index
    %c0_122 = arith.constant 0 : index
    %545 = vector.load %arg15[%c0_121, %c0_122] : memref<1x64xf32, #tpu.memory_space<vmem>>, vector<1x64xf32>
    %546 = vector.broadcast %545 : vector<1x64xf32> to vector<16x64xf32>
    %547 = arith.addf %544, %546 : vector<16x64xf32>
    %cst_123 = arith.constant dense<0xFF800000> : vector<16xf32>
    %548 = vector.multi_reduction <maximumf>, %547, %cst_123 [1] : vector<16x64xf32> to vector<16xf32>
    %549 = vector.shape_cast %548 : vector<16xf32> to vector<16x1xf32>
    %550 = vector.broadcast %549 : vector<16x1xf32> to vector<16x64xf32>
    %551 = arith.subf %547, %550 : vector<16x64xf32>
    %552 = math.exp %551 : vector<16x64xf32>
    %cst_124 = arith.constant dense<0.000000e+00> : vector<16xf32>
    %553 = vector.multi_reduction <add>, %552, %cst_124 [1] : vector<16x64xf32> to vector<16xf32>
    %554 = vector.shape_cast %553 : vector<16xf32> to vector<16x1xf32>
    %555 = vector.broadcast %554 : vector<16x1xf32> to vector<16x64xf32>
    %556 = arith.divf %552, %555 : vector<16x64xf32>
    %c0_125 = arith.constant 0 : index
    %c0_126 = arith.constant 0 : index
    %557 = vector.load %arg16[%c0_125, %c0_126] : memref<16x64xf32, #tpu.memory_space<vmem>>, vector<16x64xf32>
    tpu.vector_store %arg16[%c0_125, %c0_126], %556 {strides = array<i32>} : memref<16x64xf32, #tpu.memory_space<vmem>>, vector<16x64xf32>,
    return
  }
}

</mosaic_0001>

<llo_original>
// kernel: forward.1
$region0: #{forward.1}
  #allocation0 [shape = 'u32[]', space=smem, size = 0x4, offset = 0x4, fixed_abs, tag = 'smem constant byte address 0x4 - core index']
  #allocation1 [shape = 'u32[144,128]{1,0:T(1,128)}', space=vmem, size = 0x12000, scoped, tag = 'internal scratch']
  %s0 = inlined_call_operand.vmem [shape: s32[48,1], index: 0, kind: input, shape index: {}]
  %s1 = inlined_call_operand.vmem [shape: s32[2,1], index: 1, kind: input, shape index: {}]
  %s2 = inlined_call_operand.vmem [shape: f32[2,16,16], index: 2, kind: input, shape index: {}]
  %s3 = inlined_call_operand.vmem [shape: f32[2,16], index: 3, kind: input, shape index: {}]
  %s4 = inlined_call_operand.vmem [shape: f32[64,32], index: 4, kind: input, shape index: {}]
  %s5 = inlined_call_operand.vmem [shape: f32[32,32], index: 5, kind: input, shape index: {}]
  %s6 = inlined_call_operand.hbm [shape: f32[1,32], index: 6, kind: input, shape index: {}]
  %s7 = inlined_call_operand.vmem [shape: f32[32,64], index: 7, kind: input, shape index: {}]
  %s8 = inlined_call_operand.hbm [shape: f32[1,64], index: 8, kind: input, shape index: {}]
  %s9 = inlined_call_operand.hbm [shape: f32[32,96], index: 9, kind: input, shape index: {}]
  %s10 = inlined_call_operand.hbm [shape: f32[1,32,96], index: 10, kind: input, shape index: {}]
  %s11 = inlined_call_operand.vmem [shape: f32[2,32,96], index: 11, kind: input, shape index: {}]
  %s12 = inlined_call_operand.hbm [shape: f32[2,1,96], index: 12, kind: input, shape index: {}]
  %s13 = inlined_call_operand.hbm [shape: f32[2,1,96], index: 13, kind: input, shape index: {}]
  %s14 = inlined_call_operand.vmem [shape: f32[32,64], index: 14, kind: input, shape index: {}]
  %s15 = inlined_call_operand.hbm [shape: f32[1,64], index: 15, kind: input, shape index: {}]
  %s16 = inlined_call_operand.vmem [shape: f32[16,64], index: 16, kind: output, shape index: {}]
  %s17 = sld [smem:[#allocation0]]
  $region102: #{forward.1} parent=0
    _
  %s19 = ssub.s32 1, %s17
  %s20 = scalar_select 0, %s19, %s17
  $region1: #{forward.1} parent=0
    #allocation2 [shape = 'u8[512]{0}', space=vmem, size = 0x400, scoped, tag = 'input window, operand 6, single buffered']
    #allocation3 [shape = 's32[1]{0}', space=sflag, size = 0x4, scoped, tag = 'scoped memory for forward.1']
    #allocation4 [shape = 'u8[512]{0}', space=vmem, size = 0x400, scoped, tag = 'input window, operand 8, single buffered']
    #allocation5 [shape = 's32[1]{0}', space=sflag, size = 0x4, scoped, tag = 'scoped memory for forward.1']
    #allocation6 [shape = 'u8[16384]{0}', space=vmem, size = 0x4000, scoped, tag = 'input window, operand 9, single buffered']
    #allocation7 [shape = 'u8[16384]{0}', space=vmem, size = 0x4000, scoped, tag = 'input window, operand 10, single buffered']
    #allocation8 [shape = 's32[1]{0}', space=sflag, size = 0x4, scoped, tag = 'scoped memory for forward.1']
    #allocation9 [shape = 'u8[1024]{0}', space=vmem, size = 0x400, scoped, tag = 'input window, operand 12, single buffered']
    #allocation10 [shape = 'u8[1024]{0}', space=vmem, size = 0x400, scoped, tag = 'input window, operand 13, single buffered']
    #allocation11 [shape = 's32[1]{0}', space=sflag, size = 0x4, scoped, tag = 'scoped memory for forward.1']
    #allocation12 [shape = 'u8[512]{0}', space=vmem, size = 0x400, scoped, tag = 'input window, operand 15, single buffered']
    %21 = vsyncpa [#allocation3], 0
    %22 = vsyncpa [#allocation5], 0
    %23 = vsyncpa [#allocation8], 0
    %24 = vsyncpa [#allocation11], 0
    // Predicated region
    $region2: #{forward.1} parent=1 // pred_check
      _
    $region3: #{forward.1} parent=1 // pred_check_branch
      %26 = sbr.rel (0) target = $region5
    $region4: #{forward.1} parent=1 // pred_region
      _
    $region5: #{forward.1} parent=1 // pred_fallthru
      _
    // Predicated region
    $region6: #{forward.1} parent=1 // pred_check
      _
    $region7: #{forward.1} parent=1 // pred_check_branch
      %28 = sbr.rel (0) target = $region9
    $region8: #{forward.1} parent=1 // pred_region
      _
    $region9: #{forward.1} parent=1 // pred_fallthru
      _
    // Predicated region
    $region10: #{forward.1} parent=1 // pred_check
      _
    $region11: #{forward.1} parent=1 // pred_check_branch
      %30 = sbr.rel (0) target = $region13
    $region12: #{forward.1} parent=1 // pred_region
      _
    $region13: #{forward.1} parent=1 // pred_fallthru
      _
    // Predicated region
    $region14: #{forward.1} parent=1 // pred_check
      _
    $region15: #{forward.1} parent=1 // pred_check_branch
      %32 = sbr.rel (0) target = $region17
    $region16: #{forward.1} parent=1 // pred_region
      _
    $region17: #{forward.1} parent=1 // pred_fallthru
      _
    // Predicated region
    $region18: #{forward.1} parent=1 // pred_check
      _
    $region19: #{forward.1} parent=1 // pred_check_branch
      %34 = sbr.rel (0) target = $region21
    $region20: #{forward.1} parent=1 // pred_region
      _
    $region21: #{forward.1} parent=1 // pred_fallthru
      _
    // Predicated region
    $region22: #{forward.1} parent=1 // pred_check
      _
    $region23: #{forward.1} parent=1 // pred_check_branch
      %36 = sbr.rel (0) target = $region25
    $region24: #{forward.1} parent=1 // pred_region
      _
    $region25: #{forward.1} parent=1 // pred_fallthru
      _
    // Predicated region
    $region26: #{forward.1} parent=1 // pred_check
      _
    $region27: #{forward.1} parent=1 // pred_check_branch
      %38 = sbr.rel (0) target = $region29
    $region28: #{forward.1} parent=1 // pred_region
      %s40 = ssub.s32 16, 16
      %41 = vsyncadd [#allocation3], %s40
      %s43 = sshll.u32 [#allocation2], 4
      %s44 = int_to_ptr.vmem [resolvable:$true] %s43
      %46 = dma.hbm_to_vmem [thread:$0]  %s6, 16, %s44, [#allocation3]
    $region29: #{forward.1} parent=1 // pred_fallthru
      _
    // Predicated region
    $region30: #{forward.1} parent=1 // pred_check
      _
    $region31: #{forward.1} parent=1 // pred_check_branch
      %48 = sbr.rel (0) target = $region33
    $region32: #{forward.1} parent=1 // pred_region
      _
    $region33: #{forward.1} parent=1 // pred_fallthru
      _
    // Predicated region
    $region34: #{forward.1} parent=1 // pred_check
      _
    $region35: #{forward.1} parent=1 // pred_check_branch
      %50 = sbr.rel (0) target = $region37
    $region36: #{forward.1} parent=1 // pred_region
      %s52 = ssub.s32 16, 16
      %53 = vsyncadd [#allocation5], %s52
      %s55 = sshll.u32 [#allocation4], 4
      %s56 = int_to_ptr.vmem [resolvable:$true] %s55
      %58 = dma.hbm_to_vmem [thread:$0]  %s8, 16, %s56, [#allocation5]
    $region37: #{forward.1} parent=1 // pred_fallthru
      _
    // Predicated region
    $region38: #{forward.1} parent=1 // pred_check
      _
    $region39: #{forward.1} parent=1 // pred_check_branch
      %60 = sbr.rel (0) target = $region41
    $region40: #{forward.1} parent=1 // pred_region
      %s62 = ssub.s32 512, 512
      %63 = vsyncadd [#allocation5], %s62
      %s64 = sshll.u32 [#allocation6], 4
      %s65 = int_to_ptr.vmem [resolvable:$true] %s64
      %70 = dma.hbm_to_vmem [thread:$0]  %s9, 512, %s65, [#allocation5], 128, 128, 8
    $region41: #{forward.1} parent=1 // pred_fallthru
      _
    // Predicated region
    $region42: #{forward.1} parent=1 // pred_check
      _
    $region43: #{forward.1} parent=1 // pred_check_branch
      %72 = sbr.rel (0) target = $region45
    $region44: #{forward.1} parent=1 // pred_region
      %s74 = ssub.s32 512, 512
      %75 = vsyncadd [#allocation8], %s74
      %s76 = sshll.u32 [#allocation7], 4
      %s77 = int_to_ptr.vmem [resolvable:$true] %s76
      %82 = dma.hbm_to_vmem [thread:$0]  %s10, 512, %s77, [#allocation8], 128, 128, 8
    $region45: #{forward.1} parent=1 // pred_fallthru
      _
    // Predicated region
    $region46: #{forward.1} parent=1 // pred_check
      _
    $region47: #{forward.1} parent=1 // pred_check_branch
      %84 = sbr.rel (0) target = $region49
    $region48: #{forward.1} parent=1 // pred_region
      _
    $region49: #{forward.1} parent=1 // pred_fallthru
      _
    // Predicated region
    $region50: #{forward.1} parent=1 // pred_check
      _
    $region51: #{forward.1} parent=1 // pred_check_branch
      %86 = sbr.rel (0) target = $region53
    $region52: #{forward.1} parent=1 // pred_region
      %s88 = ssub.s32 32, 32
      %89 = vsyncadd [#allocation8], %s88
      %s90 = sshll.u32 [#allocation9], 4
      %s91 = int_to_ptr.vmem [resolvable:$true] %s90
      %96 = dma.hbm_to_vmem [thread:$0]  %s12, 32, %s91, [#allocation8], 16, 16, 1
    $region53: #{forward.1} parent=1 // pred_fallthru
      _
    // Predicated region
    $region54: #{forward.1} parent=1 // pred_check
      _
    $region55: #{forward.1} parent=1 // pred_check_branch
      %98 = sbr.rel (0) target = $region57
    $region56: #{forward.1} parent=1 // pred_region
      %s100 = ssub.s32 32, 32
      %101 = vsyncadd [#allocation11], %s100
      %s102 = sshll.u32 [#allocation10], 4
      %s103 = int_to_ptr.vmem [resolvable:$true] %s102
      %108 = dma.hbm_to_vmem [thread:$0]  %s13, 32, %s103, [#allocation11], 16, 16, 1
    $region57: #{forward.1} parent=1 // pred_fallthru
      _
    // Predicated region
    $region58: #{forward.1} parent=1 // pred_check
      _
    $region59: #{forward.1} parent=1 // pred_check_branch
      %110 = sbr.rel (0) target = $region61
    $region60: #{forward.1} parent=1 // pred_region
      _
    $region61: #{forward.1} parent=1 // pred_fallthru
      _
    // Predicated region
    $region62: #{forward.1} parent=1 // pred_check
      _
    $region63: #{forward.1} parent=1 // pred_check_branch
      %112 = sbr.rel (0) target = $region65
    $region64: #{forward.1} parent=1 // pred_region
      %s114 = ssub.s32 16, 16
      %115 = vsyncadd [#allocation11], %s114
      %s117 = sshll.u32 [#allocation12], 4
      %s118 = int_to_ptr.vmem [resolvable:$true] %s117
      %120 = dma.hbm_to_vmem [thread:$0]  %s15, 16, %s118, [#allocation11]
    $region65: #{forward.1} parent=1 // pred_fallthru
      _
    // Predicated region
    $region66: #{forward.1} parent=1 // pred_check
      _
    $region67: #{forward.1} parent=1 // pred_check_branch
      %122 = sbr.rel (0) target = $region69
    $region68: #{forward.1} parent=1 // pred_region
      %123 = dma.done [#allocation3], 16
    $region69: #{forward.1} parent=1 // pred_fallthru
      _
    // Predicated region
    $region70: #{forward.1} parent=1 // pred_check
      _
    $region71: #{forward.1} parent=1 // pred_check_branch
      %125 = sbr.rel (0) target = $region73
    $region72: #{forward.1} parent=1 // pred_region
      %126 = dma.done [#allocation5], 16
    $region73: #{forward.1} parent=1 // pred_fallthru
      _
    // Predicated region
    $region74: #{forward.1} parent=1 // pred_check
      _
    $region75: #{forward.1} parent=1 // pred_check_branch
      %128 = sbr.rel (0) target = $region77
    $region76: #{forward.1} parent=1 // pred_region
      %129 = dma.done [#allocation5], 512
    $region77: #{forward.1} parent=1 // pred_fallthru
      _
    // Predicated region
    $region78: #{forward.1} parent=1 // pred_check
      _
    $region79: #{forward.1} parent=1 // pred_check_branch
      %131 = sbr.rel (0) target = $region81
    $region80: #{forward.1} parent=1 // pred_region
      %132 = dma.done [#allocation8], 512
    $region81: #{forward.1} parent=1 // pred_fallthru
      _
    // Predicated region
    $region82: #{forward.1} parent=1 // pred_check
      _
    $region83: #{forward.1} parent=1 // pred_check_branch
      %134 = sbr.rel (0) target = $region85
    $region84: #{forward.1} parent=1 // pred_region
      %135 = dma.done [#allocation8], 32
    $region85: #{forward.1} parent=1 // pred_fallthru
      _
    // Predicated region
    $region86: #{forward.1} parent=1 // pred_check
      _
    $region87: #{forward.1} parent=1 // pred_check_branch
      %137 = sbr.rel (0) target = $region89
    $region88: #{forward.1} parent=1 // pred_region
      %138 = dma.done [#allocation11], 32
    $region89: #{forward.1} parent=1 // pred_fallthru
      _
    // Predicated region
    $region90: #{forward.1} parent=1 // pred_check
      _
    $region91: #{forward.1} parent=1 // pred_check_branch
      %140 = sbr.rel (0) target = $region93
    $region92: #{forward.1} parent=1 // pred_region
      %141 = dma.done [#allocation11], 16
    $region93: #{forward.1} parent=1 // pred_fallthru
      _
    %v142 = vld [vmem:[%s0] sm:$0xff]
    %v143 = vld [vmem:[%s0 + $0x8] sm:$0xff]
    %v144 = vld [vmem:[%s0 + $0x10] sm:$0xff]
    %v145 = vld [vmem:[%s0 + $0x18] sm:$0xff]
    %v146 = vld [vmem:[%s0 + $0x20] sm:$0xff]
    %v147 = vld [vmem:[%s0 + $0x28] sm:$0xff]
    %v148 = vlaneseq
    %v149 = vand.u32 %v148, 127
    %150 = vset.pattern.permute.xlu0 0
    %151 = vperm.xlu0 %150, %v142
    %v152 = vpop.permute.xlu0 %151
    %153 = vset.pattern.permute.xlu0 0
    %154 = vperm.xlu0 %153, %v143
    %v155 = vpop.permute.xlu0 %154
    %156 = vset.pattern.permute.xlu0 0
    %157 = vperm.xlu0 %156, %v144
    %v158 = vpop.permute.xlu0 %157
    %159 = vset.pattern.permute.xlu0 0
    %160 = vperm.xlu0 %159, %v145
    %v161 = vpop.permute.xlu0 %160
    %162 = vset.pattern.permute.xlu0 0
    %163 = vperm.xlu0 %162, %v146
    %v164 = vpop.permute.xlu0 %163
    %165 = vset.pattern.permute.xlu0 0
    %166 = vperm.xlu0 %165, %v147
    %v167 = vpop.permute.xlu0 %166
    %vm168 = vcmp.eq.s32.totalorder %v152, %v149
    %vm169 = vcmp.eq.s32.totalorder %v155, %v149
    %vm170 = vcmp.eq.s32.totalorder %v158, %v149
    %vm171 = vcmp.eq.s32.totalorder %v161, %v149
    %vm172 = vcmp.eq.s32.totalorder %v164, %v149
    %vm173 = vcmp.eq.s32.totalorder %v167, %v149
    %v174 = vsel %vm168, 1, 0
    %v175 = vsel %vm169, 1, 0
    %v176 = vsel %vm170, 1, 0
    %v177 = vsel %vm171, 1, 0
    %v178 = vsel %vm172, 1, 0
    %v179 = vsel %vm173, 1, 0
    %v180 = vcvt.s32.f32 %v174
    %v181 = vcvt.s32.f32 %v175
    %v182 = vcvt.s32.f32 %v176
    %v183 = vcvt.s32.f32 %v177
    %v184 = vcvt.s32.f32 %v178
    %v185 = vcvt.s32.f32 %v179
    %v186 = vld [vmem:[%s4] sm:$0xff]
    %v187 = vld [vmem:[%s4 + $0x8] sm:$0xff]
    %v188 = vld [vmem:[%s4 + $0x10] sm:$0xff]
    %v189 = vld [vmem:[%s4 + $0x18] sm:$0xff]
    %v190 = vld [vmem:[%s4 + $0x20] sm:$0xff]
    %v191 = vld [vmem:[%s4 + $0x28] sm:$0xff]
    %v192 = vld [vmem:[%s4 + $0x30] sm:$0xff]
    %v193 = vld [vmem:[%s4 + $0x38] sm:$0xff]
    %vm194 = vcmask 523264
    %v196 = vsel %vm194, %v180, 0
    %v199 = vsel %vm194, %v181, 0
    %v202 = vsel %vm194, %v182, 0
    %v205 = vsel %vm194, %v183, 0
    %v208 = vsel %vm194, %v184, 0
    %v211 = vsel %vm194, %v185, 0
    %213 = vmatprep.subr.mxu0 0.0
    %214 = vmatpush1.msra.mxu0 %v186
    %215 = vmatprep.subr.mxu0 0.0
    %216 = vmatpush1.msra.mxu0 %v187
    %217 = vmatprep.subr.mxu0 0.0
    %218 = vmatpush1.msra.mxu0 %v188
    %219 = vmatprep.subr.mxu0 0.0
    %220 = vmatpush1.msra.mxu0 %v189
    %221 = vmatprep.subr.mxu0 0.0
    %222 = vmatpush1.msra.mxu0 %v190
    %223 = vmatprep.subr.mxu0 0.0
    %224 = vmatpush1.msra.mxu0 %v191
    %225 = vmatprep.subr.mxu0 0.0
    %226 = vmatpush1.msra.mxu0 %v192
    %227 = vmatprep.subr.mxu0 0.0
    %228 = vmatpush1.msra.mxu0 %v193
    %229 = vmatprep.subr.mxu0 0.0
    %230 = vmatpush1.msra.mxu0 0.0
    %231 = vmatprep.subr.mxu0 0.0
    %232 = vmatpush1.msra.mxu0 0.0
    %233 = vmatprep.subr.mxu0 0.0
    %234 = vmatpush1.msra.mxu0 0.0
    %235 = vmatprep.subr.mxu0 0.0
    %236 = vmatpush1.msra.mxu0 0.0
    %237 = vmatprep.subr.mxu0 0.0
    %238 = vmatpush1.msra.mxu0 0.0
    %239 = vmatprep.subr.mxu0 0.0
    %240 = vmatpush1.msra.mxu0 0.0
    %241 = vmatprep.subr.mxu0 0.0
    %242 = vmatpush1.msra.mxu0 0.0
    %243 = vmatprep.subr.mxu0 0.0
    %244 = vmatpush1.msra.mxu0 0.0
    %245 = vmatprep.subr.mxu0 0.0
    %246 = vmatpush1.msra.mxu0 0.0
    %247 = vmatprep.subr.mxu0 0.0
    %248 = vmatpush1.msra.mxu0 0.0
    %249 = vmatprep.subr.mxu0 0.0
    %250 = vmatpush1.msra.mxu0 0.0
    %251 = vmatprep.subr.mxu0 0.0
    %252 = vmatpush1.msra.mxu0 0.0
    %253 = vmatprep.subr.mxu0 0.0
    %254 = vmatpush1.msra.mxu0 0.0
    %255 = vmatprep.subr.mxu0 0.0
    %256 = vmatpush1.msra.mxu0 0.0
    %257 = vmatprep.subr.mxu0 0.0
    %258 = vmatpush1.msra.mxu0 0.0
    %259 = vmatprep.subr.mxu0 0.0
    %260 = vmatpush1.msra.mxu0 0.0
    %261 = vmatprep.subr.mxu0 0.0
    %262 = vmatpush1.msra.mxu0 0.0
    %263 = vmatprep.subr.mxu0 0.0
    %264 = vmatpush1.msra.mxu0 0.0
    %265 = vmatprep.subr.mxu0 0.0
    %266 = vmatpush1.msra.mxu0 0.0
    %267 = vmatprep.subr.mxu0 0.0
    %268 = vmatpush1.msra.mxu0 0.0
    %269 = vmatprep.subr.mxu0 0.0
    %270 = vmatpush1.msra.mxu0 0.0
    %271 = vmatprep.subr.mxu0 0.0
    %272 = vmatpush1.msra.mxu0 0.0
    %273 = vmatprep.subr.mxu0 0.0
    %274 = vmatpush1.msra.mxu0 0.0
    %275 = vmatprep.subr.mxu0 0.0
    %276 = vmatpush1.msra.mxu0 0.0
    %277 = vmatprep.mubr.f32.mxu0 0.0
    %278 = vmatmul.mubr.f32.gmra.mrb[0].mxu0 %v196
    %v279 = vpop.f32.mrb[0].mxu0
    %v280 = vadd.f32 0.0, %v279
    %v281 = vpop.f32.mrb[0].mxu0
    %282 = vmatprep.mubr.f32.mxu0 0.0
    %283 = vmatmul.mubr.f32.gmra.mrb[0].mxu0 %v199
    %v284 = vpop.f32.mrb[0].mxu0
    %v285 = vadd.f32 0.0, %v284
    %v286 = vpop.f32.mrb[0].mxu0
    %287 = vmatprep.mubr.f32.mxu0 0.0
    %288 = vmatmul.mubr.f32.gmra.mrb[0].mxu0 %v202
    %v289 = vpop.f32.mrb[0].mxu0
    %v290 = vadd.f32 0.0, %v289
    %v291 = vpop.f32.mrb[0].mxu0
    %292 = vmatprep.mubr.f32.mxu0 0.0
    %293 = vmatmul.mubr.f32.gmra.mrb[0].mxu0 %v205
    %v294 = vpop.f32.mrb[0].mxu0
    %v295 = vadd.f32 0.0, %v294
    %v296 = vpop.f32.mrb[0].mxu0
    %297 = vmatprep.mubr.f32.mxu0 0.0
    %298 = vmatmul.mubr.f32.gmra.mrb[0].mxu0 %v208
    %v299 = vpop.f32.mrb[0].mxu0
    %v300 = vadd.f32 0.0, %v299
    %v301 = vpop.f32.mrb[0].mxu0
    %302 = vmatprep.mubr.f32.mxu0 0.0
    %303 = vmatmul.mubr.f32.gmra.mrb[0].mxu0 %v211
    %v304 = vpop.f32.mrb[0].mxu0
    %v305 = vadd.f32 0.0, %v304
    %v306 = vpop.f32.mrb[0].mxu0
    %307 = vdwg.mxu0
    %v308 = vld [vmem:[%s5] sm:$0xff]
    %v309 = vld [vmem:[%s5 + $0x8] sm:$0xff]
    %v310 = vld [vmem:[%s5 + $0x10] sm:$0xff]
    %v311 = vld [vmem:[%s5 + $0x18] sm:$0xff]
    %v312 = vld [vmem:[#allocation2] sm:$0x1]
    %v314 = vlaneseq
    %v315 = vshrl.u32 %v314, 7
    %v316 = vsub.s32 0, %v315
    %v317 = vrot.slane %v312, %v316
    %vm319 = vcmask 261120
    %v321 = vsel %vm319, %v280, 0
    %v324 = vsel %vm319, %v285, 0
    %v327 = vsel %vm319, %v290, 0
    %v330 = vsel %vm319, %v295, 0
    %332 = vmatprep.subr.mxu0 0.0
    %333 = vmatpush1.msra.mxu0 %v308
    %334 = vmatprep.subr.mxu0 0.0
    %335 = vmatpush1.msra.mxu0 %v309
    %336 = vmatprep.subr.mxu0 0.0
    %337 = vmatpush1.msra.mxu0 %v310
    %338 = vmatprep.subr.mxu0 0.0
    %339 = vmatpush1.msra.mxu0 %v311
    %340 = vmatprep.subr.mxu0 0.0
    %341 = vmatpush1.msra.mxu0 0.0
    %342 = vmatprep.subr.mxu0 0.0
    %343 = vmatpush1.msra.mxu0 0.0
    %344 = vmatprep.subr.mxu0 0.0
    %345 = vmatpush1.msra.mxu0 0.0
    %346 = vmatprep.subr.mxu0 0.0
    %347 = vmatpush1.msra.mxu0 0.0
    %348 = vmatprep.subr.mxu0 0.0
    %349 = vmatpush1.msra.mxu0 0.0
    %350 = vmatprep.subr.mxu0 0.0
    %351 = vmatpush1.msra.mxu0 0.0
    %352 = vmatprep.subr.mxu0 0.0
    %353 = vmatpush1.msra.mxu0 0.0
    %354 = vmatprep.subr.mxu0 0.0
    %355 = vmatpush1.msra.mxu0 0.0
    %356 = vmatprep.subr.mxu0 0.0
    %357 = vmatpush1.msra.mxu0 0.0
    %358 = vmatprep.subr.mxu0 0.0
    %359 = vmatpush1.msra.mxu0 0.0
    %360 = vmatprep.subr.mxu0 0.0
    %361 = vmatpush1.msra.mxu0 0.0
    %362 = vmatprep.subr.mxu0 0.0
    %363 = vmatpush1.msra.mxu0 0.0
    %364 = vmatprep.subr.mxu0 0.0
    %365 = vmatpush1.msra.mxu0 0.0
    %366 = vmatprep.subr.mxu0 0.0
    %367 = vmatpush1.msra.mxu0 0.0
    %368 = vmatprep.subr.mxu0 0.0
    %369 = vmatpush1.msra.mxu0 0.0
    %370 = vmatprep.subr.mxu0 0.0
    %371 = vmatpush1.msra.mxu0 0.0
    %372 = vmatprep.subr.mxu0 0.0
    %373 = vmatpush1.msra.mxu0 0.0
    %374 = vmatprep.subr.mxu0 0.0
    %375 = vmatpush1.msra.mxu0 0.0
    %376 = vmatprep.subr.mxu0 0.0
    %377 = vmatpush1.msra.mxu0 0.0
    %378 = vmatprep.subr.mxu0 0.0
    %379 = vmatpush1.msra.mxu0 0.0
    %380 = vmatprep.subr.mxu0 0.0
    %381 = vmatpush1.msra.mxu0 0.0
    %382 = vmatprep.subr.mxu0 0.0
    %383 = vmatpush1.msra.mxu0 0.0
    %384 = vmatprep.subr.mxu0 0.0
    %385 = vmatpush1.msra.mxu0 0.0
    %386 = vmatprep.subr.mxu0 0.0
    %387 = vmatpush1.msra.mxu0 0.0
    %388 = vmatprep.subr.mxu0 0.0
    %389 = vmatpush1.msra.mxu0 0.0
    %390 = vmatprep.subr.mxu0 0.0
    %391 = vmatpush1.msra.mxu0 0.0
    %392 = vmatprep.subr.mxu0 0.0
    %393 = vmatpush1.msra.mxu0 0.0
    %394 = vmatprep.subr.mxu0 0.0
    %395 = vmatpush1.msra.mxu0 0.0
    %396 = vmatprep.mubr.f32.mxu0 0.0
    %397 = vmatmul.mubr.f32.gmra.mrb[0].mxu0 %v321
    %v398 = vpop.f32.mrb[0].mxu0
    %v399 = vadd.f32 %v317, %v398
    %v400 = vpop.f32.mrb[0].mxu0
    %401 = vmatprep.mubr.f32.mxu0 0.0
    %402 = vmatmul.mubr.f32.gmra.mrb[0].mxu0 %v324
    %v403 = vpop.f32.mrb[0].mxu0
    %v404 = vadd.f32 %v317, %v403
    %v405 = vpop.f32.mrb[0].mxu0
    %406 = vmatprep.mubr.f32.mxu0 0.0
    %407 = vmatmul.mubr.f32.gmra.mrb[0].mxu0 %v327
    %v408 = vpop.f32.mrb[0].mxu0
    %v409 = vadd.f32 %v317, %v408
    %v410 = vpop.f32.mrb[0].mxu0
    %411 = vmatprep.mubr.f32.mxu0 0.0
    %412 = vmatmul.mubr.f32.gmra.mrb[0].mxu0 %v330
    %v413 = vpop.f32.mrb[0].mxu0
    %v414 = vadd.f32 %v317, %v413
    %v415 = vpop.f32.mrb[0].mxu0
    %416 = vdwg.mxu0
    %v417 = vld [vmem:[%s1] sm:$0x3]
    %418 = vset.pattern.permute.xlu0 0
    %419 = vperm.xlu0 %418, %v417
    %v420 = vpop.permute.xlu0 %419
    %vm421 = vcmp.eq.s32.totalorder %v420, %v149
    %v422 = vsel %vm421, 1, 0
    %v423 = vcvt.s32.f32 %v422
    %v424 = vld [vmem:[%s3] sm:$0x3]
    %v425 = vmul.f32 %v423, %v424
    %vm426 = vcmask 123904
    %v427 = vsel %vm426, %v425, 0.0
    %428 = vadd.xlane.f32.xlu0 %v427
    %v429 = vpop.xlane.xlu0 %428
    %v430 = vlaneseq
    %v431 = vshrl.u32 %v430, 7
    %v432 = vsub.s32 0, %v431
    %v433 = vrot.slane %v423, %v432
    %435 = vbcast.lane.b32.xlu0 %v433, 256
    %v436 = vpop.permute.xlu0 %435
    %s438 = sor.u32 256, 8
    %439 = vbcast.lane.b32.xlu0 %v433, %s438
    %v440 = vpop.permute.xlu0 %439
    %v441 = vlaneseq
    %v442 = vshrl.u32 %v441, 7
    %v443 = vsub.s32 1, %v442
    %v444 = vrot.slane %v423, %v443
    %446 = vbcast.lane.b32.xlu0 %v444, 256
    %v447 = vpop.permute.xlu0 %446
    %s449 = sor.u32 256, 8
    %450 = vbcast.lane.b32.xlu0 %v444, %s449
    %v451 = vpop.permute.xlu0 %450
    %v452 = vld [vmem:[%s2] sm:$0xff]
    %v453 = vld [vmem:[%s2 + $0x8] sm:$0xff]
    %v454 = vld [vmem:[%s2 + $0x10] sm:$0xff]
    %v455 = vld [vmem:[%s2 + $0x18] sm:$0xff]
    %v456 = vmul.f32 %v436, %v452
    %v457 = vmul.f32 %v440, %v453
    %v458 = vmul.f32 %v447, %v454
    %v459 = vmul.f32 %v451, %v455
    %vm460 = vcmask 130048
    %v461 = vsel %vm460, %v456, 0.0
    %v462 = vsel %vm460, %v457, 0.0
    %v463 = vadd.f32 %v461, %v462
    %v464 = vrot.slane %v463, 4
    %v465 = vadd.f32 %v463, %v464
    %v466 = vrot.slane %v465, 2
    %v467 = vadd.f32 %v465, %v466
    %v468 = vrot.slane %v467, 1
    %v469 = vadd.f32 %v467, %v468
    %v470 = vsel %vm460, %v458, 0.0
    %v471 = vsel %vm460, %v459, 0.0
    %v472 = vadd.f32 %v470, %v471
    %v473 = vrot.slane %v472, 4
    %v474 = vadd.f32 %v472, %v473
    %v475 = vrot.slane %v474, 2
    %v476 = vadd.f32 %v474, %v475
    %v477 = vrot.slane %v476, 1
    %v478 = vadd.f32 %v476, %v477
    %480 = vbcast.lane.b32.xlu0 %v469, 256
    %v481 = vpop.permute.xlu0 %480
    %s483 = sor.u32 256, 8
    %484 = vbcast.lane.b32.xlu0 %v469, %s483
    %v485 = vpop.permute.xlu0 %484
    %487 = vbcast.lane.b32.xlu0 %v478, 256
    %v488 = vpop.permute.xlu0 %487
    %s490 = sor.u32 256, 8
    %491 = vbcast.lane.b32.xlu0 %v478, %s490
    %v492 = vpop.permute.xlu0 %491
    %v493 = vmul.f32 %v481, %v399
    %v494 = vmul.f32 %v485, %v404
    %v495 = vmul.f32 %v488, %v409
    %v496 = vmul.f32 %v492, %v414
    %v497 = vsel %vm319, %v493, 0.0
    %v498 = vsel %vm319, %v494, 0.0
    %v499 = vadd.f32 %v497, %v498
    %v500 = vrot.slane %v499, 4
    %v501 = vadd.f32 %v499, %v500
    %v502 = vrot.slane %v501, 2
    %v503 = vadd.f32 %v501, %v502
    %v504 = vrot.slane %v503, 1
    %v505 = vadd.f32 %v503, %v504
    %v506 = vsel %vm319, %v495, 0.0
    %v507 = vsel %vm319, %v496, 0.0
    %v508 = vadd.f32 %v506, %v507
    %v509 = vrot.slane %v508, 4
    %v510 = vadd.f32 %v508, %v509
    %v511 = vrot.slane %v510, 2
    %v512 = vadd.f32 %v510, %v511
    %v513 = vrot.slane %v512, 1
    %v514 = vadd.f32 %v512, %v513
    %v515 = vtanh.pop %v505
    %v516 = vtanh.pop %v514
    %v518 = vrot.slane %v429, 1
    %v521 = vmul.f32 %v515, %v429
    %v522 = vmul.f32 %v516, %v518
    %v523 = vld [vmem:[%s7] sm:$0xff]
    %v524 = vld [vmem:[%s7 + $0x8] sm:$0xff]
    %v525 = vld [vmem:[%s7 + $0x10] sm:$0xff]
    %v526 = vld [vmem:[%s7 + $0x18] sm:$0xff]
    %v527 = vld [vmem:[#allocation4] sm:$0x1]
    %v529 = vlaneseq
    %v530 = vshrl.u32 %v529, 7
    %v531 = vsub.s32 0, %v530
    %v532 = vrot.slane %v527, %v531
    %v536 = vrot.slane %v522, 7
    %vm537 = vcmask 1041409
    %v538 = vsel %vm537, %v536, %v521
    %v539 = vsel %vm319, %v538, 0
    %541 = vmatprep.subr.mxu0 0.0
    %542 = vmatpush1.msra.mxu0 %v523
    %543 = vmatprep.subr.mxu0 0.0
    %544 = vmatpush1.msra.mxu0 %v524
    %545 = vmatprep.subr.mxu0 0.0
    %546 = vmatpush1.msra.mxu0 %v525
    %547 = vmatprep.subr.mxu0 0.0
    %548 = vmatpush1.msra.mxu0 %v526
    %549 = vmatprep.subr.mxu0 0.0
    %550 = vmatpush1.msra.mxu0 0.0
    %551 = vmatprep.subr.mxu0 0.0
    %552 = vmatpush1.msra.mxu0 0.0
    %553 = vmatprep.subr.mxu0 0.0
    %554 = vmatpush1.msra.mxu0 0.0
    %555 = vmatprep.subr.mxu0 0.0
    %556 = vmatpush1.msra.mxu0 0.0
    %557 = vmatprep.subr.mxu0 0.0
    %558 = vmatpush1.msra.mxu0 0.0
    %559 = vmatprep.subr.mxu0 0.0
    %560 = vmatpush1.msra.mxu0 0.0
    %561 = vmatprep.subr.mxu0 0.0
    %562 = vmatpush1.msra.mxu0 0.0
    %563 = vmatprep.subr.mxu0 0.0
    %564 = vmatpush1.msra.mxu0 0.0
    %565 = vmatprep.subr.mxu0 0.0
    %566 = vmatpush1.msra.mxu0 0.0
    %567 = vmatprep.subr.mxu0 0.0
    %568 = vmatpush1.msra.mxu0 0.0
    %569 = vmatprep.subr.mxu0 0.0
    %570 = vmatpush1.msra.mxu0 0.0
    %571 = vmatprep.subr.mxu0 0.0
    %572 = vmatpush1.msra.mxu0 0.0
    %573 = vmatprep.subr.mxu0 0.0
    %574 = vmatpush1.msra.mxu0 0.0
    %575 = vmatprep.subr.mxu0 0.0
    %576 = vmatpush1.msra.mxu0 0.0
    %577 = vmatprep.subr.mxu0 0.0
    %578 = vmatpush1.msra.mxu0 0.0
    %579 = vmatprep.subr.mxu0 0.0
    %580 = vmatpush1.msra.mxu0 0.0
    %581 = vmatprep.subr.mxu0 0.0
    %582 = vmatpush1.msra.mxu0 0.0
    %583 = vmatprep.subr.mxu0 0.0
    %584 = vmatpush1.msra.mxu0 0.0
    %585 = vmatprep.subr.mxu0 0.0
    %586 = vmatpush1.msra.mxu0 0.0
    %587 = vmatprep.subr.mxu0 0.0
    %588 = vmatpush1.msra.mxu0 0.0
    %589 = vmatprep.subr.mxu0 0.0
    %590 = vmatpush1.msra.mxu0 0.0
    %591 = vmatprep.subr.mxu0 0.0
    %592 = vmatpush1.msra.mxu0 0.0
    %593 = vmatprep.subr.mxu0 0.0
    %594 = vmatpush1.msra.mxu0 0.0
    %595 = vmatprep.subr.mxu0 0.0
    %596 = vmatpush1.msra.mxu0 0.0
    %597 = vmatprep.subr.mxu0 0.0
    %598 = vmatpush1.msra.mxu0 0.0
    %599 = vmatprep.subr.mxu0 0.0
    %600 = vmatpush1.msra.mxu0 0.0
    %601 = vmatprep.subr.mxu0 0.0
    %602 = vmatpush1.msra.mxu0 0.0
    %603 = vmatprep.subr.mxu0 0.0
    %604 = vmatpush1.msra.mxu0 0.0
    %605 = vmatprep.mubr.f32.mxu0 0.0
    %606 = vmatmul.mubr.f32.gmra.mrb[0].mxu0 %v539
    %v607 = vpop.f32.mrb[0].mxu0
    %v608 = vadd.f32 %v532, %v607
    %v609 = vpop.f32.mrb[0].mxu0
    %610 = vdwg.mxu0
    %v611 = vtanh.pop %v608
    %v612 = vld [vmem:[#allocation6] sm:$0xff]
    %v613 = vld [vmem:[#allocation6 + $0x8] sm:$0xff]
    %v614 = vld [vmem:[#allocation6 + $0x10] sm:$0xff]
    %v615 = vld [vmem:[#allocation6 + $0x18] sm:$0xff]
    %v616 = vld [vmem:[#allocation9] sm:$0x1]
    %v618 = vlaneseq
    %v619 = vshrl.u32 %v618, 7
    %v620 = vsub.s32 0, %v619
    %v621 = vrot.slane %v616, %v620
    %v624 = vsel %vm319, %v300, 0
    %v627 = vsel %vm319, %v305, 0
    %629 = vmatprep.subr.mxu0 0.0
    %630 = vmatpush1.msra.mxu0 %v612
    %631 = vmatprep.subr.mxu0 0.0
    %632 = vmatpush1.msra.mxu0 %v613
    %633 = vmatprep.subr.mxu0 0.0
    %634 = vmatpush1.msra.mxu0 %v614
    %635 = vmatprep.subr.mxu0 0.0
    %636 = vmatpush1.msra.mxu0 %v615
    %637 = vmatprep.subr.mxu0 0.0
    %638 = vmatpush1.msra.mxu0 0.0
    %639 = vmatprep.subr.mxu0 0.0
    %640 = vmatpush1.msra.mxu0 0.0
    %641 = vmatprep.subr.mxu0 0.0
    %642 = vmatpush1.msra.mxu0 0.0
    %643 = vmatprep.subr.mxu0 0.0
    %644 = vmatpush1.msra.mxu0 0.0
    %645 = vmatprep.subr.mxu0 0.0
    %646 = vmatpush1.msra.mxu0 0.0
    %647 = vmatprep.subr.mxu0 0.0
    %648 = vmatpush1.msra.mxu0 0.0
    %649 = vmatprep.subr.mxu0 0.0
    %650 = vmatpush1.msra.mxu0 0.0
    %651 = vmatprep.subr.mxu0 0.0
    %652 = vmatpush1.msra.mxu0 0.0
    %653 = vmatprep.subr.mxu0 0.0
    %654 = vmatpush1.msra.mxu0 0.0
    %655 = vmatprep.subr.mxu0 0.0
    %656 = vmatpush1.msra.mxu0 0.0
    %657 = vmatprep.subr.mxu0 0.0
    %658 = vmatpush1.msra.mxu0 0.0
    %659 = vmatprep.subr.mxu0 0.0
    %660 = vmatpush1.msra.mxu0 0.0
    %661 = vmatprep.subr.mxu0 0.0
    %662 = vmatpush1.msra.mxu0 0.0
    %663 = vmatprep.subr.mxu0 0.0
    %664 = vmatpush1.msra.mxu0 0.0
    %665 = vmatprep.subr.mxu0 0.0
    %666 = vmatpush1.msra.mxu0 0.0
    %667 = vmatprep.subr.mxu0 0.0
    %668 = vmatpush1.msra.mxu0 0.0
    %669 = vmatprep.subr.mxu0 0.0
    %670 = vmatpush1.msra.mxu0 0.0
    %671 = vmatprep.subr.mxu0 0.0
    %672 = vmatpush1.msra.mxu0 0.0
    %673 = vmatprep.subr.mxu0 0.0
    %674 = vmatpush1.msra.mxu0 0.0
    %675 = vmatprep.subr.mxu0 0.0
    %676 = vmatpush1.msra.mxu0 0.0
    %677 = vmatprep.subr.mxu0 0.0
    %678 = vmatpush1.msra.mxu0 0.0
    %679 = vmatprep.subr.mxu0 0.0
    %680 = vmatpush1.msra.mxu0 0.0
    %681 = vmatprep.subr.mxu0 0.0
    %682 = vmatpush1.msra.mxu0 0.0
    %683 = vmatprep.subr.mxu0 0.0
    %684 = vmatpush1.msra.mxu0 0.0
    %685 = vmatprep.subr.mxu0 0.0
    %686 = vmatpush1.msra.mxu0 0.0
    %687 = vmatprep.subr.mxu0 0.0
    %688 = vmatpush1.msra.mxu0 0.0
    %689 = vmatprep.subr.mxu0 0.0
    %690 = vmatpush1.msra.mxu0 0.0
    %691 = vmatprep.subr.mxu0 0.0
    %692 = vmatpush1.msra.mxu0 0.0
    %693 = vmatprep.mubr.f32.mxu0 0.0
    %694 = vmatmul.mubr.f32.gmra.mrb[0].mxu0 %v624
    %v695 = vpop.f32.mrb[0].mxu0
    %v696 = vadd.f32 %v621, %v695
    %v697 = vpop.f32.mrb[0].mxu0
    %698 = vmatprep.mubr.f32.mxu0 0.0
    %699 = vmatmul.mubr.f32.gmra.mrb[0].mxu0 %v627
    %v700 = vpop.f32.mrb[0].mxu0
    %v701 = vadd.f32 %v621, %v700
    %v702 = vpop.f32.mrb[0].mxu0
    %703 = vdwg.mxu0
    %v704 = vld [vmem:[#allocation10] sm:$0x1]
    %v706 = vlaneseq
    %v707 = vshrl.u32 %v706, 7
    %v708 = vsub.s32 0, %v707
    %v709 = vrot.slane %v704, %v708
    %s711 = scalar_lea.vmem [#allocation10], 1
    %v712 = vld [vmem:[%s711] sm:$0x1]
    %v714 = vlaneseq
    %v715 = vshrl.u32 %v714, 7
    %v716 = vsub.s32 0, %v715
    %v717 = vrot.slane %v712, %v716
    %s719 = scalar_lea.vmem [#allocation9], 1
    %v720 = vld [vmem:[%s719] sm:$0x1]
    %v722 = vlaneseq
    %v723 = vshrl.u32 %v722, 7
    %v724 = vsub.s32 0, %v723
    %v725 = vrot.slane %v720, %v724
    %v727 = vld [vmem:[%s11] sm:$0xff]
    %v728 = vld [vmem:[%s11 + $0x8] sm:$0xff]
    %v729 = vld [vmem:[%s11 + $0x10] sm:$0xff]
    %v730 = vld [vmem:[%s11 + $0x18] sm:$0xff]
    %s731 = scalar_lea.vmem %s11, 32
    %v732 = vld [vmem:[%s731] sm:$0xff]
    %v733 = vld [vmem:[%s731 + $0x8] sm:$0xff]
    %v734 = vld [vmem:[%s731 + $0x10] sm:$0xff]
    %v735 = vld [vmem:[%s731 + $0x18] sm:$0xff]
    %v736 = vld [vmem:[#allocation7] sm:$0xff]
    %v737 = vld [vmem:[#allocation7 + $0x8] sm:$0xff]
    %v738 = vld [vmem:[#allocation7 + $0x10] sm:$0xff]
    %v739 = vld [vmem:[#allocation7 + $0x18] sm:$0xff]
    %v741 = vsel %vm319, %v611, 0
    %743 = vmatprep.subr.mxu0 0.0
    %744 = vmatpush1.msra.mxu0 %v727
    %745 = vmatprep.subr.mxu0 0.0
    %746 = vmatpush1.msra.mxu0 %v728
    %747 = vmatprep.subr.mxu0 0.0
    %748 = vmatpush1.msra.mxu0 %v729
    %749 = vmatprep.subr.mxu0 0.0
    %750 = vmatpush1.msra.mxu0 %v730
    %751 = vmatprep.subr.mxu0 0.0
    %752 = vmatpush1.msra.mxu0 0.0
    %753 = vmatprep.subr.mxu0 0.0
    %754 = vmatpush1.msra.mxu0 0.0
    %755 = vmatprep.subr.mxu0 0.0
    %756 = vmatpush1.msra.mxu0 0.0
    %757 = vmatprep.subr.mxu0 0.0
    %758 = vmatpush1.msra.mxu0 0.0
    %759 = vmatprep.subr.mxu0 0.0
    %760 = vmatpush1.msra.mxu0 0.0
    %761 = vmatprep.subr.mxu0 0.0
    %762 = vmatpush1.msra.mxu0 0.0
    %763 = vmatprep.subr.mxu0 0.0
    %764 = vmatpush1.msra.mxu0 0.0
    %765 = vmatprep.subr.mxu0 0.0
    %766 = vmatpush1.msra.mxu0 0.0
    %767 = vmatprep.subr.mxu0 0.0
    %768 = vmatpush1.msra.mxu0 0.0
    %769 = vmatprep.subr.mxu0 0.0
    %770 = vmatpush1.msra.mxu0 0.0
    %771 = vmatprep.subr.mxu0 0.0
    %772 = vmatpush1.msra.mxu0 0.0
    %773 = vmatprep.subr.mxu0 0.0
    %774 = vmatpush1.msra.mxu0 0.0
    %775 = vmatprep.subr.mxu0 0.0
    %776 = vmatpush1.msra.mxu0 0.0
    %777 = vmatprep.subr.mxu0 0.0
    %778 = vmatpush1.msra.mxu0 0.0
    %779 = vmatprep.subr.mxu0 0.0
    %780 = vmatpush1.msra.mxu0 0.0
    %781 = vmatprep.subr.mxu0 0.0
    %782 = vmatpush1.msra.mxu0 0.0
    %783 = vmatprep.subr.mxu0 0.0
    %784 = vmatpush1.msra.mxu0 0.0
    %785 = vmatprep.subr.mxu0 0.0
    %786 = vmatpush1.msra.mxu0 0.0
    %787 = vmatprep.subr.mxu0 0.0
    %788 = vmatpush1.msra.mxu0 0.0
    %789 = vmatprep.subr.mxu0 0.0
    %790 = vmatpush1.msra.mxu0 0.0
    %791 = vmatprep.subr.mxu0 0.0
    %792 = vmatpush1.msra.mxu0 0.0
    %793 = vmatprep.subr.mxu0 0.0
    %794 = vmatpush1.msra.mxu0 0.0
    %795 = vmatprep.subr.mxu0 0.0
    %796 = vmatpush1.msra.mxu0 0.0
    %797 = vmatprep.subr.mxu0 0.0
    %798 = vmatpush1.msra.mxu0 0.0
    %799 = vmatprep.subr.mxu0 0.0
    %800 = vmatpush1.msra.mxu0 0.0
    %801 = vmatprep.subr.mxu0 0.0
    %802 = vmatpush1.msra.mxu0 0.0
    %803 = vmatprep.subr.mxu0 0.0
    %804 = vmatpush1.msra.mxu0 0.0
    %805 = vmatprep.subr.mxu0 0.0
    %806 = vmatpush1.msra.mxu0 0.0
    %807 = vmatprep.mubr.f32.mxu0 0.0
    %808 = vmatmul.mubr.f32.gmra.mrb[0].mxu0 %v741
    %v809 = vpop.f32.mrb[0].mxu0
    %v810 = vadd.f32 %v709, %v809
    %v811 = vpop.f32.mrb[0].mxu0
    %812 = vdwg.mxu0
    %v813 = vadd.f32 %v696, %v810
    %v814 = vxor.u32 %v813, 2147483648
    %v815 = vmul.f32 %v814, 1.442695
    %v816 = vpow.pop %v815
    %v817 = vadd.f32 %v816, 1.0
    %v818 = vrcp.pop %v817
    %v819 = vmul.f32 1.0, %v818
    %821 = vrot.lane.b32.xlu0 %v810, 64
    %v822 = vpop.permute.xlu0 %821
    %v824 = vmul.f32 %v819, %v822
    %826 = vrot.lane.b32.xlu0 %v824, 64
    %v827 = vpop.permute.xlu0 %826
    %v829 = vadd.f32 %v696, %v827
    %v830 = vtanh.pop %v829
    %v831 = vsub.f32 1.0, %v819
    %833 = vrot.lane.b32.xlu0 %v830, 96
    %v834 = vpop.permute.xlu0 %833
    %v836 = vmul.f32 %v831, %v834
    %837 = vrot.lane.b32.xlu0 %v611, 32
    %v838 = vpop.permute.xlu0 %837
    %v840 = vmul.f32 %v819, %v838
    %v841 = vadd.f32 %v836, %v840
    %843 = vrot.lane.b32.xlu0 %v841, 96
    %v844 = vpop.permute.xlu0 %843
    %v845 = vsel %vm319, %v844, 0
    %847 = vmatprep.subr.mxu0 0.0
    %848 = vmatpush1.msra.mxu0 %v736
    %849 = vmatprep.subr.mxu0 0.0
    %850 = vmatpush1.msra.mxu0 %v737
    %851 = vmatprep.subr.mxu0 0.0
    %852 = vmatpush1.msra.mxu0 %v738
    %853 = vmatprep.subr.mxu0 0.0
    %854 = vmatpush1.msra.mxu0 %v739
    %855 = vmatprep.subr.mxu0 0.0
    %856 = vmatpush1.msra.mxu0 0.0
    %857 = vmatprep.subr.mxu0 0.0
    %858 = vmatpush1.msra.mxu0 0.0
    %859 = vmatprep.subr.mxu0 0.0
    %860 = vmatpush1.msra.mxu0 0.0
    %861 = vmatprep.subr.mxu0 0.0
    %862 = vmatpush1.msra.mxu0 0.0
    %863 = vmatprep.subr.mxu0 0.0
    %864 = vmatpush1.msra.mxu0 0.0
    %865 = vmatprep.subr.mxu0 0.0
    %866 = vmatpush1.msra.mxu0 0.0
    %867 = vmatprep.subr.mxu0 0.0
    %868 = vmatpush1.msra.mxu0 0.0
    %869 = vmatprep.subr.mxu0 0.0
    %870 = vmatpush1.msra.mxu0 0.0
    %871 = vmatprep.subr.mxu0 0.0
    %872 = vmatpush1.msra.mxu0 0.0
    %873 = vmatprep.subr.mxu0 0.0
    %874 = vmatpush1.msra.mxu0 0.0
    %875 = vmatprep.subr.mxu0 0.0
    %876 = vmatpush1.msra.mxu0 0.0
    %877 = vmatprep.subr.mxu0 0.0
    %878 = vmatpush1.msra.mxu0 0.0
    %879 = vmatprep.subr.mxu0 0.0
    %880 = vmatpush1.msra.mxu0 0.0
    %881 = vmatprep.subr.mxu0 0.0
    %882 = vmatpush1.msra.mxu0 0.0
    %883 = vmatprep.subr.mxu0 0.0
    %884 = vmatpush1.msra.mxu0 0.0
    %885 = vmatprep.subr.mxu0 0.0
    %886 = vmatpush1.msra.mxu0 0.0
    %887 = vmatprep.subr.mxu0 0.0
    %888 = vmatpush1.msra.mxu0 0.0
    %889 = vmatprep.subr.mxu0 0.0
    %890 = vmatpush1.msra.mxu0 0.0
    %891 = vmatprep.subr.mxu0 0.0
    %892 = vmatpush1.msra.mxu0 0.0
    %893 = vmatprep.subr.mxu0 0.0
    %894 = vmatpush1.msra.mxu0 0.0
    %895 = vmatprep.subr.mxu0 0.0
    %896 = vmatpush1.msra.mxu0 0.0
    %897 = vmatprep.subr.mxu0 0.0
    %898 = vmatpush1.msra.mxu0 0.0
    %899 = vmatprep.subr.mxu0 0.0
    %900 = vmatpush1.msra.mxu0 0.0
    %901 = vmatprep.subr.mxu0 0.0
    %902 = vmatpush1.msra.mxu0 0.0
    %903 = vmatprep.subr.mxu0 0.0
    %904 = vmatpush1.msra.mxu0 0.0
    %905 = vmatprep.subr.mxu0 0.0
    %906 = vmatpush1.msra.mxu0 0.0
    %907 = vmatprep.subr.mxu0 0.0
    %908 = vmatpush1.msra.mxu0 0.0
    %909 = vmatprep.subr.mxu0 0.0
    %910 = vmatpush1.msra.mxu0 0.0
    %911 = vmatprep.mubr.f32.mxu0 0.0
    %912 = vmatmul.mubr.f32.gmra.mrb[0].mxu0 %v845
    %v913 = vpop.f32.mrb[0].mxu0
    %v914 = vadd.f32 %v725, %v913
    %v915 = vpop.f32.mrb[0].mxu0
    %916 = vdwg.mxu0
    %917 = vrot.lane.b32.xlu0 %v611, 96
    %v918 = vpop.permute.xlu0 %917
    %v919 = vsel %vm319, %v918, 0
    %921 = vmatprep.subr.mxu0 0.0
    %922 = vmatpush1.msra.mxu0 %v732
    %923 = vmatprep.subr.mxu0 0.0
    %924 = vmatpush1.msra.mxu0 %v733
    %925 = vmatprep.subr.mxu0 0.0
    %926 = vmatpush1.msra.mxu0 %v734
    %927 = vmatprep.subr.mxu0 0.0
    %928 = vmatpush1.msra.mxu0 %v735
    %929 = vmatprep.subr.mxu0 0.0
    %930 = vmatpush1.msra.mxu0 0.0
    %931 = vmatprep.subr.mxu0 0.0
    %932 = vmatpush1.msra.mxu0 0.0
    %933 = vmatprep.subr.mxu0 0.0
    %934 = vmatpush1.msra.mxu0 0.0
    %935 = vmatprep.subr.mxu0 0.0
    %936 = vmatpush1.msra.mxu0 0.0
    %937 = vmatprep.subr.mxu0 0.0
    %938 = vmatpush1.msra.mxu0 0.0
    %939 = vmatprep.subr.mxu0 0.0
    %940 = vmatpush1.msra.mxu0 0.0
    %941 = vmatprep.subr.mxu0 0.0
    %942 = vmatpush1.msra.mxu0 0.0
    %943 = vmatprep.subr.mxu0 0.0
    %944 = vmatpush1.msra.mxu0 0.0
    %945 = vmatprep.subr.mxu0 0.0
    %946 = vmatpush1.msra.mxu0 0.0
    %947 = vmatprep.subr.mxu0 0.0
    %948 = vmatpush1.msra.mxu0 0.0
    %949 = vmatprep.subr.mxu0 0.0
    %950 = vmatpush1.msra.mxu0 0.0
    %951 = vmatprep.subr.mxu0 0.0
    %952 = vmatpush1.msra.mxu0 0.0
    %953 = vmatprep.subr.mxu0 0.0
    %954 = vmatpush1.msra.mxu0 0.0
    %955 = vmatprep.subr.mxu0 0.0
    %956 = vmatpush1.msra.mxu0 0.0
    %957 = vmatprep.subr.mxu0 0.0
    %958 = vmatpush1.msra.mxu0 0.0
    %959 = vmatprep.subr.mxu0 0.0
    %960 = vmatpush1.msra.mxu0 0.0
    %961 = vmatprep.subr.mxu0 0.0
    %962 = vmatpush1.msra.mxu0 0.0
    %963 = vmatprep.subr.mxu0 0.0
    %964 = vmatpush1.msra.mxu0 0.0
    %965 = vmatprep.subr.mxu0 0.0
    %966 = vmatpush1.msra.mxu0 0.0
    %967 = vmatprep.subr.mxu0 0.0
    %968 = vmatpush1.msra.mxu0 0.0
    %969 = vmatprep.subr.mxu0 0.0
    %970 = vmatpush1.msra.mxu0 0.0
    %971 = vmatprep.subr.mxu0 0.0
    %972 = vmatpush1.msra.mxu0 0.0
    %973 = vmatprep.subr.mxu0 0.0
    %974 = vmatpush1.msra.mxu0 0.0
    %975 = vmatprep.subr.mxu0 0.0
    %976 = vmatpush1.msra.mxu0 0.0
    %977 = vmatprep.subr.mxu0 0.0
    %978 = vmatpush1.msra.mxu0 0.0
    %979 = vmatprep.subr.mxu0 0.0
    %980 = vmatpush1.msra.mxu0 0.0
    %981 = vmatprep.subr.mxu0 0.0
    %982 = vmatpush1.msra.mxu0 0.0
    %983 = vmatprep.subr.mxu0 0.0
    %984 = vmatpush1.msra.mxu0 0.0
    %985 = vmatprep.mubr.f32.mxu0 0.0
    %986 = vmatmul.mubr.f32.gmra.mrb[0].mxu0 %v919
    %v987 = vpop.f32.mrb[0].mxu0
    %v988 = vadd.f32 %v717, %v987
    %v989 = vpop.f32.mrb[0].mxu0
    %990 = vdwg.mxu0
    %v991 = vadd.f32 %v914, %v988
    %v992 = vxor.u32 %v991, 2147483648
    %v993 = vmul.f32 %v992, 1.442695
    %v994 = vpow.pop %v993
    %v995 = vadd.f32 %v994, 1.0
    %v996 = vrcp.pop %v995
    %v997 = vmul.f32 1.0, %v996
    %999 = vrot.lane.b32.xlu0 %v988, 64
    %v1000 = vpop.permute.xlu0 %999
    %v1002 = vmul.f32 %v997, %v1000
    %1004 = vrot.lane.b32.xlu0 %v1002, 64
    %v1005 = vpop.permute.xlu0 %1004
    %v1007 = vadd.f32 %v914, %v1005
    %v1008 = vtanh.pop %v1007
    %v1009 = vsub.f32 1.0, %v997
    %1011 = vrot.lane.b32.xlu0 %v1008, 96
    %v1012 = vpop.permute.xlu0 %1011
    %v1014 = vmul.f32 %v1009, %v1012
    %v1015 = vmul.f32 %v997, %v611
    %v1016 = vadd.f32 %v1014, %v1015
    %1017 = vmatprep.subr.mxu0 0.0
    %1018 = vmatpush1.msra.mxu0 %v727
    %1019 = vmatprep.subr.mxu0 0.0
    %1020 = vmatpush1.msra.mxu0 %v728
    %1021 = vmatprep.subr.mxu0 0.0
    %1022 = vmatpush1.msra.mxu0 %v729
    %1023 = vmatprep.subr.mxu0 0.0
    %1024 = vmatpush1.msra.mxu0 %v730
    %1025 = vmatprep.subr.mxu0 0.0
    %1026 = vmatpush1.msra.mxu0 0.0
    %1027 = vmatprep.subr.mxu0 0.0
    %1028 = vmatpush1.msra.mxu0 0.0
    %1029 = vmatprep.subr.mxu0 0.0
    %1030 = vmatpush1.msra.mxu0 0.0
    %1031 = vmatprep.subr.mxu0 0.0
    %1032 = vmatpush1.msra.mxu0 0.0
    %1033 = vmatprep.subr.mxu0 0.0
    %1034 = vmatpush1.msra.mxu0 0.0
    %1035 = vmatprep.subr.mxu0 0.0
    %1036 = vmatpush1.msra.mxu0 0.0
    %1037 = vmatprep.subr.mxu0 0.0
    %1038 = vmatpush1.msra.mxu0 0.0
    %1039 = vmatprep.subr.mxu0 0.0
    %1040 = vmatpush1.msra.mxu0 0.0
    %1041 = vmatprep.subr.mxu0 0.0
    %1042 = vmatpush1.msra.mxu0 0.0
    %1043 = vmatprep.subr.mxu0 0.0
    %1044 = vmatpush1.msra.mxu0 0.0
    %1045 = vmatprep.subr.mxu0 0.0
    %1046 = vmatpush1.msra.mxu0 0.0
    %1047 = vmatprep.subr.mxu0 0.0
    %1048 = vmatpush1.msra.mxu0 0.0
    %1049 = vmatprep.subr.mxu0 0.0
    %1050 = vmatpush1.msra.mxu0 0.0
    %1051 = vmatprep.subr.mxu0 0.0
    %1052 = vmatpush1.msra.mxu0 0.0
    %1053 = vmatprep.subr.mxu0 0.0
    %1054 = vmatpush1.msra.mxu0 0.0
    %1055 = vmatprep.subr.mxu0 0.0
    %1056 = vmatpush1.msra.mxu0 0.0
    %1057 = vmatprep.subr.mxu0 0.0
    %1058 = vmatpush1.msra.mxu0 0.0
    %1059 = vmatprep.subr.mxu0 0.0
    %1060 = vmatpush1.msra.mxu0 0.0
    %1061 = vmatprep.subr.mxu0 0.0
    %1062 = vmatpush1.msra.mxu0 0.0
    %1063 = vmatprep.subr.mxu0 0.0
    %1064 = vmatpush1.msra.mxu0 0.0
    %1065 = vmatprep.subr.mxu0 0.0
    %1066 = vmatpush1.msra.mxu0 0.0
    %1067 = vmatprep.subr.mxu0 0.0
    %1068 = vmatpush1.msra.mxu0 0.0
    %1069 = vmatprep.subr.mxu0 0.0
    %1070 = vmatpush1.msra.mxu0 0.0
    %1071 = vmatprep.subr.mxu0 0.0
    %1072 = vmatpush1.msra.mxu0 0.0
    %1073 = vmatprep.subr.mxu0 0.0
    %1074 = vmatpush1.msra.mxu0 0.0
    %1075 = vmatprep.subr.mxu0 0.0
    %1076 = vmatpush1.msra.mxu0 0.0
    %1077 = vmatprep.subr.mxu0 0.0
    %1078 = vmatpush1.msra.mxu0 0.0
    %1079 = vmatprep.subr.mxu0 0.0
    %1080 = vmatpush1.msra.mxu0 0.0
    %1081 = vmatprep.mubr.f32.mxu0 0.0
    %1082 = vmatmul.mubr.f32.gmra.mrb[0].mxu0 %v845
    %v1083 = vpop.f32.mrb[0].mxu0
    %v1084 = vadd.f32 %v709, %v1083
    %v1085 = vpop.f32.mrb[0].mxu0
    %1086 = vdwg.mxu0
    %v1088 = vrot.slane %v1084, 6
    %v1090 = vadd.f32 %v696, %v1088
    %v1091 = vxor.u32 %v1090, 2147483648
    %v1092 = vmul.f32 %v1091, 1.442695
    %v1093 = vpow.pop %v1092
    %v1094 = vadd.f32 %v1093, 1.0
    %v1095 = vrcp.pop %v1094
    %v1096 = vmul.f32 1.0, %v1095
    %1097 = vrot.lane.b32.xlu0 %v1088, 64
    %v1098 = vpop.permute.xlu0 %1097
    %v1100 = vmul.f32 %v1096, %v1098
    %1102 = vrot.lane.b32.xlu0 %v1100, 64
    %v1103 = vpop.permute.xlu0 %1102
    %v1105 = vadd.f32 %v696, %v1103
    %v1106 = vtanh.pop %v1105
    %v1107 = vsub.f32 1.0, %v1096
    %1109 = vrot.lane.b32.xlu0 %v1106, 96
    %v1110 = vpop.permute.xlu0 %1109
    %v1112 = vmul.f32 %v1107, %v1110
    %v1113 = vrot.slane %v841, 6
    %v1115 = vmul.f32 %v1096, %v1113
    %v1116 = vadd.f32 %v1112, %v1115
    %v1118 = vrot.slane %v1116, 2
    %1119 = vrot.lane.b32.xlu0 %v1118, 96
    %v1120 = vpop.permute.xlu0 %1119
    %v1121 = vsel %vm319, %v1120, 0
    %1123 = vmatprep.subr.mxu0 0.0
    %1124 = vmatpush1.msra.mxu0 %v736
    %1125 = vmatprep.subr.mxu0 0.0
    %1126 = vmatpush1.msra.mxu0 %v737
    %1127 = vmatprep.subr.mxu0 0.0
    %1128 = vmatpush1.msra.mxu0 %v738
    %1129 = vmatprep.subr.mxu0 0.0
    %1130 = vmatpush1.msra.mxu0 %v739
    %1131 = vmatprep.subr.mxu0 0.0
    %1132 = vmatpush1.msra.mxu0 0.0
    %1133 = vmatprep.subr.mxu0 0.0
    %1134 = vmatpush1.msra.mxu0 0.0
    %1135 = vmatprep.subr.mxu0 0.0
    %1136 = vmatpush1.msra.mxu0 0.0
    %1137 = vmatprep.subr.mxu0 0.0
    %1138 = vmatpush1.msra.mxu0 0.0
    %1139 = vmatprep.subr.mxu0 0.0
    %1140 = vmatpush1.msra.mxu0 0.0
    %1141 = vmatprep.subr.mxu0 0.0
    %1142 = vmatpush1.msra.mxu0 0.0
    %1143 = vmatprep.subr.mxu0 0.0
    %1144 = vmatpush1.msra.mxu0 0.0
    %1145 = vmatprep.subr.mxu0 0.0
    %1146 = vmatpush1.msra.mxu0 0.0
    %1147 = vmatprep.subr.mxu0 0.0
    %1148 = vmatpush1.msra.mxu0 0.0
    %1149 = vmatprep.subr.mxu0 0.0
    %1150 = vmatpush1.msra.mxu0 0.0
    %1151 = vmatprep.subr.mxu0 0.0
    %1152 = vmatpush1.msra.mxu0 0.0
    %1153 = vmatprep.subr.mxu0 0.0
    %1154 = vmatpush1.msra.mxu0 0.0
    %1155 = vmatprep.subr.mxu0 0.0
    %1156 = vmatpush1.msra.mxu0 0.0
    %1157 = vmatprep.subr.mxu0 0.0
    %1158 = vmatpush1.msra.mxu0 0.0
    %1159 = vmatprep.subr.mxu0 0.0
    %1160 = vmatpush1.msra.mxu0 0.0
    %1161 = vmatprep.subr.mxu0 0.0
    %1162 = vmatpush1.msra.mxu0 0.0
    %1163 = vmatprep.subr.mxu0 0.0
    %1164 = vmatpush1.msra.mxu0 0.0
    %1165 = vmatprep.subr.mxu0 0.0
    %1166 = vmatpush1.msra.mxu0 0.0
    %1167 = vmatprep.subr.mxu0 0.0
    %1168 = vmatpush1.msra.mxu0 0.0
    %1169 = vmatprep.subr.mxu0 0.0
    %1170 = vmatpush1.msra.mxu0 0.0
    %1171 = vmatprep.subr.mxu0 0.0
    %1172 = vmatpush1.msra.mxu0 0.0
    %1173 = vmatprep.subr.mxu0 0.0
    %1174 = vmatpush1.msra.mxu0 0.0
    %1175 = vmatprep.subr.mxu0 0.0
    %1176 = vmatpush1.msra.mxu0 0.0
    %1177 = vmatprep.subr.mxu0 0.0
    %1178 = vmatpush1.msra.mxu0 0.0
    %1179 = vmatprep.subr.mxu0 0.0
    %1180 = vmatpush1.msra.mxu0 0.0
    %1181 = vmatprep.subr.mxu0 0.0
    %1182 = vmatpush1.msra.mxu0 0.0
    %1183 = vmatprep.subr.mxu0 0.0
    %1184 = vmatpush1.msra.mxu0 0.0
    %1185 = vmatprep.subr.mxu0 0.0
    %1186 = vmatpush1.msra.mxu0 0.0
    %1187 = vmatprep.mubr.f32.mxu0 0.0
    %1188 = vmatmul.mubr.f32.gmra.mrb[0].mxu0 %v1121
    %v1189 = vpop.f32.mrb[0].mxu0
    %v1190 = vadd.f32 %v725, %v1189
    %v1191 = vpop.f32.mrb[0].mxu0
    %1192 = vdwg.mxu0
    %1194 = vrot.lane.b32.xlu0 %v1016, 96
    %v1195 = vpop.permute.xlu0 %1194
    %v1196 = vsel %vm319, %v1195, 0
    %1198 = vmatprep.subr.mxu0 0.0
    %1199 = vmatpush1.msra.mxu0 %v732
    %1200 = vmatprep.subr.mxu0 0.0
    %1201 = vmatpush1.msra.mxu0 %v733
    %1202 = vmatprep.subr.mxu0 0.0
    %1203 = vmatpush1.msra.mxu0 %v734
    %1204 = vmatprep.subr.mxu0 0.0
    %1205 = vmatpush1.msra.mxu0 %v735
    %1206 = vmatprep.subr.mxu0 0.0
    %1207 = vmatpush1.msra.mxu0 0.0
    %1208 = vmatprep.subr.mxu0 0.0
    %1209 = vmatpush1.msra.mxu0 0.0
    %1210 = vmatprep.subr.mxu0 0.0
    %1211 = vmatpush1.msra.mxu0 0.0
    %1212 = vmatprep.subr.mxu0 0.0
    %1213 = vmatpush1.msra.mxu0 0.0
    %1214 = vmatprep.subr.mxu0 0.0
    %1215 = vmatpush1.msra.mxu0 0.0
    %1216 = vmatprep.subr.mxu0 0.0
    %1217 = vmatpush1.msra.mxu0 0.0
    %1218 = vmatprep.subr.mxu0 0.0
    %1219 = vmatpush1.msra.mxu0 0.0
    %1220 = vmatprep.subr.mxu0 0.0
    %1221 = vmatpush1.msra.mxu0 0.0
    %1222 = vmatprep.subr.mxu0 0.0
    %1223 = vmatpush1.msra.mxu0 0.0
    %1224 = vmatprep.subr.mxu0 0.0
    %1225 = vmatpush1.msra.mxu0 0.0
    %1226 = vmatprep.subr.mxu0 0.0
    %1227 = vmatpush1.msra.mxu0 0.0
    %1228 = vmatprep.subr.mxu0 0.0
    %1229 = vmatpush1.msra.mxu0 0.0
    %1230 = vmatprep.subr.mxu0 0.0
    %1231 = vmatpush1.msra.mxu0 0.0
    %1232 = vmatprep.subr.mxu0 0.0
    %1233 = vmatpush1.msra.mxu0 0.0
    %1234 = vmatprep.subr.mxu0 0.0
    %1235 = vmatpush1.msra.mxu0 0.0
    %1236 = vmatprep.subr.mxu0 0.0
    %1237 = vmatpush1.msra.mxu0 0.0
    %1238 = vmatprep.subr.mxu0 0.0
    %1239 = vmatpush1.msra.mxu0 0.0
    %1240 = vmatprep.subr.mxu0 0.0
    %1241 = vmatpush1.msra.mxu0 0.0
    %1242 = vmatprep.subr.mxu0 0.0
    %1243 = vmatpush1.msra.mxu0 0.0
    %1244 = vmatprep.subr.mxu0 0.0
    %1245 = vmatpush1.msra.mxu0 0.0
    %1246 = vmatprep.subr.mxu0 0.0
    %1247 = vmatpush1.msra.mxu0 0.0
    %1248 = vmatprep.subr.mxu0 0.0
    %1249 = vmatpush1.msra.mxu0 0.0
    %1250 = vmatprep.subr.mxu0 0.0
    %1251 = vmatpush1.msra.mxu0 0.0
    %1252 = vmatprep.subr.mxu0 0.0
    %1253 = vmatpush1.msra.mxu0 0.0
    %1254 = vmatprep.subr.mxu0 0.0
    %1255 = vmatpush1.msra.mxu0 0.0
    %1256 = vmatprep.subr.mxu0 0.0
    %1257 = vmatpush1.msra.mxu0 0.0
    %1258 = vmatprep.subr.mxu0 0.0
    %1259 = vmatpush1.msra.mxu0 0.0
    %1260 = vmatprep.subr.mxu0 0.0
    %1261 = vmatpush1.msra.mxu0 0.0
    %1262 = vmatprep.mubr.f32.mxu0 0.0
    %1263 = vmatmul.mubr.f32.gmra.mrb[0].mxu0 %v1196
    %v1264 = vpop.f32.mrb[0].mxu0
    %v1265 = vadd.f32 %v717, %v1264
    %v1266 = vpop.f32.mrb[0].mxu0
    %1267 = vdwg.mxu0
    %v1268 = vadd.f32 %v1190, %v1265
    %v1269 = vxor.u32 %v1268, 2147483648
    %v1270 = vmul.f32 %v1269, 1.442695
    %v1271 = vpow.pop %v1270
    %v1272 = vadd.f32 %v1271, 1.0
    %v1273 = vrcp.pop %v1272
    %v1274 = vmul.f32 1.0, %v1273
    %1276 = vrot.lane.b32.xlu0 %v1265, 64
    %v1277 = vpop.permute.xlu0 %1276
    %v1279 = vmul.f32 %v1274, %v1277
    %1281 = vrot.lane.b32.xlu0 %v1279, 64
    %v1282 = vpop.permute.xlu0 %1281
    %v1284 = vadd.f32 %v1190, %v1282
    %v1285 = vtanh.pop %v1284
    %v1286 = vsub.f32 1.0, %v1274
    %1288 = vrot.lane.b32.xlu0 %v1285, 96
    %v1289 = vpop.permute.xlu0 %1288
    %v1291 = vmul.f32 %v1286, %v1289
    %v1292 = vmul.f32 %v1274, %v1016
    %v1293 = vadd.f32 %v1291, %v1292
    %1294 = vmatprep.subr.mxu0 0.0
    %1295 = vmatpush1.msra.mxu0 %v727
    %1296 = vmatprep.subr.mxu0 0.0
    %1297 = vmatpush1.msra.mxu0 %v728
    %1298 = vmatprep.subr.mxu0 0.0
    %1299 = vmatpush1.msra.mxu0 %v729
    %1300 = vmatprep.subr.mxu0 0.0
    %1301 = vmatpush1.msra.mxu0 %v730
    %1302 = vmatprep.subr.mxu0 0.0
    %1303 = vmatpush1.msra.mxu0 0.0
    %1304 = vmatprep.subr.mxu0 0.0
    %1305 = vmatpush1.msra.mxu0 0.0
    %1306 = vmatprep.subr.mxu0 0.0
    %1307 = vmatpush1.msra.mxu0 0.0
    %1308 = vmatprep.subr.mxu0 0.0
    %1309 = vmatpush1.msra.mxu0 0.0
    %1310 = vmatprep.subr.mxu0 0.0
    %1311 = vmatpush1.msra.mxu0 0.0
    %1312 = vmatprep.subr.mxu0 0.0
    %1313 = vmatpush1.msra.mxu0 0.0
    %1314 = vmatprep.subr.mxu0 0.0
    %1315 = vmatpush1.msra.mxu0 0.0
    %1316 = vmatprep.subr.mxu0 0.0
    %1317 = vmatpush1.msra.mxu0 0.0
    %1318 = vmatprep.subr.mxu0 0.0
    %1319 = vmatpush1.msra.mxu0 0.0
    %1320 = vmatprep.subr.mxu0 0.0
    %1321 = vmatpush1.msra.mxu0 0.0
    %1322 = vmatprep.subr.mxu0 0.0
    %1323 = vmatpush1.msra.mxu0 0.0
    %1324 = vmatprep.subr.mxu0 0.0
    %1325 = vmatpush1.msra.mxu0 0.0
    %1326 = vmatprep.subr.mxu0 0.0
    %1327 = vmatpush1.msra.mxu0 0.0
    %1328 = vmatprep.subr.mxu0 0.0
    %1329 = vmatpush1.msra.mxu0 0.0
    %1330 = vmatprep.subr.mxu0 0.0
    %1331 = vmatpush1.msra.mxu0 0.0
    %1332 = vmatprep.subr.mxu0 0.0
    %1333 = vmatpush1.msra.mxu0 0.0
    %1334 = vmatprep.subr.mxu0 0.0
    %1335 = vmatpush1.msra.mxu0 0.0
    %1336 = vmatprep.subr.mxu0 0.0
    %1337 = vmatpush1.msra.mxu0 0.0
    %1338 = vmatprep.subr.mxu0 0.0
    %1339 = vmatpush1.msra.mxu0 0.0
    %1340 = vmatprep.subr.mxu0 0.0
    %1341 = vmatpush1.msra.mxu0 0.0
    %1342 = vmatprep.subr.mxu0 0.0
    %1343 = vmatpush1.msra.mxu0 0.0
    %1344 = vmatprep.subr.mxu0 0.0
    %1345 = vmatpush1.msra.mxu0 0.0
    %1346 = vmatprep.subr.mxu0 0.0
    %1347 = vmatpush1.msra.mxu0 0.0
    %1348 = vmatprep.subr.mxu0 0.0
    %1349 = vmatpush1.msra.mxu0 0.0
    %1350 = vmatprep.subr.mxu0 0.0
    %1351 = vmatpush1.msra.mxu0 0.0
    %1352 = vmatprep.subr.mxu0 0.0
    %1353 = vmatpush1.msra.mxu0 0.0
    %1354 = vmatprep.subr.mxu0 0.0
    %1355 = vmatpush1.msra.mxu0 0.0
    %1356 = vmatprep.subr.mxu0 0.0
    %1357 = vmatpush1.msra.mxu0 0.0
    %1358 = vmatprep.mubr.f32.mxu0 0.0
    %1359 = vmatmul.mubr.f32.gmra.mrb[0].mxu0 %v1121
    %v1360 = vpop.f32.mrb[0].mxu0
    %v1361 = vadd.f32 %v709, %v1360
    %v1362 = vpop.f32.mrb[0].mxu0
    %1363 = vdwg.mxu0
    %v1365 = vrot.slane %v1361, 4
    %v1367 = vadd.f32 %v696, %v1365
    %v1368 = vxor.u32 %v1367, 2147483648
    %v1369 = vmul.f32 %v1368, 1.442695
    %v1370 = vpow.pop %v1369
    %v1371 = vadd.f32 %v1370, 1.0
    %v1372 = vrcp.pop %v1371
    %v1373 = vmul.f32 1.0, %v1372
    %1374 = vrot.lane.b32.xlu0 %v1365, 64
    %v1375 = vpop.permute.xlu0 %1374
    %v1377 = vmul.f32 %v1373, %v1375
    %1379 = vrot.lane.b32.xlu0 %v1377, 64
    %v1380 = vpop.permute.xlu0 %1379
    %v1382 = vadd.f32 %v696, %v1380
    %v1383 = vtanh.pop %v1382
    %v1384 = vsub.f32 1.0, %v1373
    %1386 = vrot.lane.b32.xlu0 %v1383, 96
    %v1387 = vpop.permute.xlu0 %1386
    %v1389 = vmul.f32 %v1384, %v1387
    %v1390 = vrot.slane %v1116, 6
    %v1392 = vmul.f32 %v1373, %v1390
    %v1393 = vadd.f32 %v1389, %v1392
    %v1395 = vrot.slane %v1393, 4
    %1396 = vrot.lane.b32.xlu0 %v1395, 96
    %v1397 = vpop.permute.xlu0 %1396
    %v1398 = vsel %vm319, %v1397, 0
    %1400 = vmatprep.subr.mxu0 0.0
    %1401 = vmatpush1.msra.mxu0 %v736
    %1402 = vmatprep.subr.mxu0 0.0
    %1403 = vmatpush1.msra.mxu0 %v737
    %1404 = vmatprep.subr.mxu0 0.0
    %1405 = vmatpush1.msra.mxu0 %v738
    %1406 = vmatprep.subr.mxu0 0.0
    %1407 = vmatpush1.msra.mxu0 %v739
    %1408 = vmatprep.subr.mxu0 0.0
    %1409 = vmatpush1.msra.mxu0 0.0
    %1410 = vmatprep.subr.mxu0 0.0
    %1411 = vmatpush1.msra.mxu0 0.0
    %1412 = vmatprep.subr.mxu0 0.0
    %1413 = vmatpush1.msra.mxu0 0.0
    %1414 = vmatprep.subr.mxu0 0.0
    %1415 = vmatpush1.msra.mxu0 0.0
    %1416 = vmatprep.subr.mxu0 0.0
    %1417 = vmatpush1.msra.mxu0 0.0
    %1418 = vmatprep.subr.mxu0 0.0
    %1419 = vmatpush1.msra.mxu0 0.0
    %1420 = vmatprep.subr.mxu0 0.0
    %1421 = vmatpush1.msra.mxu0 0.0
    %1422 = vmatprep.subr.mxu0 0.0
    %1423 = vmatpush1.msra.mxu0 0.0
    %1424 = vmatprep.subr.mxu0 0.0
    %1425 = vmatpush1.msra.mxu0 0.0
    %1426 = vmatprep.subr.mxu0 0.0
    %1427 = vmatpush1.msra.mxu0 0.0
    %1428 = vmatprep.subr.mxu0 0.0
    %1429 = vmatpush1.msra.mxu0 0.0
    %1430 = vmatprep.subr.mxu0 0.0
    %1431 = vmatpush1.msra.mxu0 0.0
    %1432 = vmatprep.subr.mxu0 0.0
    %1433 = vmatpush1.msra.mxu0 0.0
    %1434 = vmatprep.subr.mxu0 0.0
    %1435 = vmatpush1.msra.mxu0 0.0
    %1436 = vmatprep.subr.mxu0 0.0
    %1437 = vmatpush1.msra.mxu0 0.0
    %1438 = vmatprep.subr.mxu0 0.0
    %1439 = vmatpush1.msra.mxu0 0.0
    %1440 = vmatprep.subr.mxu0 0.0
    %1441 = vmatpush1.msra.mxu0 0.0
    %1442 = vmatprep.subr.mxu0 0.0
    %1443 = vmatpush1.msra.mxu0 0.0
    %1444 = vmatprep.subr.mxu0 0.0
    %1445 = vmatpush1.msra.mxu0 0.0
    %1446 = vmatprep.subr.mxu0 0.0
    %1447 = vmatpush1.msra.mxu0 0.0
    %1448 = vmatprep.subr.mxu0 0.0
    %1449 = vmatpush1.msra.mxu0 0.0
    %1450 = vmatprep.subr.mxu0 0.0
    %1451 = vmatpush1.msra.mxu0 0.0
    %1452 = vmatprep.subr.mxu0 0.0
    %1453 = vmatpush1.msra.mxu0 0.0
    %1454 = vmatprep.subr.mxu0 0.0
    %1455 = vmatpush1.msra.mxu0 0.0
    %1456 = vmatprep.subr.mxu0 0.0
    %1457 = vmatpush1.msra.mxu0 0.0
    %1458 = vmatprep.subr.mxu0 0.0
    %1459 = vmatpush1.msra.mxu0 0.0
    %1460 = vmatprep.subr.mxu0 0.0
    %1461 = vmatpush1.msra.mxu0 0.0
    %1462 = vmatprep.subr.mxu0 0.0
    %1463 = vmatpush1.msra.mxu0 0.0
    %1464 = vmatprep.mubr.f32.mxu0 0.0
    %1465 = vmatmul.mubr.f32.gmra.mrb[0].mxu0 %v1398
    %v1466 = vpop.f32.mrb[0].mxu0
    %v1467 = vadd.f32 %v725, %v1466
    %v1468 = vpop.f32.mrb[0].mxu0
    %1469 = vdwg.mxu0
    %1471 = vrot.lane.b32.xlu0 %v1293, 96
    %v1472 = vpop.permute.xlu0 %1471
    %v1473 = vsel %vm319, %v1472, 0
    %1475 = vmatprep.subr.mxu0 0.0
    %1476 = vmatpush1.msra.mxu0 %v732
    %1477 = vmatprep.subr.mxu0 0.0
    %1478 = vmatpush1.msra.mxu0 %v733
    %1479 = vmatprep.subr.mxu0 0.0
    %1480 = vmatpush1.msra.mxu0 %v734
    %1481 = vmatprep.subr.mxu0 0.0
    %1482 = vmatpush1.msra.mxu0 %v735
    %1483 = vmatprep.subr.mxu0 0.0
    %1484 = vmatpush1.msra.mxu0 0.0
    %1485 = vmatprep.subr.mxu0 0.0
    %1486 = vmatpush1.msra.mxu0 0.0
    %1487 = vmatprep.subr.mxu0 0.0
    %1488 = vmatpush1.msra.mxu0 0.0
    %1489 = vmatprep.subr.mxu0 0.0
    %1490 = vmatpush1.msra.mxu0 0.0
    %1491 = vmatprep.subr.mxu0 0.0
    %1492 = vmatpush1.msra.mxu0 0.0
    %1493 = vmatprep.subr.mxu0 0.0
    %1494 = vmatpush1.msra.mxu0 0.0
    %1495 = vmatprep.subr.mxu0 0.0
    %1496 = vmatpush1.msra.mxu0 0.0
    %1497 = vmatprep.subr.mxu0 0.0
    %1498 = vmatpush1.msra.mxu0 0.0
    %1499 = vmatprep.subr.mxu0 0.0
    %1500 = vmatpush1.msra.mxu0 0.0
    %1501 = vmatprep.subr.mxu0 0.0
    %1502 = vmatpush1.msra.mxu0 0.0
    %1503 = vmatprep.subr.mxu0 0.0
    %1504 = vmatpush1.msra.mxu0 0.0
    %1505 = vmatprep.subr.mxu0 0.0
    %1506 = vmatpush1.msra.mxu0 0.0
    %1507 = vmatprep.subr.mxu0 0.0
    %1508 = vmatpush1.msra.mxu0 0.0
    %1509 = vmatprep.subr.mxu0 0.0
    %1510 = vmatpush1.msra.mxu0 0.0
    %1511 = vmatprep.subr.mxu0 0.0
    %1512 = vmatpush1.msra.mxu0 0.0
    %1513 = vmatprep.subr.mxu0 0.0
    %1514 = vmatpush1.msra.mxu0 0.0
    %1515 = vmatprep.subr.mxu0 0.0
    %1516 = vmatpush1.msra.mxu0 0.0
    %1517 = vmatprep.subr.mxu0 0.0
    %1518 = vmatpush1.msra.mxu0 0.0
    %1519 = vmatprep.subr.mxu0 0.0
    %1520 = vmatpush1.msra.mxu0 0.0
    %1521 = vmatprep.subr.mxu0 0.0
    %1522 = vmatpush1.msra.mxu0 0.0
    %1523 = vmatprep.subr.mxu0 0.0
    %1524 = vmatpush1.msra.mxu0 0.0
    %1525 = vmatprep.subr.mxu0 0.0
    %1526 = vmatpush1.msra.mxu0 0.0
    %1527 = vmatprep.subr.mxu0 0.0
    %1528 = vmatpush1.msra.mxu0 0.0
    %1529 = vmatprep.subr.mxu0 0.0
    %1530 = vmatpush1.msra.mxu0 0.0
    %1531 = vmatprep.subr.mxu0 0.0
    %1532 = vmatpush1.msra.mxu0 0.0
    %1533 = vmatprep.subr.mxu0 0.0
    %1534 = vmatpush1.msra.mxu0 0.0
    %1535 = vmatprep.subr.mxu0 0.0
    %1536 = vmatpush1.msra.mxu0 0.0
    %1537 = vmatprep.subr.mxu0 0.0
    %1538 = vmatpush1.msra.mxu0 0.0
    %1539 = vmatprep.mubr.f32.mxu0 0.0
    %1540 = vmatmul.mubr.f32.gmra.mrb[0].mxu0 %v1473
    %v1541 = vpop.f32.mrb[0].mxu0
    %v1542 = vadd.f32 %v717, %v1541
    %v1543 = vpop.f32.mrb[0].mxu0
    %1544 = vdwg.mxu0
    %v1545 = vadd.f32 %v1467, %v1542
    %v1546 = vxor.u32 %v1545, 2147483648
    %v1547 = vmul.f32 %v1546, 1.442695
    %v1548 = vpow.pop %v1547
    %v1549 = vadd.f32 %v1548, 1.0
    %v1550 = vrcp.pop %v1549
    %v1551 = vmul.f32 1.0, %v1550
    %1553 = vrot.lane.b32.xlu0 %v1542, 64
    %v1554 = vpop.permute.xlu0 %1553
    %v1556 = vmul.f32 %v1551, %v1554
    %1558 = vrot.lane.b32.xlu0 %v1556, 64
    %v1559 = vpop.permute.xlu0 %1558
    %v1561 = vadd.f32 %v1467, %v1559
    %v1562 = vtanh.pop %v1561
    %v1563 = vsub.f32 1.0, %v1551
    %1565 = vrot.lane.b32.xlu0 %v1562, 96
    %v1566 = vpop.permute.xlu0 %1565
    %v1568 = vmul.f32 %v1563, %v1566
    %v1569 = vmul.f32 %v1551, %v1293
    %v1570 = vadd.f32 %v1568, %v1569
    %1571 = vmatprep.subr.mxu0 0.0
    %1572 = vmatpush1.msra.mxu0 %v727
    %1573 = vmatprep.subr.mxu0 0.0
    %1574 = vmatpush1.msra.mxu0 %v728
    %1575 = vmatprep.subr.mxu0 0.0
    %1576 = vmatpush1.msra.mxu0 %v729
    %1577 = vmatprep.subr.mxu0 0.0
    %1578 = vmatpush1.msra.mxu0 %v730
    %1579 = vmatprep.subr.mxu0 0.0
    %1580 = vmatpush1.msra.mxu0 0.0
    %1581 = vmatprep.subr.mxu0 0.0
    %1582 = vmatpush1.msra.mxu0 0.0
    %1583 = vmatprep.subr.mxu0 0.0
    %1584 = vmatpush1.msra.mxu0 0.0
    %1585 = vmatprep.subr.mxu0 0.0
    %1586 = vmatpush1.msra.mxu0 0.0
    %1587 = vmatprep.subr.mxu0 0.0
    %1588 = vmatpush1.msra.mxu0 0.0
    %1589 = vmatprep.subr.mxu0 0.0
    %1590 = vmatpush1.msra.mxu0 0.0
    %1591 = vmatprep.subr.mxu0 0.0
    %1592 = vmatpush1.msra.mxu0 0.0
    %1593 = vmatprep.subr.mxu0 0.0
    %1594 = vmatpush1.msra.mxu0 0.0
    %1595 = vmatprep.subr.mxu0 0.0
    %1596 = vmatpush1.msra.mxu0 0.0
    %1597 = vmatprep.subr.mxu0 0.0
    %1598 = vmatpush1.msra.mxu0 0.0
    %1599 = vmatprep.subr.mxu0 0.0
    %1600 = vmatpush1.msra.mxu0 0.0
    %1601 = vmatprep.subr.mxu0 0.0
    %1602 = vmatpush1.msra.mxu0 0.0
    %1603 = vmatprep.subr.mxu0 0.0
    %1604 = vmatpush1.msra.mxu0 0.0
    %1605 = vmatprep.subr.mxu0 0.0
    %1606 = vmatpush1.msra.mxu0 0.0
    %1607 = vmatprep.subr.mxu0 0.0
    %1608 = vmatpush1.msra.mxu0 0.0
    %1609 = vmatprep.subr.mxu0 0.0
    %1610 = vmatpush1.msra.mxu0 0.0
    %1611 = vmatprep.subr.mxu0 0.0
    %1612 = vmatpush1.msra.mxu0 0.0
    %1613 = vmatprep.subr.mxu0 0.0
    %1614 = vmatpush1.msra.mxu0 0.0
    %1615 = vmatprep.subr.mxu0 0.0
    %1616 = vmatpush1.msra.mxu0 0.0
    %1617 = vmatprep.subr.mxu0 0.0
    %1618 = vmatpush1.msra.mxu0 0.0
    %1619 = vmatprep.subr.mxu0 0.0
    %1620 = vmatpush1.msra.mxu0 0.0
    %1621 = vmatprep.subr.mxu0 0.0
    %1622 = vmatpush1.msra.mxu0 0.0
    %1623 = vmatprep.subr.mxu0 0.0
    %1624 = vmatpush1.msra.mxu0 0.0
    %1625 = vmatprep.subr.mxu0 0.0
    %1626 = vmatpush1.msra.mxu0 0.0
    %1627 = vmatprep.subr.mxu0 0.0
    %1628 = vmatpush1.msra.mxu0 0.0
    %1629 = vmatprep.subr.mxu0 0.0
    %1630 = vmatpush1.msra.mxu0 0.0
    %1631 = vmatprep.subr.mxu0 0.0
    %1632 = vmatpush1.msra.mxu0 0.0
    %1633 = vmatprep.subr.mxu0 0.0
    %1634 = vmatpush1.msra.mxu0 0.0
    %1635 = vmatprep.mubr.f32.mxu0 0.0
    %1636 = vmatmul.mubr.f32.gmra.mrb[0].mxu0 %v1398
    %v1637 = vpop.f32.mrb[0].mxu0
    %v1638 = vadd.f32 %v709, %v1637
    %v1639 = vpop.f32.mrb[0].mxu0
    %1640 = vdwg.mxu0
    %v1642 = vrot.slane %v1638, 2
    %v1644 = vadd.f32 %v696, %v1642
    %v1645 = vxor.u32 %v1644, 2147483648
    %v1646 = vmul.f32 %v1645, 1.442695
    %v1647 = vpow.pop %v1646
    %v1648 = vadd.f32 %v1647, 1.0
    %v1649 = vrcp.pop %v1648
    %v1650 = vmul.f32 1.0, %v1649
    %1651 = vrot.lane.b32.xlu0 %v1642, 64
    %v1652 = vpop.permute.xlu0 %1651
    %v1654 = vmul.f32 %v1650, %v1652
    %1656 = vrot.lane.b32.xlu0 %v1654, 64
    %v1657 = vpop.permute.xlu0 %1656
    %v1659 = vadd.f32 %v696, %v1657
    %v1660 = vtanh.pop %v1659
    %v1661 = vsub.f32 1.0, %v1650
    %1663 = vrot.lane.b32.xlu0 %v1660, 96
    %v1664 = vpop.permute.xlu0 %1663
    %v1666 = vmul.f32 %v1661, %v1664
    %v1667 = vrot.slane %v1393, 6
    %v1669 = vmul.f32 %v1650, %v1667
    %v1670 = vadd.f32 %v1666, %v1669
    %v1672 = vrot.slane %v1670, 6
    %1673 = vrot.lane.b32.xlu0 %v1672, 96
    %v1674 = vpop.permute.xlu0 %1673
    %v1675 = vsel %vm319, %v1674, 0
    %1677 = vmatprep.subr.mxu0 0.0
    %1678 = vmatpush1.msra.mxu0 %v736
    %1679 = vmatprep.subr.mxu0 0.0
    %1680 = vmatpush1.msra.mxu0 %v737
    %1681 = vmatprep.subr.mxu0 0.0
    %1682 = vmatpush1.msra.mxu0 %v738
    %1683 = vmatprep.subr.mxu0 0.0
    %1684 = vmatpush1.msra.mxu0 %v739
    %1685 = vmatprep.subr.mxu0 0.0
    %1686 = vmatpush1.msra.mxu0 0.0
    %1687 = vmatprep.subr.mxu0 0.0
    %1688 = vmatpush1.msra.mxu0 0.0
    %1689 = vmatprep.subr.mxu0 0.0
    %1690 = vmatpush1.msra.mxu0 0.0
    %1691 = vmatprep.subr.mxu0 0.0
    %1692 = vmatpush1.msra.mxu0 0.0
    %1693 = vmatprep.subr.mxu0 0.0
    %1694 = vmatpush1.msra.mxu0 0.0
    %1695 = vmatprep.subr.mxu0 0.0
    %1696 = vmatpush1.msra.mxu0 0.0
    %1697 = vmatprep.subr.mxu0 0.0
    %1698 = vmatpush1.msra.mxu0 0.0
    %1699 = vmatprep.subr.mxu0 0.0
    %1700 = vmatpush1.msra.mxu0 0.0
    %1701 = vmatprep.subr.mxu0 0.0
    %1702 = vmatpush1.msra.mxu0 0.0
    %1703 = vmatprep.subr.mxu0 0.0
    %1704 = vmatpush1.msra.mxu0 0.0
    %1705 = vmatprep.subr.mxu0 0.0
    %1706 = vmatpush1.msra.mxu0 0.0
    %1707 = vmatprep.subr.mxu0 0.0
    %1708 = vmatpush1.msra.mxu0 0.0
    %1709 = vmatprep.subr.mxu0 0.0
    %1710 = vmatpush1.msra.mxu0 0.0
    %1711 = vmatprep.subr.mxu0 0.0
    %1712 = vmatpush1.msra.mxu0 0.0
    %1713 = vmatprep.subr.mxu0 0.0
    %1714 = vmatpush1.msra.mxu0 0.0
    %1715 = vmatprep.subr.mxu0 0.0
    %1716 = vmatpush1.msra.mxu0 0.0
    %1717 = vmatprep.subr.mxu0 0.0
    %1718 = vmatpush1.msra.mxu0 0.0
    %1719 = vmatprep.subr.mxu0 0.0
    %1720 = vmatpush1.msra.mxu0 0.0
    %1721 = vmatprep.subr.mxu0 0.0
    %1722 = vmatpush1.msra.mxu0 0.0
    %1723 = vmatprep.subr.mxu0 0.0
    %1724 = vmatpush1.msra.mxu0 0.0
    %1725 = vmatprep.subr.mxu0 0.0
    %1726 = vmatpush1.msra.mxu0 0.0
    %1727 = vmatprep.subr.mxu0 0.0
    %1728 = vmatpush1.msra.mxu0 0.0
    %1729 = vmatprep.subr.mxu0 0.0
    %1730 = vmatpush1.msra.mxu0 0.0
    %1731 = vmatprep.subr.mxu0 0.0
    %1732 = vmatpush1.msra.mxu0 0.0
    %1733 = vmatprep.subr.mxu0 0.0
    %1734 = vmatpush1.msra.mxu0 0.0
    %1735 = vmatprep.subr.mxu0 0.0
    %1736 = vmatpush1.msra.mxu0 0.0
    %1737 = vmatprep.subr.mxu0 0.0
    %1738 = vmatpush1.msra.mxu0 0.0
    %1739 = vmatprep.subr.mxu0 0.0
    %1740 = vmatpush1.msra.mxu0 0.0
    %1741 = vmatprep.mubr.f32.mxu0 0.0
    %1742 = vmatmul.mubr.f32.gmra.mrb[0].mxu0 %v1675
    %v1743 = vpop.f32.mrb[0].mxu0
    %v1744 = vadd.f32 %v725, %v1743
    %v1745 = vpop.f32.mrb[0].mxu0
    %1746 = vdwg.mxu0
    %1748 = vrot.lane.b32.xlu0 %v1570, 96
    %v1749 = vpop.permute.xlu0 %1748
    %v1750 = vsel %vm319, %v1749, 0
    %1752 = vmatprep.subr.mxu0 0.0
    %1753 = vmatpush1.msra.mxu0 %v732
    %1754 = vmatprep.subr.mxu0 0.0
    %1755 = vmatpush1.msra.mxu0 %v733
    %1756 = vmatprep.subr.mxu0 0.0
    %1757 = vmatpush1.msra.mxu0 %v734
    %1758 = vmatprep.subr.mxu0 0.0
    %1759 = vmatpush1.msra.mxu0 %v735
    %1760 = vmatprep.subr.mxu0 0.0
    %1761 = vmatpush1.msra.mxu0 0.0
    %1762 = vmatprep.subr.mxu0 0.0
    %1763 = vmatpush1.msra.mxu0 0.0
    %1764 = vmatprep.subr.mxu0 0.0
    %1765 = vmatpush1.msra.mxu0 0.0
    %1766 = vmatprep.subr.mxu0 0.0
    %1767 = vmatpush1.msra.mxu0 0.0
    %1768 = vmatprep.subr.mxu0 0.0
    %1769 = vmatpush1.msra.mxu0 0.0
    %1770 = vmatprep.subr.mxu0 0.0
    %1771 = vmatpush1.msra.mxu0 0.0
    %1772 = vmatprep.subr.mxu0 0.0
    %1773 = vmatpush1.msra.mxu0 0.0
    %1774 = vmatprep.subr.mxu0 0.0
    %1775 = vmatpush1.msra.mxu0 0.0
    %1776 = vmatprep.subr.mxu0 0.0
    %1777 = vmatpush1.msra.mxu0 0.0
    %1778 = vmatprep.subr.mxu0 0.0
    %1779 = vmatpush1.msra.mxu0 0.0
    %1780 = vmatprep.subr.mxu0 0.0
    %1781 = vmatpush1.msra.mxu0 0.0
    %1782 = vmatprep.subr.mxu0 0.0
    %1783 = vmatpush1.msra.mxu0 0.0
    %1784 = vmatprep.subr.mxu0 0.0
    %1785 = vmatpush1.msra.mxu0 0.0
    %1786 = vmatprep.subr.mxu0 0.0
    %1787 = vmatpush1.msra.mxu0 0.0
    %1788 = vmatprep.subr.mxu0 0.0
    %1789 = vmatpush1.msra.mxu0 0.0
    %1790 = vmatprep.subr.mxu0 0.0
    %1791 = vmatpush1.msra.mxu0 0.0
    %1792 = vmatprep.subr.mxu0 0.0
    %1793 = vmatpush1.msra.mxu0 0.0
    %1794 = vmatprep.subr.mxu0 0.0
    %1795 = vmatpush1.msra.mxu0 0.0
    %1796 = vmatprep.subr.mxu0 0.0
    %1797 = vmatpush1.msra.mxu0 0.0
    %1798 = vmatprep.subr.mxu0 0.0
    %1799 = vmatpush1.msra.mxu0 0.0
    %1800 = vmatprep.subr.mxu0 0.0
    %1801 = vmatpush1.msra.mxu0 0.0
    %1802 = vmatprep.subr.mxu0 0.0
    %1803 = vmatpush1.msra.mxu0 0.0
    %1804 = vmatprep.subr.mxu0 0.0
    %1805 = vmatpush1.msra.mxu0 0.0
    %1806 = vmatprep.subr.mxu0 0.0
    %1807 = vmatpush1.msra.mxu0 0.0
    %1808 = vmatprep.subr.mxu0 0.0
    %1809 = vmatpush1.msra.mxu0 0.0
    %1810 = vmatprep.subr.mxu0 0.0
    %1811 = vmatpush1.msra.mxu0 0.0
    %1812 = vmatprep.subr.mxu0 0.0
    %1813 = vmatpush1.msra.mxu0 0.0
    %1814 = vmatprep.subr.mxu0 0.0
    %1815 = vmatpush1.msra.mxu0 0.0
    %1816 = vmatprep.mubr.f32.mxu0 0.0
    %1817 = vmatmul.mubr.f32.gmra.mrb[0].mxu0 %v1750
    %v1818 = vpop.f32.mrb[0].mxu0
    %v1819 = vadd.f32 %v717, %v1818
    %v1820 = vpop.f32.mrb[0].mxu0
    %1821 = vdwg.mxu0
    %v1822 = vadd.f32 %v1744, %v1819
    %v1823 = vxor.u32 %v1822, 2147483648
    %v1824 = vmul.f32 %v1823, 1.442695
    %v1825 = vpow.pop %v1824
    %v1826 = vadd.f32 %v1825, 1.0
    %v1827 = vrcp.pop %v1826
    %v1828 = vmul.f32 1.0, %v1827
    %1830 = vrot.lane.b32.xlu0 %v1819, 64
    %v1831 = vpop.permute.xlu0 %1830
    %v1833 = vmul.f32 %v1828, %v1831
    %1835 = vrot.lane.b32.xlu0 %v1833, 64
    %v1836 = vpop.permute.xlu0 %1835
    %v1838 = vadd.f32 %v1744, %v1836
    %v1839 = vtanh.pop %v1838
    %v1840 = vsub.f32 1.0, %v1828
    %1842 = vrot.lane.b32.xlu0 %v1839, 96
    %v1843 = vpop.permute.xlu0 %1842
    %v1845 = vmul.f32 %v1840, %v1843
    %v1846 = vmul.f32 %v1828, %v1570
    %v1847 = vadd.f32 %v1845, %v1846
    %1848 = vmatprep.subr.mxu0 0.0
    %1849 = vmatpush1.msra.mxu0 %v727
    %1850 = vmatprep.subr.mxu0 0.0
    %1851 = vmatpush1.msra.mxu0 %v728
    %1852 = vmatprep.subr.mxu0 0.0
    %1853 = vmatpush1.msra.mxu0 %v729
    %1854 = vmatprep.subr.mxu0 0.0
    %1855 = vmatpush1.msra.mxu0 %v730
    %1856 = vmatprep.subr.mxu0 0.0
    %1857 = vmatpush1.msra.mxu0 0.0
    %1858 = vmatprep.subr.mxu0 0.0
    %1859 = vmatpush1.msra.mxu0 0.0
    %1860 = vmatprep.subr.mxu0 0.0
    %1861 = vmatpush1.msra.mxu0 0.0
    %1862 = vmatprep.subr.mxu0 0.0
    %1863 = vmatpush1.msra.mxu0 0.0
    %1864 = vmatprep.subr.mxu0 0.0
    %1865 = vmatpush1.msra.mxu0 0.0
    %1866 = vmatprep.subr.mxu0 0.0
    %1867 = vmatpush1.msra.mxu0 0.0
    %1868 = vmatprep.subr.mxu0 0.0
    %1869 = vmatpush1.msra.mxu0 0.0
    %1870 = vmatprep.subr.mxu0 0.0
    %1871 = vmatpush1.msra.mxu0 0.0
    %1872 = vmatprep.subr.mxu0 0.0
    %1873 = vmatpush1.msra.mxu0 0.0
    %1874 = vmatprep.subr.mxu0 0.0
    %1875 = vmatpush1.msra.mxu0 0.0
    %1876 = vmatprep.subr.mxu0 0.0
    %1877 = vmatpush1.msra.mxu0 0.0
    %1878 = vmatprep.subr.mxu0 0.0
    %1879 = vmatpush1.msra.mxu0 0.0
    %1880 = vmatprep.subr.mxu0 0.0
    %1881 = vmatpush1.msra.mxu0 0.0
    %1882 = vmatprep.subr.mxu0 0.0
    %1883 = vmatpush1.msra.mxu0 0.0
    %1884 = vmatprep.subr.mxu0 0.0
    %1885 = vmatpush1.msra.mxu0 0.0
    %1886 = vmatprep.subr.mxu0 0.0
    %1887 = vmatpush1.msra.mxu0 0.0
    %1888 = vmatprep.subr.mxu0 0.0
    %1889 = vmatpush1.msra.mxu0 0.0
    %1890 = vmatprep.subr.mxu0 0.0
    %1891 = vmatpush1.msra.mxu0 0.0
    %1892 = vmatprep.subr.mxu0 0.0
    %1893 = vmatpush1.msra.mxu0 0.0
    %1894 = vmatprep.subr.mxu0 0.0
    %1895 = vmatpush1.msra.mxu0 0.0
    %1896 = vmatprep.subr.mxu0 0.0
    %1897 = vmatpush1.msra.mxu0 0.0
    %1898 = vmatprep.subr.mxu0 0.0
    %1899 = vmatpush1.msra.mxu0 0.0
    %1900 = vmatprep.subr.mxu0 0.0
    %1901 = vmatpush1.msra.mxu0 0.0
    %1902 = vmatprep.subr.mxu0 0.0
    %1903 = vmatpush1.msra.mxu0 0.0
    %1904 = vmatprep.subr.mxu0 0.0
    %1905 = vmatpush1.msra.mxu0 0.0
    %1906 = vmatprep.subr.mxu0 0.0
    %1907 = vmatpush1.msra.mxu0 0.0
    %1908 = vmatprep.subr.mxu0 0.0
    %1909 = vmatpush1.msra.mxu0 0.0
    %1910 = vmatprep.subr.mxu0 0.0
    %1911 = vmatpush1.msra.mxu0 0.0
    %1912 = vmatprep.mubr.f32.mxu0 0.0
    %1913 = vmatmul.mubr.f32.gmra.mrb[0].mxu0 %v1675
    %v1914 = vpop.f32.mrb[0].mxu0
    %v1915 = vadd.f32 %v709, %v1914
    %v1916 = vpop.f32.mrb[0].mxu0
    %1917 = vdwg.mxu0
    %v1918 = vadd.f32 %v701, %v1915
    %v1919 = vxor.u32 %v1918, 2147483648
    %v1920 = vmul.f32 %v1919, 1.442695
    %v1921 = vpow.pop %v1920
    %v1922 = vadd.f32 %v1921, 1.0
    %v1923 = vrcp.pop %v1922
    %v1924 = vmul.f32 1.0, %v1923
    %1926 = vrot.lane.b32.xlu0 %v1915, 64
    %v1927 = vpop.permute.xlu0 %1926
    %v1929 = vmul.f32 %v1924, %v1927
    %1931 = vrot.lane.b32.xlu0 %v1929, 64
    %v1932 = vpop.permute.xlu0 %1931
    %v1934 = vadd.f32 %v701, %v1932
    %v1935 = vtanh.pop %v1934
    %v1936 = vsub.f32 1.0, %v1924
    %1938 = vrot.lane.b32.xlu0 %v1935, 96
    %v1939 = vpop.permute.xlu0 %1938
    %v1941 = vmul.f32 %v1936, %v1939
    %v1943 = vmul.f32 %v1924, %v1672
    %v1944 = vadd.f32 %v1941, %v1943
    %1946 = vrot.lane.b32.xlu0 %v1944, 96
    %v1947 = vpop.permute.xlu0 %1946
    %v1948 = vsel %vm319, %v1947, 0
    %1950 = vmatprep.subr.mxu0 0.0
    %1951 = vmatpush1.msra.mxu0 %v736
    %1952 = vmatprep.subr.mxu0 0.0
    %1953 = vmatpush1.msra.mxu0 %v737
    %1954 = vmatprep.subr.mxu0 0.0
    %1955 = vmatpush1.msra.mxu0 %v738
    %1956 = vmatprep.subr.mxu0 0.0
    %1957 = vmatpush1.msra.mxu0 %v739
    %1958 = vmatprep.subr.mxu0 0.0
    %1959 = vmatpush1.msra.mxu0 0.0
    %1960 = vmatprep.subr.mxu0 0.0
    %1961 = vmatpush1.msra.mxu0 0.0
    %1962 = vmatprep.subr.mxu0 0.0
    %1963 = vmatpush1.msra.mxu0 0.0
    %1964 = vmatprep.subr.mxu0 0.0
    %1965 = vmatpush1.msra.mxu0 0.0
    %1966 = vmatprep.subr.mxu0 0.0
    %1967 = vmatpush1.msra.mxu0 0.0
    %1968 = vmatprep.subr.mxu0 0.0
    %1969 = vmatpush1.msra.mxu0 0.0
    %1970 = vmatprep.subr.mxu0 0.0
    %1971 = vmatpush1.msra.mxu0 0.0
    %1972 = vmatprep.subr.mxu0 0.0
    %1973 = vmatpush1.msra.mxu0 0.0
    %1974 = vmatprep.subr.mxu0 0.0
    %1975 = vmatpush1.msra.mxu0 0.0
    %1976 = vmatprep.subr.mxu0 0.0
    %1977 = vmatpush1.msra.mxu0 0.0
    %1978 = vmatprep.subr.mxu0 0.0
    %1979 = vmatpush1.msra.mxu0 0.0
    %1980 = vmatprep.subr.mxu0 0.0
    %1981 = vmatpush1.msra.mxu0 0.0
    %1982 = vmatprep.subr.mxu0 0.0
    %1983 = vmatpush1.msra.mxu0 0.0
    %1984 = vmatprep.subr.mxu0 0.0
    %1985 = vmatpush1.msra.mxu0 0.0
    %1986 = vmatprep.subr.mxu0 0.0
    %1987 = vmatpush1.msra.mxu0 0.0
    %1988 = vmatprep.subr.mxu0 0.0
    %1989 = vmatpush1.msra.mxu0 0.0
    %1990 = vmatprep.subr.mxu0 0.0
    %1991 = vmatpush1.msra.mxu0 0.0
    %1992 = vmatprep.subr.mxu0 0.0
    %1993 = vmatpush1.msra.mxu0 0.0
    %1994 = vmatprep.subr.mxu0 0.0
    %1995 = vmatpush1.msra.mxu0 0.0
    %1996 = vmatprep.subr.mxu0 0.0
    %1997 = vmatpush1.msra.mxu0 0.0
    %1998 = vmatprep.subr.mxu0 0.0
    %1999 = vmatpush1.msra.mxu0 0.0
    %2000 = vmatprep.subr.mxu0 0.0
    %2001 = vmatpush1.msra.mxu0 0.0
    %2002 = vmatprep.subr.mxu0 0.0
    %2003 = vmatpush1.msra.mxu0 0.0
    %2004 = vmatprep.subr.mxu0 0.0
    %2005 = vmatpush1.msra.mxu0 0.0
    %2006 = vmatprep.subr.mxu0 0.0
    %2007 = vmatpush1.msra.mxu0 0.0
    %2008 = vmatprep.subr.mxu0 0.0
    %2009 = vmatpush1.msra.mxu0 0.0
    %2010 = vmatprep.subr.mxu0 0.0
    %2011 = vmatpush1.msra.mxu0 0.0
    %2012 = vmatprep.subr.mxu0 0.0
    %2013 = vmatpush1.msra.mxu0 0.0
    %2014 = vmatprep.mubr.f32.mxu0 0.0
    %2015 = vmatmul.mubr.f32.gmra.mrb[0].mxu0 %v1948
    %v2016 = vpop.f32.mrb[0].mxu0
    %v2017 = vadd.f32 %v725, %v2016
    %v2018 = vpop.f32.mrb[0].mxu0
    %2019 = vdwg.mxu0
    %2021 = vrot.lane.b32.xlu0 %v1847, 96
    %v2022 = vpop.permute.xlu0 %2021
    %v2023 = vsel %vm319, %v2022, 0
    %2025 = vmatprep.subr.mxu0 0.0
    %2026 = vmatpush1.msra.mxu0 %v732
    %2027 = vmatprep.subr.mxu0 0.0
    %2028 = vmatpush1.msra.mxu0 %v733
    %2029 = vmatprep.subr.mxu0 0.0
    %2030 = vmatpush1.msra.mxu0 %v734
    %2031 = vmatprep.subr.mxu0 0.0
    %2032 = vmatpush1.msra.mxu0 %v735
    %2033 = vmatprep.subr.mxu0 0.0
    %2034 = vmatpush1.msra.mxu0 0.0
    %2035 = vmatprep.subr.mxu0 0.0
    %2036 = vmatpush1.msra.mxu0 0.0
    %2037 = vmatprep.subr.mxu0 0.0
    %2038 = vmatpush1.msra.mxu0 0.0
    %2039 = vmatprep.subr.mxu0 0.0
    %2040 = vmatpush1.msra.mxu0 0.0
    %2041 = vmatprep.subr.mxu0 0.0
    %2042 = vmatpush1.msra.mxu0 0.0
    %2043 = vmatprep.subr.mxu0 0.0
    %2044 = vmatpush1.msra.mxu0 0.0
    %2045 = vmatprep.subr.mxu0 0.0
    %2046 = vmatpush1.msra.mxu0 0.0
    %2047 = vmatprep.subr.mxu0 0.0
    %2048 = vmatpush1.msra.mxu0 0.0
    %2049 = vmatprep.subr.mxu0 0.0
    %2050 = vmatpush1.msra.mxu0 0.0
    %2051 = vmatprep.subr.mxu0 0.0
    %2052 = vmatpush1.msra.mxu0 0.0
    %2053 = vmatprep.subr.mxu0 0.0
    %2054 = vmatpush1.msra.mxu0 0.0
    %2055 = vmatprep.subr.mxu0 0.0
    %2056 = vmatpush1.msra.mxu0 0.0
    %2057 = vmatprep.subr.mxu0 0.0
    %2058 = vmatpush1.msra.mxu0 0.0
    %2059 = vmatprep.subr.mxu0 0.0
    %2060 = vmatpush1.msra.mxu0 0.0
    %2061 = vmatprep.subr.mxu0 0.0
    %2062 = vmatpush1.msra.mxu0 0.0
    %2063 = vmatprep.subr.mxu0 0.0
    %2064 = vmatpush1.msra.mxu0 0.0
    %2065 = vmatprep.subr.mxu0 0.0
    %2066 = vmatpush1.msra.mxu0 0.0
    %2067 = vmatprep.subr.mxu0 0.0
    %2068 = vmatpush1.msra.mxu0 0.0
    %2069 = vmatprep.subr.mxu0 0.0
    %2070 = vmatpush1.msra.mxu0 0.0
    %2071 = vmatprep.subr.mxu0 0.0
    %2072 = vmatpush1.msra.mxu0 0.0
    %2073 = vmatprep.subr.mxu0 0.0
    %2074 = vmatpush1.msra.mxu0 0.0
    %2075 = vmatprep.subr.mxu0 0.0
    %2076 = vmatpush1.msra.mxu0 0.0
    %2077 = vmatprep.subr.mxu0 0.0
    %2078 = vmatpush1.msra.mxu0 0.0
    %2079 = vmatprep.subr.mxu0 0.0
    %2080 = vmatpush1.msra.mxu0 0.0
    %2081 = vmatprep.subr.mxu0 0.0
    %2082 = vmatpush1.msra.mxu0 0.0
    %2083 = vmatprep.subr.mxu0 0.0
    %2084 = vmatpush1.msra.mxu0 0.0
    %2085 = vmatprep.subr.mxu0 0.0
    %2086 = vmatpush1.msra.mxu0 0.0
    %2087 = vmatprep.subr.mxu0 0.0
    %2088 = vmatpush1.msra.mxu0 0.0
    %2089 = vmatprep.mubr.f32.mxu0 0.0
    %2090 = vmatmul.mubr.f32.gmra.mrb[0].mxu0 %v2023
    %v2091 = vpop.f32.mrb[0].mxu0
    %v2092 = vadd.f32 %v717, %v2091
    %v2093 = vpop.f32.mrb[0].mxu0
    %2094 = vdwg.mxu0
    %v2095 = vadd.f32 %v2017, %v2092
    %v2096 = vxor.u32 %v2095, 2147483648
    %v2097 = vmul.f32 %v2096, 1.442695
    %v2098 = vpow.pop %v2097
    %v2099 = vadd.f32 %v2098, 1.0
    %v2100 = vrcp.pop %v2099
    %v2101 = vmul.f32 1.0, %v2100
    %2103 = vrot.lane.b32.xlu0 %v2092, 64
    %v2104 = vpop.permute.xlu0 %2103
    %v2106 = vmul.f32 %v2101, %v2104
    %2108 = vrot.lane.b32.xlu0 %v2106, 64
    %v2109 = vpop.permute.xlu0 %2108
    %v2111 = vadd.f32 %v2017, %v2109
    %v2112 = vtanh.pop %v2111
    %v2113 = vsub.f32 1.0, %v2101
    %2115 = vrot.lane.b32.xlu0 %v2112, 96
    %v2116 = vpop.permute.xlu0 %2115
    %v2118 = vmul.f32 %v2113, %v2116
    %v2119 = vmul.f32 %v2101, %v1847
    %v2120 = vadd.f32 %v2118, %v2119
    %2121 = vmatprep.subr.mxu0 0.0
    %2122 = vmatpush1.msra.mxu0 %v727
    %2123 = vmatprep.subr.mxu0 0.0
    %2124 = vmatpush1.msra.mxu0 %v728
    %2125 = vmatprep.subr.mxu0 0.0
    %2126 = vmatpush1.msra.mxu0 %v729
    %2127 = vmatprep.subr.mxu0 0.0
    %2128 = vmatpush1.msra.mxu0 %v730
    %2129 = vmatprep.subr.mxu0 0.0
    %2130 = vmatpush1.msra.mxu0 0.0
    %2131 = vmatprep.subr.mxu0 0.0
    %2132 = vmatpush1.msra.mxu0 0.0
    %2133 = vmatprep.subr.mxu0 0.0
    %2134 = vmatpush1.msra.mxu0 0.0
    %2135 = vmatprep.subr.mxu0 0.0
    %2136 = vmatpush1.msra.mxu0 0.0
    %2137 = vmatprep.subr.mxu0 0.0
    %2138 = vmatpush1.msra.mxu0 0.0
    %2139 = vmatprep.subr.mxu0 0.0
    %2140 = vmatpush1.msra.mxu0 0.0
    %2141 = vmatprep.subr.mxu0 0.0
    %2142 = vmatpush1.msra.mxu0 0.0
    %2143 = vmatprep.subr.mxu0 0.0
    %2144 = vmatpush1.msra.mxu0 0.0
    %2145 = vmatprep.subr.mxu0 0.0
    %2146 = vmatpush1.msra.mxu0 0.0
    %2147 = vmatprep.subr.mxu0 0.0
    %2148 = vmatpush1.msra.mxu0 0.0
    %2149 = vmatprep.subr.mxu0 0.0
    %2150 = vmatpush1.msra.mxu0 0.0
    %2151 = vmatprep.subr.mxu0 0.0
    %2152 = vmatpush1.msra.mxu0 0.0
    %2153 = vmatprep.subr.mxu0 0.0
    %2154 = vmatpush1.msra.mxu0 0.0
    %2155 = vmatprep.subr.mxu0 0.0
    %2156 = vmatpush1.msra.mxu0 0.0
    %2157 = vmatprep.subr.mxu0 0.0
    %2158 = vmatpush1.msra.mxu0 0.0
    %2159 = vmatprep.subr.mxu0 0.0
    %2160 = vmatpush1.msra.mxu0 0.0
    %2161 = vmatprep.subr.mxu0 0.0
    %2162 = vmatpush1.msra.mxu0 0.0
    %2163 = vmatprep.subr.mxu0 0.0
    %2164 = vmatpush1.msra.mxu0 0.0
    %2165 = vmatprep.subr.mxu0 0.0
    %2166 = vmatpush1.msra.mxu0 0.0
    %2167 = vmatprep.subr.mxu0 0.0
    %2168 = vmatpush1.msra.mxu0 0.0
    %2169 = vmatprep.subr.mxu0 0.0
    %2170 = vmatpush1.msra.mxu0 0.0
    %2171 = vmatprep.subr.mxu0 0.0
    %2172 = vmatpush1.msra.mxu0 0.0
    %2173 = vmatprep.subr.mxu0 0.0
    %2174 = vmatpush1.msra.mxu0 0.0
    %2175 = vmatprep.subr.mxu0 0.0
    %2176 = vmatpush1.msra.mxu0 0.0
    %2177 = vmatprep.subr.mxu0 0.0
    %2178 = vmatpush1.msra.mxu0 0.0
    %2179 = vmatprep.subr.mxu0 0.0
    %2180 = vmatpush1.msra.mxu0 0.0
    %2181 = vmatprep.subr.mxu0 0.0
    %2182 = vmatpush1.msra.mxu0 0.0
    %2183 = vmatprep.subr.mxu0 0.0
    %2184 = vmatpush1.msra.mxu0 0.0
    %2185 = vmatprep.mubr.f32.mxu0 0.0
    %2186 = vmatmul.mubr.f32.gmra.mrb[0].mxu0 %v1948
    %v2187 = vpop.f32.mrb[0].mxu0
    %v2188 = vadd.f32 %v709, %v2187
    %v2189 = vpop.f32.mrb[0].mxu0
    %2190 = vdwg.mxu0
    %v2192 = vrot.slane %v2188, 6
    %v2194 = vadd.f32 %v701, %v2192
    %v2195 = vxor.u32 %v2194, 2147483648
    %v2196 = vmul.f32 %v2195, 1.442695
    %v2197 = vpow.pop %v2196
    %v2198 = vadd.f32 %v2197, 1.0
    %v2199 = vrcp.pop %v2198
    %v2200 = vmul.f32 1.0, %v2199
    %2201 = vrot.lane.b32.xlu0 %v2192, 64
    %v2202 = vpop.permute.xlu0 %2201
    %v2204 = vmul.f32 %v2200, %v2202
    %2206 = vrot.lane.b32.xlu0 %v2204, 64
    %v2207 = vpop.permute.xlu0 %2206
    %v2209 = vadd.f32 %v701, %v2207
    %v2210 = vtanh.pop %v2209
    %v2211 = vsub.f32 1.0, %v2200
    %2213 = vrot.lane.b32.xlu0 %v2210, 96
    %v2214 = vpop.permute.xlu0 %2213
    %v2216 = vmul.f32 %v2211, %v2214
    %v2217 = vrot.slane %v1944, 6
    %v2219 = vmul.f32 %v2200, %v2217
    %v2220 = vadd.f32 %v2216, %v2219
    %v2222 = vrot.slane %v2220, 2
    %2223 = vrot.lane.b32.xlu0 %v2222, 96
    %v2224 = vpop.permute.xlu0 %2223
    %v2225 = vsel %vm319, %v2224, 0
    %2227 = vmatprep.subr.mxu0 0.0
    %2228 = vmatpush1.msra.mxu0 %v736
    %2229 = vmatprep.subr.mxu0 0.0
    %2230 = vmatpush1.msra.mxu0 %v737
    %2231 = vmatprep.subr.mxu0 0.0
    %2232 = vmatpush1.msra.mxu0 %v738
    %2233 = vmatprep.subr.mxu0 0.0
    %2234 = vmatpush1.msra.mxu0 %v739
    %2235 = vmatprep.subr.mxu0 0.0
    %2236 = vmatpush1.msra.mxu0 0.0
    %2237 = vmatprep.subr.mxu0 0.0
    %2238 = vmatpush1.msra.mxu0 0.0
    %2239 = vmatprep.subr.mxu0 0.0
    %2240 = vmatpush1.msra.mxu0 0.0
    %2241 = vmatprep.subr.mxu0 0.0
    %2242 = vmatpush1.msra.mxu0 0.0
    %2243 = vmatprep.subr.mxu0 0.0
    %2244 = vmatpush1.msra.mxu0 0.0
    %2245 = vmatprep.subr.mxu0 0.0
    %2246 = vmatpush1.msra.mxu0 0.0
    %2247 = vmatprep.subr.mxu0 0.0
    %2248 = vmatpush1.msra.mxu0 0.0
    %2249 = vmatprep.subr.mxu0 0.0
    %2250 = vmatpush1.msra.mxu0 0.0
    %2251 = vmatprep.subr.mxu0 0.0
    %2252 = vmatpush1.msra.mxu0 0.0
    %2253 = vmatprep.subr.mxu0 0.0
    %2254 = vmatpush1.msra.mxu0 0.0
    %2255 = vmatprep.subr.mxu0 0.0
    %2256 = vmatpush1.msra.mxu0 0.0
    %2257 = vmatprep.subr.mxu0 0.0
    %2258 = vmatpush1.msra.mxu0 0.0
    %2259 = vmatprep.subr.mxu0 0.0
    %2260 = vmatpush1.msra.mxu0 0.0
    %2261 = vmatprep.subr.mxu0 0.0
    %2262 = vmatpush1.msra.mxu0 0.0
    %2263 = vmatprep.subr.mxu0 0.0
    %2264 = vmatpush1.msra.mxu0 0.0
    %2265 = vmatprep.subr.mxu0 0.0
    %2266 = vmatpush1.msra.mxu0 0.0
    %2267 = vmatprep.subr.mxu0 0.0
    %2268 = vmatpush1.msra.mxu0 0.0
    %2269 = vmatprep.subr.mxu0 0.0
    %2270 = vmatpush1.msra.mxu0 0.0
    %2271 = vmatprep.subr.mxu0 0.0
    %2272 = vmatpush1.msra.mxu0 0.0
    %2273 = vmatprep.subr.mxu0 0.0
    %2274 = vmatpush1.msra.mxu0 0.0
    %2275 = vmatprep.subr.mxu0 0.0
    %2276 = vmatpush1.msra.mxu0 0.0
    %2277 = vmatprep.subr.mxu0 0.0
    %2278 = vmatpush1.msra.mxu0 0.0
    %2279 = vmatprep.subr.mxu0 0.0
    %2280 = vmatpush1.msra.mxu0 0.0
    %2281 = vmatprep.subr.mxu0 0.0
    %2282 = vmatpush1.msra.mxu0 0.0
    %2283 = vmatprep.subr.mxu0 0.0
    %2284 = vmatpush1.msra.mxu0 0.0
    %2285 = vmatprep.subr.mxu0 0.0
    %2286 = vmatpush1.msra.mxu0 0.0
    %2287 = vmatprep.subr.mxu0 0.0
    %2288 = vmatpush1.msra.mxu0 0.0
    %2289 = vmatprep.subr.mxu0 0.0
    %2290 = vmatpush1.msra.mxu0 0.0
    %2291 = vmatprep.mubr.f32.mxu0 0.0
    %2292 = vmatmul.mubr.f32.gmra.mrb[0].mxu0 %v2225
    %v2293 = vpop.f32.mrb[0].mxu0
    %v2294 = vadd.f32 %v725, %v2293
    %v2295 = vpop.f32.mrb[0].mxu0
    %2296 = vdwg.mxu0
    %2298 = vrot.lane.b32.xlu0 %v2120, 96
    %v2299 = vpop.permute.xlu0 %2298
    %v2300 = vsel %vm319, %v2299, 0
    %2302 = vmatprep.subr.mxu0 0.0
    %2303 = vmatpush1.msra.mxu0 %v732
    %2304 = vmatprep.subr.mxu0 0.0
    %2305 = vmatpush1.msra.mxu0 %v733
    %2306 = vmatprep.subr.mxu0 0.0
    %2307 = vmatpush1.msra.mxu0 %v734
    %2308 = vmatprep.subr.mxu0 0.0
    %2309 = vmatpush1.msra.mxu0 %v735
    %2310 = vmatprep.subr.mxu0 0.0
    %2311 = vmatpush1.msra.mxu0 0.0
    %2312 = vmatprep.subr.mxu0 0.0
    %2313 = vmatpush1.msra.mxu0 0.0
    %2314 = vmatprep.subr.mxu0 0.0
    %2315 = vmatpush1.msra.mxu0 0.0
    %2316 = vmatprep.subr.mxu0 0.0
    %2317 = vmatpush1.msra.mxu0 0.0
    %2318 = vmatprep.subr.mxu0 0.0
    %2319 = vmatpush1.msra.mxu0 0.0
    %2320 = vmatprep.subr.mxu0 0.0
    %2321 = vmatpush1.msra.mxu0 0.0
    %2322 = vmatprep.subr.mxu0 0.0
    %2323 = vmatpush1.msra.mxu0 0.0
    %2324 = vmatprep.subr.mxu0 0.0
    %2325 = vmatpush1.msra.mxu0 0.0
    %2326 = vmatprep.subr.mxu0 0.0
    %2327 = vmatpush1.msra.mxu0 0.0
    %2328 = vmatprep.subr.mxu0 0.0
    %2329 = vmatpush1.msra.mxu0 0.0
    %2330 = vmatprep.subr.mxu0 0.0
    %2331 = vmatpush1.msra.mxu0 0.0
    %2332 = vmatprep.subr.mxu0 0.0
    %2333 = vmatpush1.msra.mxu0 0.0
    %2334 = vmatprep.subr.mxu0 0.0
    %2335 = vmatpush1.msra.mxu0 0.0
    %2336 = vmatprep.subr.mxu0 0.0
    %2337 = vmatpush1.msra.mxu0 0.0
    %2338 = vmatprep.subr.mxu0 0.0
    %2339 = vmatpush1.msra.mxu0 0.0
    %2340 = vmatprep.subr.mxu0 0.0
    %2341 = vmatpush1.msra.mxu0 0.0
    %2342 = vmatprep.subr.mxu0 0.0
    %2343 = vmatpush1.msra.mxu0 0.0
    %2344 = vmatprep.subr.mxu0 0.0
    %2345 = vmatpush1.msra.mxu0 0.0
    %2346 = vmatprep.subr.mxu0 0.0
    %2347 = vmatpush1.msra.mxu0 0.0
    %2348 = vmatprep.subr.mxu0 0.0
    %2349 = vmatpush1.msra.mxu0 0.0
    %2350 = vmatprep.subr.mxu0 0.0
    %2351 = vmatpush1.msra.mxu0 0.0
    %2352 = vmatprep.subr.mxu0 0.0
    %2353 = vmatpush1.msra.mxu0 0.0
    %2354 = vmatprep.subr.mxu0 0.0
    %2355 = vmatpush1.msra.mxu0 0.0
    %2356 = vmatprep.subr.mxu0 0.0
    %2357 = vmatpush1.msra.mxu0 0.0
    %2358 = vmatprep.subr.mxu0 0.0
    %2359 = vmatpush1.msra.mxu0 0.0
    %2360 = vmatprep.subr.mxu0 0.0
    %2361 = vmatpush1.msra.mxu0 0.0
    %2362 = vmatprep.subr.mxu0 0.0
    %2363 = vmatpush1.msra.mxu0 0.0
    %2364 = vmatprep.subr.mxu0 0.0
    %2365 = vmatpush1.msra.mxu0 0.0
    %2366 = vmatprep.mubr.f32.mxu0 0.0
    %2367 = vmatmul.mubr.f32.gmra.mrb[0].mxu0 %v2300
    %v2368 = vpop.f32.mrb[0].mxu0
    %v2369 = vadd.f32 %v717, %v2368
    %v2370 = vpop.f32.mrb[0].mxu0
    %2371 = vdwg.mxu0
    %v2372 = vadd.f32 %v2294, %v2369
    %v2373 = vxor.u32 %v2372, 2147483648
    %v2374 = vmul.f32 %v2373, 1.442695
    %v2375 = vpow.pop %v2374
    %v2376 = vadd.f32 %v2375, 1.0
    %v2377 = vrcp.pop %v2376
    %v2378 = vmul.f32 1.0, %v2377
    %2380 = vrot.lane.b32.xlu0 %v2369, 64
    %v2381 = vpop.permute.xlu0 %2380
    %v2383 = vmul.f32 %v2378, %v2381
    %2385 = vrot.lane.b32.xlu0 %v2383, 64
    %v2386 = vpop.permute.xlu0 %2385
    %v2388 = vadd.f32 %v2294, %v2386
    %v2389 = vtanh.pop %v2388
    %v2390 = vsub.f32 1.0, %v2378
    %2392 = vrot.lane.b32.xlu0 %v2389, 96
    %v2393 = vpop.permute.xlu0 %2392
    %v2395 = vmul.f32 %v2390, %v2393
    %v2396 = vmul.f32 %v2378, %v2120
    %v2397 = vadd.f32 %v2395, %v2396
    %2398 = vmatprep.subr.mxu0 0.0
    %2399 = vmatpush1.msra.mxu0 %v727
    %2400 = vmatprep.subr.mxu0 0.0
    %2401 = vmatpush1.msra.mxu0 %v728
    %2402 = vmatprep.subr.mxu0 0.0
    %2403 = vmatpush1.msra.mxu0 %v729
    %2404 = vmatprep.subr.mxu0 0.0
    %2405 = vmatpush1.msra.mxu0 %v730
    %2406 = vmatprep.subr.mxu0 0.0
    %2407 = vmatpush1.msra.mxu0 0.0
    %2408 = vmatprep.subr.mxu0 0.0
    %2409 = vmatpush1.msra.mxu0 0.0
    %2410 = vmatprep.subr.mxu0 0.0
    %2411 = vmatpush1.msra.mxu0 0.0
    %2412 = vmatprep.subr.mxu0 0.0
    %2413 = vmatpush1.msra.mxu0 0.0
    %2414 = vmatprep.subr.mxu0 0.0
    %2415 = vmatpush1.msra.mxu0 0.0
    %2416 = vmatprep.subr.mxu0 0.0
    %2417 = vmatpush1.msra.mxu0 0.0
    %2418 = vmatprep.subr.mxu0 0.0
    %2419 = vmatpush1.msra.mxu0 0.0
    %2420 = vmatprep.subr.mxu0 0.0
    %2421 = vmatpush1.msra.mxu0 0.0
    %2422 = vmatprep.subr.mxu0 0.0
    %2423 = vmatpush1.msra.mxu0 0.0
    %2424 = vmatprep.subr.mxu0 0.0
    %2425 = vmatpush1.msra.mxu0 0.0
    %2426 = vmatprep.subr.mxu0 0.0
    %2427 = vmatpush1.msra.mxu0 0.0
    %2428 = vmatprep.subr.mxu0 0.0
    %2429 = vmatpush1.msra.mxu0 0.0
    %2430 = vmatprep.subr.mxu0 0.0
    %2431 = vmatpush1.msra.mxu0 0.0
    %2432 = vmatprep.subr.mxu0 0.0
    %2433 = vmatpush1.msra.mxu0 0.0
    %2434 = vmatprep.subr.mxu0 0.0
    %2435 = vmatpush1.msra.mxu0 0.0
    %2436 = vmatprep.subr.mxu0 0.0
    %2437 = vmatpush1.msra.mxu0 0.0
    %2438 = vmatprep.subr.mxu0 0.0
    %2439 = vmatpush1.msra.mxu0 0.0
    %2440 = vmatprep.subr.mxu0 0.0
    %2441 = vmatpush1.msra.mxu0 0.0
    %2442 = vmatprep.subr.mxu0 0.0
    %2443 = vmatpush1.msra.mxu0 0.0
    %2444 = vmatprep.subr.mxu0 0.0
    %2445 = vmatpush1.msra.mxu0 0.0
    %2446 = vmatprep.subr.mxu0 0.0
    %2447 = vmatpush1.msra.mxu0 0.0
    %2448 = vmatprep.subr.mxu0 0.0
    %2449 = vmatpush1.msra.mxu0 0.0
    %2450 = vmatprep.subr.mxu0 0.0
    %2451 = vmatpush1.msra.mxu0 0.0
    %2452 = vmatprep.subr.mxu0 0.0
    %2453 = vmatpush1.msra.mxu0 0.0
    %2454 = vmatprep.subr.mxu0 0.0
    %2455 = vmatpush1.msra.mxu0 0.0
    %2456 = vmatprep.subr.mxu0 0.0
    %2457 = vmatpush1.msra.mxu0 0.0
    %2458 = vmatprep.subr.mxu0 0.0
    %2459 = vmatpush1.msra.mxu0 0.0
    %2460 = vmatprep.subr.mxu0 0.0
    %2461 = vmatpush1.msra.mxu0 0.0
    %2462 = vmatprep.mubr.f32.mxu0 0.0
    %2463 = vmatmul.mubr.f32.gmra.mrb[0].mxu0 %v2225
    %v2464 = vpop.f32.mrb[0].mxu0
    %v2465 = vadd.f32 %v709, %v2464
    %v2466 = vpop.f32.mrb[0].mxu0
    %2467 = vdwg.mxu0
    %v2469 = vrot.slane %v2465, 4
    %v2471 = vadd.f32 %v701, %v2469
    %v2472 = vxor.u32 %v2471, 2147483648
    %v2473 = vmul.f32 %v2472, 1.442695
    %v2474 = vpow.pop %v2473
    %v2475 = vadd.f32 %v2474, 1.0
    %v2476 = vrcp.pop %v2475
    %v2477 = vmul.f32 1.0, %v2476
    %2478 = vrot.lane.b32.xlu0 %v2469, 64
    %v2479 = vpop.permute.xlu0 %2478
    %v2481 = vmul.f32 %v2477, %v2479
    %2483 = vrot.lane.b32.xlu0 %v2481, 64
    %v2484 = vpop.permute.xlu0 %2483
    %v2486 = vadd.f32 %v701, %v2484
    %v2487 = vtanh.pop %v2486
    %v2488 = vsub.f32 1.0, %v2477
    %2490 = vrot.lane.b32.xlu0 %v2487, 96
    %v2491 = vpop.permute.xlu0 %2490
    %v2493 = vmul.f32 %v2488, %v2491
    %v2494 = vrot.slane %v2220, 6
    %v2496 = vmul.f32 %v2477, %v2494
    %v2497 = vadd.f32 %v2493, %v2496
    %v2499 = vrot.slane %v2497, 4
    %2500 = vrot.lane.b32.xlu0 %v2499, 96
    %v2501 = vpop.permute.xlu0 %2500
    %v2502 = vsel %vm319, %v2501, 0
    %2504 = vmatprep.subr.mxu0 0.0
    %2505 = vmatpush1.msra.mxu0 %v736
    %2506 = vmatprep.subr.mxu0 0.0
    %2507 = vmatpush1.msra.mxu0 %v737
    %2508 = vmatprep.subr.mxu0 0.0
    %2509 = vmatpush1.msra.mxu0 %v738
    %2510 = vmatprep.subr.mxu0 0.0
    %2511 = vmatpush1.msra.mxu0 %v739
    %2512 = vmatprep.subr.mxu0 0.0
    %2513 = vmatpush1.msra.mxu0 0.0
    %2514 = vmatprep.subr.mxu0 0.0
    %2515 = vmatpush1.msra.mxu0 0.0
    %2516 = vmatprep.subr.mxu0 0.0
    %2517 = vmatpush1.msra.mxu0 0.0
    %2518 = vmatprep.subr.mxu0 0.0
    %2519 = vmatpush1.msra.mxu0 0.0
    %2520 = vmatprep.subr.mxu0 0.0
    %2521 = vmatpush1.msra.mxu0 0.0
    %2522 = vmatprep.subr.mxu0 0.0
    %2523 = vmatpush1.msra.mxu0 0.0
    %2524 = vmatprep.subr.mxu0 0.0
    %2525 = vmatpush1.msra.mxu0 0.0
    %2526 = vmatprep.subr.mxu0 0.0
    %2527 = vmatpush1.msra.mxu0 0.0
    %2528 = vmatprep.subr.mxu0 0.0
    %2529 = vmatpush1.msra.mxu0 0.0
    %2530 = vmatprep.subr.mxu0 0.0
    %2531 = vmatpush1.msra.mxu0 0.0
    %2532 = vmatprep.subr.mxu0 0.0
    %2533 = vmatpush1.msra.mxu0 0.0
    %2534 = vmatprep.subr.mxu0 0.0
    %2535 = vmatpush1.msra.mxu0 0.0
    %2536 = vmatprep.subr.mxu0 0.0
    %2537 = vmatpush1.msra.mxu0 0.0
    %2538 = vmatprep.subr.mxu0 0.0
    %2539 = vmatpush1.msra.mxu0 0.0
    %2540 = vmatprep.subr.mxu0 0.0
    %2541 = vmatpush1.msra.mxu0 0.0
    %2542 = vmatprep.subr.mxu0 0.0
    %2543 = vmatpush1.msra.mxu0 0.0
    %2544 = vmatprep.subr.mxu0 0.0
    %2545 = vmatpush1.msra.mxu0 0.0
    %2546 = vmatprep.subr.mxu0 0.0
    %2547 = vmatpush1.msra.mxu0 0.0
    %2548 = vmatprep.subr.mxu0 0.0
    %2549 = vmatpush1.msra.mxu0 0.0
    %2550 = vmatprep.subr.mxu0 0.0
    %2551 = vmatpush1.msra.mxu0 0.0
    %2552 = vmatprep.subr.mxu0 0.0
    %2553 = vmatpush1.msra.mxu0 0.0
    %2554 = vmatprep.subr.mxu0 0.0
    %2555 = vmatpush1.msra.mxu0 0.0
    %2556 = vmatprep.subr.mxu0 0.0
    %2557 = vmatpush1.msra.mxu0 0.0
    %2558 = vmatprep.subr.mxu0 0.0
    %2559 = vmatpush1.msra.mxu0 0.0
    %2560 = vmatprep.subr.mxu0 0.0
    %2561 = vmatpush1.msra.mxu0 0.0
    %2562 = vmatprep.subr.mxu0 0.0
    %2563 = vmatpush1.msra.mxu0 0.0
    %2564 = vmatprep.subr.mxu0 0.0
    %2565 = vmatpush1.msra.mxu0 0.0
    %2566 = vmatprep.subr.mxu0 0.0
    %2567 = vmatpush1.msra.mxu0 0.0
    %2568 = vmatprep.mubr.f32.mxu0 0.0
    %2569 = vmatmul.mubr.f32.gmra.mrb[0].mxu0 %v2502
    %v2570 = vpop.f32.mrb[0].mxu0
    %v2571 = vadd.f32 %v725, %v2570
    %v2572 = vpop.f32.mrb[0].mxu0
    %2573 = vdwg.mxu0
    %2575 = vrot.lane.b32.xlu0 %v2397, 96
    %v2576 = vpop.permute.xlu0 %2575
    %v2577 = vsel %vm319, %v2576, 0
    %2579 = vmatprep.subr.mxu0 0.0
    %2580 = vmatpush1.msra.mxu0 %v732
    %2581 = vmatprep.subr.mxu0 0.0
    %2582 = vmatpush1.msra.mxu0 %v733
    %2583 = vmatprep.subr.mxu0 0.0
    %2584 = vmatpush1.msra.mxu0 %v734
    %2585 = vmatprep.subr.mxu0 0.0
    %2586 = vmatpush1.msra.mxu0 %v735
    %2587 = vmatprep.subr.mxu0 0.0
    %2588 = vmatpush1.msra.mxu0 0.0
    %2589 = vmatprep.subr.mxu0 0.0
    %2590 = vmatpush1.msra.mxu0 0.0
    %2591 = vmatprep.subr.mxu0 0.0
    %2592 = vmatpush1.msra.mxu0 0.0
    %2593 = vmatprep.subr.mxu0 0.0
    %2594 = vmatpush1.msra.mxu0 0.0
    %2595 = vmatprep.subr.mxu0 0.0
    %2596 = vmatpush1.msra.mxu0 0.0
    %2597 = vmatprep.subr.mxu0 0.0
    %2598 = vmatpush1.msra.mxu0 0.0
    %2599 = vmatprep.subr.mxu0 0.0
    %2600 = vmatpush1.msra.mxu0 0.0
    %2601 = vmatprep.subr.mxu0 0.0
    %2602 = vmatpush1.msra.mxu0 0.0
    %2603 = vmatprep.subr.mxu0 0.0
    %2604 = vmatpush1.msra.mxu0 0.0
    %2605 = vmatprep.subr.mxu0 0.0
    %2606 = vmatpush1.msra.mxu0 0.0
    %2607 = vmatprep.subr.mxu0 0.0
    %2608 = vmatpush1.msra.mxu0 0.0
    %2609 = vmatprep.subr.mxu0 0.0
    %2610 = vmatpush1.msra.mxu0 0.0
    %2611 = vmatprep.subr.mxu0 0.0
    %2612 = vmatpush1.msra.mxu0 0.0
    %2613 = vmatprep.subr.mxu0 0.0
    %2614 = vmatpush1.msra.mxu0 0.0
    %2615 = vmatprep.subr.mxu0 0.0
    %2616 = vmatpush1.msra.mxu0 0.0
    %2617 = vmatprep.subr.mxu0 0.0
    %2618 = vmatpush1.msra.mxu0 0.0
    %2619 = vmatprep.subr.mxu0 0.0
    %2620 = vmatpush1.msra.mxu0 0.0
    %2621 = vmatprep.subr.mxu0 0.0
    %2622 = vmatpush1.msra.mxu0 0.0
    %2623 = vmatprep.subr.mxu0 0.0
    %2624 = vmatpush1.msra.mxu0 0.0
    %2625 = vmatprep.subr.mxu0 0.0
    %2626 = vmatpush1.msra.mxu0 0.0
    %2627 = vmatprep.subr.mxu0 0.0
    %2628 = vmatpush1.msra.mxu0 0.0
    %2629 = vmatprep.subr.mxu0 0.0
    %2630 = vmatpush1.msra.mxu0 0.0
    %2631 = vmatprep.subr.mxu0 0.0
    %2632 = vmatpush1.msra.mxu0 0.0
    %2633 = vmatprep.subr.mxu0 0.0
    %2634 = vmatpush1.msra.mxu0 0.0
    %2635 = vmatprep.subr.mxu0 0.0
    %2636 = vmatpush1.msra.mxu0 0.0
    %2637 = vmatprep.subr.mxu0 0.0
    %2638 = vmatpush1.msra.mxu0 0.0
    %2639 = vmatprep.subr.mxu0 0.0
    %2640 = vmatpush1.msra.mxu0 0.0
    %2641 = vmatprep.subr.mxu0 0.0
    %2642 = vmatpush1.msra.mxu0 0.0
    %2643 = vmatprep.mubr.f32.mxu0 0.0
    %2644 = vmatmul.mubr.f32.gmra.mrb[0].mxu0 %v2577
    %v2645 = vpop.f32.mrb[0].mxu0
    %v2646 = vadd.f32 %v717, %v2645
    %v2647 = vpop.f32.mrb[0].mxu0
    %2648 = vdwg.mxu0
    %v2649 = vadd.f32 %v2571, %v2646
    %v2650 = vxor.u32 %v2649, 2147483648
    %v2651 = vmul.f32 %v2650, 1.442695
    %v2652 = vpow.pop %v2651
    %v2653 = vadd.f32 %v2652, 1.0
    %v2654 = vrcp.pop %v2653
    %v2655 = vmul.f32 1.0, %v2654
    %2657 = vrot.lane.b32.xlu0 %v2646, 64
    %v2658 = vpop.permute.xlu0 %2657
    %v2660 = vmul.f32 %v2655, %v2658
    %2662 = vrot.lane.b32.xlu0 %v2660, 64
    %v2663 = vpop.permute.xlu0 %2662
    %v2665 = vadd.f32 %v2571, %v2663
    %v2666 = vtanh.pop %v2665
    %v2667 = vsub.f32 1.0, %v2655
    %2669 = vrot.lane.b32.xlu0 %v2666, 96
    %v2670 = vpop.permute.xlu0 %2669
    %v2672 = vmul.f32 %v2667, %v2670
    %v2673 = vmul.f32 %v2655, %v2397
    %v2674 = vadd.f32 %v2672, %v2673
    %2675 = vmatprep.subr.mxu0 0.0
    %2676 = vmatpush1.msra.mxu0 %v727
    %2677 = vmatprep.subr.mxu0 0.0
    %2678 = vmatpush1.msra.mxu0 %v728
    %2679 = vmatprep.subr.mxu0 0.0
    %2680 = vmatpush1.msra.mxu0 %v729
    %2681 = vmatprep.subr.mxu0 0.0
    %2682 = vmatpush1.msra.mxu0 %v730
    %2683 = vmatprep.subr.mxu0 0.0
    %2684 = vmatpush1.msra.mxu0 0.0
    %2685 = vmatprep.subr.mxu0 0.0
    %2686 = vmatpush1.msra.mxu0 0.0
    %2687 = vmatprep.subr.mxu0 0.0
    %2688 = vmatpush1.msra.mxu0 0.0
    %2689 = vmatprep.subr.mxu0 0.0
    %2690 = vmatpush1.msra.mxu0 0.0
    %2691 = vmatprep.subr.mxu0 0.0
    %2692 = vmatpush1.msra.mxu0 0.0
    %2693 = vmatprep.subr.mxu0 0.0
    %2694 = vmatpush1.msra.mxu0 0.0
    %2695 = vmatprep.subr.mxu0 0.0
    %2696 = vmatpush1.msra.mxu0 0.0
    %2697 = vmatprep.subr.mxu0 0.0
    %2698 = vmatpush1.msra.mxu0 0.0
    %2699 = vmatprep.subr.mxu0 0.0
    %2700 = vmatpush1.msra.mxu0 0.0
    %2701 = vmatprep.subr.mxu0 0.0
    %2702 = vmatpush1.msra.mxu0 0.0
    %2703 = vmatprep.subr.mxu0 0.0
    %2704 = vmatpush1.msra.mxu0 0.0
    %2705 = vmatprep.subr.mxu0 0.0
    %2706 = vmatpush1.msra.mxu0 0.0
    %2707 = vmatprep.subr.mxu0 0.0
    %2708 = vmatpush1.msra.mxu0 0.0
    %2709 = vmatprep.subr.mxu0 0.0
    %2710 = vmatpush1.msra.mxu0 0.0
    %2711 = vmatprep.subr.mxu0 0.0
    %2712 = vmatpush1.msra.mxu0 0.0
    %2713 = vmatprep.subr.mxu0 0.0
    %2714 = vmatpush1.msra.mxu0 0.0
    %2715 = vmatprep.subr.mxu0 0.0
    %2716 = vmatpush1.msra.mxu0 0.0
    %2717 = vmatprep.subr.mxu0 0.0
    %2718 = vmatpush1.msra.mxu0 0.0
    %2719 = vmatprep.subr.mxu0 0.0
    %2720 = vmatpush1.msra.mxu0 0.0
    %2721 = vmatprep.subr.mxu0 0.0
    %2722 = vmatpush1.msra.mxu0 0.0
    %2723 = vmatprep.subr.mxu0 0.0
    %2724 = vmatpush1.msra.mxu0 0.0
    %2725 = vmatprep.subr.mxu0 0.0
    %2726 = vmatpush1.msra.mxu0 0.0
    %2727 = vmatprep.subr.mxu0 0.0
    %2728 = vmatpush1.msra.mxu0 0.0
    %2729 = vmatprep.subr.mxu0 0.0
    %2730 = vmatpush1.msra.mxu0 0.0
    %2731 = vmatprep.subr.mxu0 0.0
    %2732 = vmatpush1.msra.mxu0 0.0
    %2733 = vmatprep.subr.mxu0 0.0
    %2734 = vmatpush1.msra.mxu0 0.0
    %2735 = vmatprep.subr.mxu0 0.0
    %2736 = vmatpush1.msra.mxu0 0.0
    %2737 = vmatprep.subr.mxu0 0.0
    %2738 = vmatpush1.msra.mxu0 0.0
    %2739 = vmatprep.mubr.f32.mxu0 0.0
    %2740 = vmatmul.mubr.f32.gmra.mrb[0].mxu0 %v2502
    %v2741 = vpop.f32.mrb[0].mxu0
    %v2742 = vadd.f32 %v709, %v2741
    %v2743 = vpop.f32.mrb[0].mxu0
    %2744 = vdwg.mxu0
    %v2746 = vrot.slane %v2742, 2
    %v2748 = vadd.f32 %v701, %v2746
    %v2749 = vxor.u32 %v2748, 2147483648
    %v2750 = vmul.f32 %v2749, 1.442695
    %v2751 = vpow.pop %v2750
    %v2752 = vadd.f32 %v2751, 1.0
    %v2753 = vrcp.pop %v2752
    %v2754 = vmul.f32 1.0, %v2753
    %2755 = vrot.lane.b32.xlu0 %v2746, 64
    %v2756 = vpop.permute.xlu0 %2755
    %v2758 = vmul.f32 %v2754, %v2756
    %2760 = vrot.lane.b32.xlu0 %v2758, 64
    %v2761 = vpop.permute.xlu0 %2760
    %v2763 = vadd.f32 %v701, %v2761
    %v2764 = vtanh.pop %v2763
    %v2765 = vsub.f32 1.0, %v2754
    %2767 = vrot.lane.b32.xlu0 %v2764, 96
    %v2768 = vpop.permute.xlu0 %2767
    %v2770 = vmul.f32 %v2765, %v2768
    %v2771 = vrot.slane %v2497, 6
    %v2773 = vmul.f32 %v2754, %v2771
    %v2774 = vadd.f32 %v2770, %v2773
    %v2776 = vrot.slane %v2774, 6
    %2777 = vrot.lane.b32.xlu0 %v2776, 96
    %v2778 = vpop.permute.xlu0 %2777
    %v2779 = vsel %vm319, %v2778, 0
    %2781 = vmatprep.subr.mxu0 0.0
    %2782 = vmatpush1.msra.mxu0 %v736
    %2783 = vmatprep.subr.mxu0 0.0
    %2784 = vmatpush1.msra.mxu0 %v737
    %2785 = vmatprep.subr.mxu0 0.0
    %2786 = vmatpush1.msra.mxu0 %v738
    %2787 = vmatprep.subr.mxu0 0.0
    %2788 = vmatpush1.msra.mxu0 %v739
    %2789 = vmatprep.subr.mxu0 0.0
    %2790 = vmatpush1.msra.mxu0 0.0
    %2791 = vmatprep.subr.mxu0 0.0
    %2792 = vmatpush1.msra.mxu0 0.0
    %2793 = vmatprep.subr.mxu0 0.0
    %2794 = vmatpush1.msra.mxu0 0.0
    %2795 = vmatprep.subr.mxu0 0.0
    %2796 = vmatpush1.msra.mxu0 0.0
    %2797 = vmatprep.subr.mxu0 0.0
    %2798 = vmatpush1.msra.mxu0 0.0
    %2799 = vmatprep.subr.mxu0 0.0
    %2800 = vmatpush1.msra.mxu0 0.0
    %2801 = vmatprep.subr.mxu0 0.0
    %2802 = vmatpush1.msra.mxu0 0.0
    %2803 = vmatprep.subr.mxu0 0.0
    %2804 = vmatpush1.msra.mxu0 0.0
    %2805 = vmatprep.subr.mxu0 0.0
    %2806 = vmatpush1.msra.mxu0 0.0
    %2807 = vmatprep.subr.mxu0 0.0
    %2808 = vmatpush1.msra.mxu0 0.0
    %2809 = vmatprep.subr.mxu0 0.0
    %2810 = vmatpush1.msra.mxu0 0.0
    %2811 = vmatprep.subr.mxu0 0.0
    %2812 = vmatpush1.msra.mxu0 0.0
    %2813 = vmatprep.subr.mxu0 0.0
    %2814 = vmatpush1.msra.mxu0 0.0
    %2815 = vmatprep.subr.mxu0 0.0
    %2816 = vmatpush1.msra.mxu0 0.0
    %2817 = vmatprep.subr.mxu0 0.0
    %2818 = vmatpush1.msra.mxu0 0.0
    %2819 = vmatprep.subr.mxu0 0.0
    %2820 = vmatpush1.msra.mxu0 0.0
    %2821 = vmatprep.subr.mxu0 0.0
    %2822 = vmatpush1.msra.mxu0 0.0
    %2823 = vmatprep.subr.mxu0 0.0
    %2824 = vmatpush1.msra.mxu0 0.0
    %2825 = vmatprep.subr.mxu0 0.0
    %2826 = vmatpush1.msra.mxu0 0.0
    %2827 = vmatprep.subr.mxu0 0.0
    %2828 = vmatpush1.msra.mxu0 0.0
    %2829 = vmatprep.subr.mxu0 0.0
    %2830 = vmatpush1.msra.mxu0 0.0
    %2831 = vmatprep.subr.mxu0 0.0
    %2832 = vmatpush1.msra.mxu0 0.0
    %2833 = vmatprep.subr.mxu0 0.0
    %2834 = vmatpush1.msra.mxu0 0.0
    %2835 = vmatprep.subr.mxu0 0.0
    %2836 = vmatpush1.msra.mxu0 0.0
    %2837 = vmatprep.subr.mxu0 0.0
    %2838 = vmatpush1.msra.mxu0 0.0
    %2839 = vmatprep.subr.mxu0 0.0
    %2840 = vmatpush1.msra.mxu0 0.0
    %2841 = vmatprep.subr.mxu0 0.0
    %2842 = vmatpush1.msra.mxu0 0.0
    %2843 = vmatprep.subr.mxu0 0.0
    %2844 = vmatpush1.msra.mxu0 0.0
    %2845 = vmatprep.mubr.f32.mxu0 0.0
    %2846 = vmatmul.mubr.f32.gmra.mrb[0].mxu0 %v2779
    %v2847 = vpop.f32.mrb[0].mxu0
    %v2848 = vadd.f32 %v725, %v2847
    %v2849 = vpop.f32.mrb[0].mxu0
    %2850 = vdwg.mxu0
    %2852 = vrot.lane.b32.xlu0 %v2674, 96
    %v2853 = vpop.permute.xlu0 %2852
    %v2854 = vsel %vm319, %v2853, 0
    %2856 = vmatprep.subr.mxu0 0.0
    %2857 = vmatpush1.msra.mxu0 %v732
    %2858 = vmatprep.subr.mxu0 0.0
    %2859 = vmatpush1.msra.mxu0 %v733
    %2860 = vmatprep.subr.mxu0 0.0
    %2861 = vmatpush1.msra.mxu0 %v734
    %2862 = vmatprep.subr.mxu0 0.0
    %2863 = vmatpush1.msra.mxu0 %v735
    %2864 = vmatprep.subr.mxu0 0.0
    %2865 = vmatpush1.msra.mxu0 0.0
    %2866 = vmatprep.subr.mxu0 0.0
    %2867 = vmatpush1.msra.mxu0 0.0
    %2868 = vmatprep.subr.mxu0 0.0
    %2869 = vmatpush1.msra.mxu0 0.0
    %2870 = vmatprep.subr.mxu0 0.0
    %2871 = vmatpush1.msra.mxu0 0.0
    %2872 = vmatprep.subr.mxu0 0.0
    %2873 = vmatpush1.msra.mxu0 0.0
    %2874 = vmatprep.subr.mxu0 0.0
    %2875 = vmatpush1.msra.mxu0 0.0
    %2876 = vmatprep.subr.mxu0 0.0
    %2877 = vmatpush1.msra.mxu0 0.0
    %2878 = vmatprep.subr.mxu0 0.0
    %2879 = vmatpush1.msra.mxu0 0.0
    %2880 = vmatprep.subr.mxu0 0.0
    %2881 = vmatpush1.msra.mxu0 0.0
    %2882 = vmatprep.subr.mxu0 0.0
    %2883 = vmatpush1.msra.mxu0 0.0
    %2884 = vmatprep.subr.mxu0 0.0
    %2885 = vmatpush1.msra.mxu0 0.0
    %2886 = vmatprep.subr.mxu0 0.0
    %2887 = vmatpush1.msra.mxu0 0.0
    %2888 = vmatprep.subr.mxu0 0.0
    %2889 = vmatpush1.msra.mxu0 0.0
    %2890 = vmatprep.subr.mxu0 0.0
    %2891 = vmatpush1.msra.mxu0 0.0
    %2892 = vmatprep.subr.mxu0 0.0
    %2893 = vmatpush1.msra.mxu0 0.0
    %2894 = vmatprep.subr.mxu0 0.0
    %2895 = vmatpush1.msra.mxu0 0.0
    %2896 = vmatprep.subr.mxu0 0.0
    %2897 = vmatpush1.msra.mxu0 0.0
    %2898 = vmatprep.subr.mxu0 0.0
    %2899 = vmatpush1.msra.mxu0 0.0
    %2900 = vmatprep.subr.mxu0 0.0
    %2901 = vmatpush1.msra.mxu0 0.0
    %2902 = vmatprep.subr.mxu0 0.0
    %2903 = vmatpush1.msra.mxu0 0.0
    %2904 = vmatprep.subr.mxu0 0.0
    %2905 = vmatpush1.msra.mxu0 0.0
    %2906 = vmatprep.subr.mxu0 0.0
    %2907 = vmatpush1.msra.mxu0 0.0
    %2908 = vmatprep.subr.mxu0 0.0
    %2909 = vmatpush1.msra.mxu0 0.0
    %2910 = vmatprep.subr.mxu0 0.0
    %2911 = vmatpush1.msra.mxu0 0.0
    %2912 = vmatprep.subr.mxu0 0.0
    %2913 = vmatpush1.msra.mxu0 0.0
    %2914 = vmatprep.subr.mxu0 0.0
    %2915 = vmatpush1.msra.mxu0 0.0
    %2916 = vmatprep.subr.mxu0 0.0
    %2917 = vmatpush1.msra.mxu0 0.0
    %2918 = vmatprep.subr.mxu0 0.0
    %2919 = vmatpush1.msra.mxu0 0.0
    %2920 = vmatprep.mubr.f32.mxu0 0.0
    %2921 = vmatmul.mubr.f32.gmra.mrb[0].mxu0 %v2854
    %v2922 = vpop.f32.mrb[0].mxu0
    %v2923 = vadd.f32 %v717, %v2922
    %v2924 = vpop.f32.mrb[0].mxu0
    %2925 = vdwg.mxu0
    %v2926 = vadd.f32 %v2848, %v2923
    %v2927 = vxor.u32 %v2926, 2147483648
    %v2928 = vmul.f32 %v2927, 1.442695
    %v2929 = vpow.pop %v2928
    %v2930 = vadd.f32 %v2929, 1.0
    %v2931 = vrcp.pop %v2930
    %v2932 = vmul.f32 1.0, %v2931
    %2934 = vrot.lane.b32.xlu0 %v2923, 64
    %v2935 = vpop.permute.xlu0 %2934
    %v2937 = vmul.f32 %v2932, %v2935
    %2939 = vrot.lane.b32.xlu0 %v2937, 64
    %v2940 = vpop.permute.xlu0 %2939
    %v2942 = vadd.f32 %v2848, %v2940
    %v2943 = vtanh.pop %v2942
    %v2944 = vsub.f32 1.0, %v2932
    %2946 = vrot.lane.b32.xlu0 %v2943, 96
    %v2947 = vpop.permute.xlu0 %2946
    %v2949 = vmul.f32 %v2944, %v2947
    %v2950 = vmul.f32 %v2932, %v2674
    %v2951 = vadd.f32 %v2949, %v2950
    %v2952 = vrot.slane %v1293, 6
    %v2954 = vrot.slane %v1570, 4
    %v2956 = vrot.slane %v1847, 2
    %v2958 = vrot.slane %v2397, 6
    %v2960 = vrot.slane %v2674, 4
    %v2963 = vrot.slane %v2951, 2
    %vm2965 = vcmask 1041408
    %v2966 = vsel %vm2965, %v1016, %v2952
    %vm2967 = vcmask 1043456
    %v2968 = vsel %vm2967, %v2966, %v2954
    %vm2969 = vcmask 1045504
    %v2970 = vsel %vm2969, %v2968, %v2956
    %v2971 = vsel %vm2965, %v2120, %v2958
    %v2972 = vsel %vm2967, %v2971, %v2960
    %v2973 = vsel %vm2969, %v2972, %v2963
    %v2974 = vld [vmem:[%s14] sm:$0xff]
    %v2975 = vld [vmem:[%s14 + $0x8] sm:$0xff]
    %v2976 = vld [vmem:[%s14 + $0x10] sm:$0xff]
    %v2977 = vld [vmem:[%s14 + $0x18] sm:$0xff]
    %v2978 = vld [vmem:[#allocation12] sm:$0x1]
    %v2980 = vlaneseq
    %v2981 = vshrl.u32 %v2980, 7
    %v2982 = vsub.s32 0, %v2981
    %v2983 = vrot.slane %v2978, %v2982
    %2987 = vrot.lane.b32.xlu0 %v2970, 96
    %v2988 = vpop.permute.xlu0 %2987
    %2989 = vrot.lane.b32.xlu0 %v2973, 96
    %v2990 = vpop.permute.xlu0 %2989
    %v2991 = vsel %vm319, %v2988, 0
    %v2993 = vsel %vm319, %v2990, 0
    %2995 = vmatprep.subr.mxu0 0.0
    %2996 = vmatpush1.msra.mxu0 %v2974
    %2997 = vmatprep.subr.mxu0 0.0
    %2998 = vmatpush1.msra.mxu0 %v2975
    %2999 = vmatprep.subr.mxu0 0.0
    %3000 = vmatpush1.msra.mxu0 %v2976
    %3001 = vmatprep.subr.mxu0 0.0
    %3002 = vmatpush1.msra.mxu0 %v2977
    %3003 = vmatprep.subr.mxu0 0.0
    %3004 = vmatpush1.msra.mxu0 0.0
    %3005 = vmatprep.subr.mxu0 0.0
    %3006 = vmatpush1.msra.mxu0 0.0
    %3007 = vmatprep.subr.mxu0 0.0
    %3008 = vmatpush1.msra.mxu0 0.0
    %3009 = vmatprep.subr.mxu0 0.0
    %3010 = vmatpush1.msra.mxu0 0.0
    %3011 = vmatprep.subr.mxu0 0.0
    %3012 = vmatpush1.msra.mxu0 0.0
    %3013 = vmatprep.subr.mxu0 0.0
    %3014 = vmatpush1.msra.mxu0 0.0
    %3015 = vmatprep.subr.mxu0 0.0
    %3016 = vmatpush1.msra.mxu0 0.0
    %3017 = vmatprep.subr.mxu0 0.0
    %3018 = vmatpush1.msra.mxu0 0.0
    %3019 = vmatprep.subr.mxu0 0.0
    %3020 = vmatpush1.msra.mxu0 0.0
    %3021 = vmatprep.subr.mxu0 0.0
    %3022 = vmatpush1.msra.mxu0 0.0
    %3023 = vmatprep.subr.mxu0 0.0
    %3024 = vmatpush1.msra.mxu0 0.0
    %3025 = vmatprep.subr.mxu0 0.0
    %3026 = vmatpush1.msra.mxu0 0.0
    %3027 = vmatprep.subr.mxu0 0.0
    %3028 = vmatpush1.msra.mxu0 0.0
    %3029 = vmatprep.subr.mxu0 0.0
    %3030 = vmatpush1.msra.mxu0 0.0
    %3031 = vmatprep.subr.mxu0 0.0
    %3032 = vmatpush1.msra.mxu0 0.0
    %3033 = vmatprep.subr.mxu0 0.0
    %3034 = vmatpush1.msra.mxu0 0.0
    %3035 = vmatprep.subr.mxu0 0.0
    %3036 = vmatpush1.msra.mxu0 0.0
    %3037 = vmatprep.subr.mxu0 0.0
    %3038 = vmatpush1.msra.mxu0 0.0
    %3039 = vmatprep.subr.mxu0 0.0
    %3040 = vmatpush1.msra.mxu0 0.0
    %3041 = vmatprep.subr.mxu0 0.0
    %3042 = vmatpush1.msra.mxu0 0.0
    %3043 = vmatprep.subr.mxu0 0.0
    %3044 = vmatpush1.msra.mxu0 0.0
    %3045 = vmatprep.subr.mxu0 0.0
    %3046 = vmatpush1.msra.mxu0 0.0
    %3047 = vmatprep.subr.mxu0 0.0
    %3048 = vmatpush1.msra.mxu0 0.0
    %3049 = vmatprep.subr.mxu0 0.0
    %3050 = vmatpush1.msra.mxu0 0.0
    %3051 = vmatprep.subr.mxu0 0.0
    %3052 = vmatpush1.msra.mxu0 0.0
    %3053 = vmatprep.subr.mxu0 0.0
    %3054 = vmatpush1.msra.mxu0 0.0
    %3055 = vmatprep.subr.mxu0 0.0
    %3056 = vmatpush1.msra.mxu0 0.0
    %3057 = vmatprep.subr.mxu0 0.0
    %3058 = vmatpush1.msra.mxu0 0.0
    %3059 = vmatprep.mubr.f32.mxu0 0.0
    %3060 = vmatmul.mubr.f32.gmra.mrb[0].mxu0 %v2991
    %v3061 = vpop.f32.mrb[0].mxu0
    %v3062 = vadd.f32 %v2983, %v3061
    %v3063 = vpop.f32.mrb[0].mxu0
    %3064 = vmatprep.mubr.f32.mxu0 0.0
    %3065 = vmatmul.mubr.f32.gmra.mrb[0].mxu0 %v2993
    %v3066 = vpop.f32.mrb[0].mxu0
    %v3067 = vadd.f32 %v2983, %v3066
    %v3068 = vpop.f32.mrb[0].mxu0
    %3069 = vdwg.mxu0
    %v3070 = vsel %vm194, %v3062, -inf
    %3071 = vmax.xlane.f32.xlu0 %v3070
    %v3072 = vpop.xlane.xlu0 %3071
    %v3073 = vsel %vm194, %v3067, -inf
    %3074 = vmax.xlane.f32.xlu0 %v3073
    %v3075 = vpop.xlane.xlu0 %3074
    %v3076 = vsub.f32 %v3062, %v3072
    %v3077 = vsub.f32 %v3067, %v3075
    %v3078 = vmul.f32 %v3076, 1.442695
    %v3079 = vpow.pop %v3078
    %v3080 = vmul.f32 %v3077, 1.442695
    %v3081 = vpow.pop %v3080
    %v3082 = vsel %vm194, %v3079, 0.0
    %3083 = vadd.xlane.f32.xlu0 %v3082
    %v3084 = vpop.xlane.xlu0 %3083
    %v3085 = vsel %vm194, %v3081, 0.0
    %3086 = vadd.xlane.f32.xlu0 %v3085
    %v3087 = vpop.xlane.xlu0 %3086
    %v3088 = vrcp.pop %v3084
    %v3089 = vmul.f32 %v3079, %v3088
    %v3090 = vrcp.pop %v3087
    %v3091 = vmul.f32 %v3081, %v3090
    %3092 = vst.msk [vmem:[%s16] sm:$0xff] %vm194, %v3089
    %3093 = vst.msk [vmem:[%s16 + $0x8] sm:$0xff] %vm194, %v3091
    // Predicated region
    $region94: #{forward.1} parent=1 // pred_check
      _
    $region95: #{forward.1} parent=1 // pred_check_branch
      %3095 = sbr.rel (0) target = $region97
    $region96: #{forward.1} parent=1 // pred_region
      _
    $region97: #{forward.1} parent=1 // pred_fallthru
      _
    // Predicated region
    $region98: #{forward.1} parent=1 // pred_check
      _
    $region99: #{forward.1} parent=1 // pred_check_branch
      %3097 = sbr.rel (0) target = $region101
    $region100: #{forward.1} parent=1 // pred_region
      _
    $region101: #{forward.1} parent=1 // pred_fallthru
      _
    %3098 = vsyncpa [#allocation3], 1
    %3099 = vsyncpa [#allocation5], 1
    %3100 = vsyncpa [#allocation8], 1
    %3101 = vsyncpa [#allocation11], 1

</llo_original>
